<compile_context>
chip_gen: v5e
topology: v5e:2x2
jax: 0.10.0
libtpu: 0.0.40
codegen_flags: <defaults>
</compile_context>

<pallas_src>
import functools

import numpy as np
import jax
import jax.numpy as jnp
from jax import lax
from jax.experimental import pallas as pl
from jax.experimental.pallas import tpu as pltpu


# ---------------------------------------------------------------------------
# In-kernel helpers (pure jnp on VMEM-resident values)
# ---------------------------------------------------------------------------
def _layernorm(x, w, b, eps=1e-5):
    # x: (T, D) f32; w, b: (1, D) f32 -- statistics kept in f32
    mu = jnp.mean(x, axis=-1, keepdims=True)
    xc = x - mu
    var = jnp.mean(xc * xc, axis=-1, keepdims=True)
    return xc * lax.rsqrt(var + eps) * w + b


def _mha(h_bf, wq_hm_ref, k_hm, v_hm, wo_ref, bo_ref, heads):
    """Head-major multi-head attention for one query tile.

    h_bf:      (TQ, D)         bf16 post-LayerNorm activations
    wq_hm_ref: (heads, D, dh)  bf16 ref, 1/sqrt(dh) already folded in
    k_hm/v_hm: (heads, S, dh)  bf16 values (head-major -> leading-dim index only)
    wo_ref:    (inner, D)      bf16 ref
    bo_ref:    (1, D)          f32 ref
    returns    (TQ, D)         f32
    """
    bf16 = jnp.bfloat16
    # Per-head Q projection: leading-dim weight index (no lane-offset slices),
    # stacked head-major so the attention matmuls batch over heads.
    q_hm = jnp.stack(
        [jnp.dot(h_bf, wq_hm_ref[hh], preferred_element_type=jnp.float32)
         for hh in range(heads)],
        axis=0).astype(bf16)                                     # (heads, TQ, dh)

    # Batched QK^T / softmax / PV (heads is the dot_general batch dim).
    sim = lax.dot_general(q_hm, k_hm, (((2,), (2,)), ((0,), (0,))),
                          preferred_element_type=jnp.float32)    # (heads, TQ, S)
    sim = sim - jnp.max(sim, axis=-1, keepdims=True)
    p = jnp.exp(sim)
    attn = p * pl.reciprocal(jnp.sum(p, axis=-1, keepdims=True), approx=True)
    out_hm = lax.dot_general(attn.astype(bf16), v_hm,
                             (((2,), (1,)), ((0,), (0,))),
                             preferred_element_type=jnp.float32)  # (heads, TQ, dh)

    # Fused output projection: assemble (TQ, inner) once (single lane concat),
    # then a single full-contraction (TQ, inner) @ (inner, D) matmul.
    out_flat = jnp.concatenate([out_hm[hh] for hh in range(heads)],
                               axis=-1).astype(bf16)              # (TQ, inner)
    return jnp.dot(out_flat, wo_ref[...],
                   preferred_element_type=jnp.float32) + bo_ref[...]


# ---------------------------------------------------------------------------
# Kernel 1: head-major K/V projections (one grid step per batch element)
# ---------------------------------------------------------------------------
def kv_proj_kernel(x_ref, ctx_ref,
                   ln1_w_ref, ln1_b_ref,
                   wk1_ref, wv1_ref, wk2_ref, wv2_ref,
                   k1_ref, v1_ref, k2_ref, v2_ref, *, heads):
    bf16 = jnp.bfloat16
    h_full = _layernorm(x_ref[0], ln1_w_ref[...], ln1_b_ref[...]).astype(bf16)
    ctx = ctx_ref[0].astype(bf16)
    for hh in range(heads):
        k1_ref[0, hh] = jnp.dot(h_full, wk1_ref[hh],
                                preferred_element_type=jnp.float32).astype(bf16)
        v1_ref[0, hh] = jnp.dot(h_full, wv1_ref[hh],
                                preferred_element_type=jnp.float32).astype(bf16)
        k2_ref[0, hh] = jnp.dot(ctx, wk2_ref[hh],
                                preferred_element_type=jnp.float32).astype(bf16)
        v2_ref[0, hh] = jnp.dot(ctx, wv2_ref[hh],
                                preferred_element_type=jnp.float32).astype(bf16)


# ---------------------------------------------------------------------------
# Kernel 2: fused transformer block, one (batch, query-tile) pair per grid step
# ---------------------------------------------------------------------------
def transformer_block_kernel(
        xq_ref, k1_ref, v1_ref, k2_ref, v2_ref,
        ln1_w_ref, ln1_b_ref, wq1_ref, wo1_ref, bo1_ref,
        ln2_w_ref, ln2_b_ref, wq2_ref, wo2_ref, bo2_ref,
        ln3_w_ref, ln3_b_ref, wgg_ref, bgg_ref, wff_ref, bff_ref,
        o_ref, *, heads, approx_gelu):
    bf16 = jnp.bfloat16
    x = xq_ref[0]                                             # (TQ, D) f32 residual stream

    # ---- attn1: self-attention + residual -----------------------------------
    h = _layernorm(x, ln1_w_ref[...], ln1_b_ref[...]).astype(bf16)
    x = _mha(h, wq1_ref, k1_ref[0], v1_ref[0], wo1_ref, bo1_ref, heads) + x

    # ---- attn2: cross-attention over context + residual ---------------------
    h = _layernorm(x, ln2_w_ref[...], ln2_b_ref[...]).astype(bf16)
    x = _mha(h, wq2_ref, k2_ref[0], v2_ref[0], wo2_ref, bo2_ref, heads) + x

    # ---- FeedForward (GEGLU) + residual --------------------------------------
    h = _layernorm(x, ln3_w_ref[...], ln3_b_ref[...]).astype(bf16)
    proj = jnp.dot(h, wgg_ref[...],
                   preferred_element_type=jnp.float32) + bgg_ref[...]
    f = proj.shape[-1] // 2
    # approximate=False == torch default erf GELU; set approx_gelu=True to use
    # the tanh approximation on the EUP slot (small numerics change).
    gg = proj[:, :f] * jax.nn.gelu(proj[:, f:], approximate=approx_gelu)
    ff = jnp.dot(gg.astype(bf16), wff_ref[...],
                 preferred_element_type=jnp.float32) + bff_ref[...]
    o_ref[0] = (ff + x).astype(o_ref.dtype)


# ---------------------------------------------------------------------------
# VMEM budgeting helpers (per-generation capacity, tile-padding aware)
# ---------------------------------------------------------------------------
def _tpu_vmem_capacity_bytes():
    try:
        return int(pltpu.get_tpu_info().vmem_capacity_bytes)
    except Exception:
        return 64 * 1024 * 1024        # conservative: v7x has 64 MiB / TensorCore


def _padded_bytes(shape, dtype):
    """VMEM footprint of an array with (sublane, lane) tile padding."""
    itemsize = np.dtype(dtype).itemsize
    s = list(shape)
    s[-1] = -(-s[-1] // 128) * 128
    if len(s) >= 2:
        sub = max(8, 32 // itemsize)   # 8 sublanes for f32, 16 for bf16
        s[-2] = -(-s[-2] // sub) * sub
    n = 1
    for d in s:
        n *= d
    return n * itemsize


def _vmem_limit(double_buffered, resident, margin_bytes=8 * 1024 * 1024):
    cap = _tpu_vmem_capacity_bytes()
    need = 2 * sum(_padded_bytes(s, d) for s, d in double_buffered)
    need += sum(_padded_bytes(s, d) for s, d in resident)
    need += margin_bytes
    return int(min(max(32 * 1024 * 1024, need), cap - 2 * 1024 * 1024))


# ---------------------------------------------------------------------------
# Wrapper
# ---------------------------------------------------------------------------
def basic_transformer_block(x, context, params, heads, *, tq=256,
                            approx_gelu=False):
    B, N, D = x.shape
    _, M, C = context.shape
    inner = params['wq1'].shape[1]
    assert inner % heads == 0
    dh = inner // heads
    scale = dh ** -0.5
    F_ff = params['wgg'].shape[1] // 2
    tq = min(tq, N)
    assert N % tq == 0, "sequence length must be divisible by the query tile"
    nq = N // tq

    bf16, f32 = jnp.bfloat16, jnp.float32

    def head_major(w):                  # (in, heads*dh) -> (heads, in, dh)
        di = w.shape[0]
        return jnp.transpose(w.reshape(di, heads, dh), (1, 0, 2))

    # 1/sqrt(dh) folded into the Q projection weights (one-time constant fold).
    wq1_hm = (head_major(params['wq1']) * scale).astype(bf16)
    wq2_hm = (head_major(params['wq2']) * scale).astype(bf16)
    wk1_hm = head_major(params['wk1']).astype(bf16)
    wv1_hm = head_major(params['wv1']).astype(bf16)
    wk2_hm = head_major(params['wk2']).astype(bf16)
    wv2_hm = head_major(params['wv2']).astype(bf16)

    ln1_w = params['ln1_w'].astype(f32)
    ln1_b = params['ln1_b'].astype(f32)

    # ----------------- kernel 1: head-major K/V projections ------------------
    kv_weights = [ln1_w, ln1_b, wk1_hm, wv1_hm, wk2_hm, wv2_hm]
    kv_weight_specs = [pl.BlockSpec(memory_space=pltpu.MemorySpace.VMEM)
                       for _ in kv_weights]
    kv_vmem = _vmem_limit(
        double_buffered=[((1, N, D), f32), ((1, M, C), f32),
                         ((1, heads, N, dh), bf16), ((1, heads, N, dh), bf16),
                         ((1, heads, M, dh), bf16), ((1, heads, M, dh), bf16)],
        resident=[(tuple(w.shape), w.dtype) for w in kv_weights])
    kv_cost = pl.CostEstimate(
        flops=int(2 * B * N * D * inner * 2 + 2 * B * M * C * inner * 2),
        transcendentals=0,
        bytes_accessed=int(4 * B * (N * D + M * C)
                           + 2 * 2 * B * inner * (N + M)))

    k1, v1, k2, v2 = pl.pallas_call(
        functools.partial(kv_proj_kernel, heads=heads),
        out_shape=(jax.ShapeDtypeStruct((B, heads, N, dh), bf16),
                   jax.ShapeDtypeStruct((B, heads, N, dh), bf16),
                   jax.ShapeDtypeStruct((B, heads, M, dh), bf16),
                   jax.ShapeDtypeStruct((B, heads, M, dh), bf16)),
        grid_spec=pltpu.PrefetchScalarGridSpec(
            num_scalar_prefetch=0,
            grid=(B,),
            in_specs=[pl.BlockSpec((1, N, D), lambda b: (b, 0, 0)),
                      pl.BlockSpec((1, M, C), lambda b: (b, 0, 0))]
                     + kv_weight_specs,
            out_specs=[pl.BlockSpec((1, heads, N, dh), lambda b: (b, 0, 0, 0)),
                       pl.BlockSpec((1, heads, N, dh), lambda b: (b, 0, 0, 0)),
                       pl.BlockSpec((1, heads, M, dh), lambda b: (b, 0, 0, 0)),
                       pl.BlockSpec((1, heads, M, dh), lambda b: (b, 0, 0, 0))]),
        compiler_params=pltpu.CompilerParams(
            dimension_semantics=("parallel",),
            vmem_limit_bytes=kv_vmem),
        cost_estimate=kv_cost,
    )(x, context, *kv_weights)

    # ----------------- kernel 2: fused transformer block ---------------------
    blk_weights = [
        ln1_w, ln1_b, wq1_hm, params['wo1'].astype(bf16), params['bo1'].astype(f32),
        params['ln2_w'].astype(f32), params['ln2_b'].astype(f32),
        wq2_hm, params['wo2'].astype(bf16), params['bo2'].astype(f32),
        params['ln3_w'].astype(f32), params['ln3_b'].astype(f32),
        params['wgg'].astype(bf16), params['bgg'].astype(f32),
        params['wff'].astype(bf16), params['bff'].astype(f32),
    ]
    # Whole-array VMEM residency: constant-index weights are not double-buffered.
    # TODO(synk): at full SD widths (D=1280, F_ff=5120) stream wgg/wff in F-chunks
    # from HBM (extra grid axis or pltpu.emit_pipeline) instead of holding them
    # whole, so the kernel fits v7x's 64 MiB VMEM.
    blk_weight_specs = [pl.BlockSpec(memory_space=pltpu.MemorySpace.VMEM)
                        for _ in blk_weights]

    in_specs = [
        pl.BlockSpec((1, tq, D), lambda b, q: (b, q, 0)),            # query tile of x
        pl.BlockSpec((1, heads, N, dh), lambda b, q: (b, 0, 0, 0)),  # self-attn K
        pl.BlockSpec((1, heads, N, dh), lambda b, q: (b, 0, 0, 0)),  # self-attn V
        pl.BlockSpec((1, heads, M, dh), lambda b, q: (b, 0, 0, 0)),  # cross-attn K
        pl.BlockSpec((1, heads, M, dh), lambda b, q: (b, 0, 0, 0)),  # cross-attn V
    ] + blk_weight_specs
    out_spec = pl.BlockSpec((1, tq, D), lambda b, q: (b, q, 0))

    # Large compute intermediates (softmax scores, GEGLU projection) included so
    # the VMEM budget stays honest.
    # TODO(synk): at SD sequence lengths chunk the self-attn KV axis (online
    # softmax) so the (heads, tq, N) score tensor no longer scales with N.
    intermediates = [((heads, tq, N), f32), ((heads, tq, M), f32),
                     ((tq, 2 * F_ff), f32)]
    blk_vmem = _vmem_limit(
        double_buffered=[((1, tq, D), f32),
                         ((1, heads, N, dh), bf16), ((1, heads, N, dh), bf16),
                         ((1, heads, M, dh), bf16), ((1, heads, M, dh), bf16),
                         ((1, tq, D), f32)],
        resident=[(tuple(w.shape), w.dtype) for w in blk_weights] + intermediates)

    weight_bytes = sum(w.size * w.dtype.itemsize for w in blk_weights)
    flops = 2 * B * N * D * inner * 2                 # Q projections (both attns)
    flops += 2 * B * N * inner * (N + M) * 2          # QK^T + PV for both attns
    flops += 2 * B * N * inner * D * 2                # fused output projections
    flops += 2 * B * N * D * 2 * F_ff + 2 * B * N * F_ff * D   # GEGLU + FF out
    transcendentals = B * heads * N * (N + M) + B * N * F_ff
    bytes_accessed = (2 * B * N * D * 4
                      + 2 * 2 * B * inner * (N + M)
                      + weight_bytes)
    blk_cost = pl.CostEstimate(flops=int(flops),
                               transcendentals=int(transcendentals),
                               bytes_accessed=int(bytes_accessed))

    kernel = functools.partial(transformer_block_kernel, heads=heads,
                               approx_gelu=approx_gelu)
    return pl.pallas_call(
        kernel,
        out_shape=jax.ShapeDtypeStruct((B, N, D), x.dtype),
        grid_spec=pltpu.PrefetchScalarGridSpec(
            num_scalar_prefetch=0,
            grid=(B, nq),
            in_specs=in_specs,
            out_specs=out_spec),
        compiler_params=pltpu.CompilerParams(
            # No cross-step state (K/V come from the kv_proj kernel), so both
            # axes are parallel: megacore can split over query tiles even when
            # B == 1 (v7x has 2 TensorCores).
            dimension_semantics=("parallel", "parallel"),
            vmem_limit_bytes=blk_vmem),
        cost_estimate=blk_cost,
    )(x, k1, v1, k2, v2, *blk_weights)


# ---------------------------------------------------------------------------
# Pure-JAX f32 reference (PyTorch module semantics, for verification)
# ---------------------------------------------------------------------------
def reference_block(x, context, p, heads):
    def ln(t, w, b):
        mu = jnp.mean(t, -1, keepdims=True)
        var = jnp.mean((t - mu) ** 2, -1, keepdims=True)
        return (t - mu) * lax.rsqrt(var + 1e-5) * w + b

    def attn(xq, kv, wq, wk, wv, wo, bo):
        q = xq @ wq
        k = kv @ wk
        v = kv @ wv
        B, Nq, I = q.shape
        Mk = k.shape[1]
        dh = I // heads
        qh = q.reshape(B, Nq, heads, dh).transpose(0, 2, 1, 3)
        kh = k.reshape(B, Mk, heads, dh).transpose(0, 2, 1, 3)
        vh = v.reshape(B, Mk, heads, dh).transpose(0, 2, 1, 3)
        sim = jnp.einsum('bhid,bhjd->bhij', qh, kh) * dh ** -0.5
        a = jax.nn.softmax(sim, axis=-1)
        o = jnp.einsum('bhij,bhjd->bhid', a, vh)
        o = o.transpose(0, 2, 1, 3).reshape(B, Nq, I)
        return o @ wo + bo

    x = attn(ln(x, p['ln1_w'], p['ln1_b']), ln(x, p['ln1_w'], p['ln1_b']),
             p['wq1'], p['wk1'], p['wv1'], p['wo1'], p['bo1']) + x
    x = attn(ln(x, p['ln2_w'], p['ln2_b']), context,
             p['wq2'], p['wk2'], p['wv2'], p['wo2'], p['bo2']) + x
    h = ln(x, p['ln3_w'], p['ln3_b'])
    proj = h @ p['wgg'] + p['bgg']
    f = proj.shape[-1] // 2
    x = (proj[..., :f] * jax.nn.gelu(proj[..., f:], approximate=False)) @ p['wff'] \
        + p['bff'] + x
    return x


# ---------------------------------------------------------------------------
if __name__ == "__main__":
    # Small but lane-dense shapes (last dims multiples of 128 where it matters).
    B, N, D = 2, 256, 128          # batch, tokens, model dim
    heads, d_head = 4, 32          # inner_dim = 128
    inner = heads * d_head
    M, C = 128, 64                 # context tokens, context dim
    F_ff = 4 * D                   # FeedForward inner dim (mult=4, GEGLU)

    key = jax.random.PRNGKey(0)
    ks = jax.random.split(key, 24)

    def w(k, shape, s=0.05):
        return (s * jax.random.normal(k, shape)).astype(jnp.float32)

    params = {
        'ln1_w': 1.0 + w(ks[0], (1, D)), 'ln1_b': w(ks[1], (1, D)),
        'wq1': w(ks[2], (D, inner)), 'wk1': w(ks[3], (D, inner)),
        'wv1': w(ks[4], (D, inner)), 'wo1': w(ks[5], (inner, D)),
        'bo1': w(ks[6], (1, D)),
        'ln2_w': 1.0 + w(ks[7], (1, D)), 'ln2_b': w(ks[8], (1, D)),
        'wq2': w(ks[9], (D, inner)), 'wk2': w(ks[10], (C, inner)),
        'wv2': w(ks[11], (C, inner)), 'wo2': w(ks[12], (inner, D)),
        'bo2': w(ks[13], (1, D)),
        'ln3_w': 1.0 + w(ks[14], (1, D)), 'ln3_b': w(ks[15], (1, D)),
        'wgg': w(ks[16], (D, 2 * F_ff)), 'bgg': w(ks[17], (1, 2 * F_ff)),
        'wff': w(ks[18], (F_ff, D)), 'bff': w(ks[19], (1, D)),
    }

    x = jax.random.normal(ks[20], (B, N, D), dtype=jnp.float32)
    context = jax.random.normal(ks[21], (B, M, C), dtype=jnp.float32)

    out = basic_transformer_block(x, context, params, heads, tq=128)
    out = jax.block_until_ready(out)

    ref = jax.block_until_ready(reference_block(x, context, params, heads))
    assert out.shape == (B, N, D)
    err = float(jnp.max(jnp.abs(out - ref)))
    assert err < 5e-2, err   # bf16 MXU operands vs f32 reference

    print("KERNEL_OK")
</pallas_src>

<mosaic_0001>
module attributes {stable_mosaic.version = 11 : i64} {
  func.func @kv_proj_kernel(%arg0: i32, %arg1: memref<1x256x128xf32, #tpu.memory_space<vmem>>, %arg2: memref<1x128x64xf32, #tpu.memory_space<vmem>>, %arg3: memref<1x128xf32, #tpu.memory_space<vmem>>, %arg4: memref<1x128xf32, #tpu.memory_space<vmem>>, %arg5: memref<4x128x32xbf16, #tpu.memory_space<vmem>>, %arg6: memref<4x128x32xbf16, #tpu.memory_space<vmem>>, %arg7: memref<4x64x32xbf16, #tpu.memory_space<vmem>>, %arg8: memref<4x64x32xbf16, #tpu.memory_space<vmem>>, %arg9: memref<1x4x256x32xbf16, #tpu.memory_space<vmem>>, %arg10: memref<1x4x256x32xbf16, #tpu.memory_space<vmem>>, %arg11: memref<1x4x128x32xbf16, #tpu.memory_space<vmem>>, %arg12: memref<1x4x128x32xbf16, #tpu.memory_space<vmem>>) attributes {dimension_semantics = [#tpu.dimension_semantics<parallel>], iteration_bounds = array<i64: 2>, scalar_prefetch = 0 : i64, scratch_operands = 0 : i64, tpu.core_type = #tpu.core_type<tc>, window_params = [{transform_indices = @transform_0, window_bounds = array<i64: 1, 256, 128>}, {transform_indices = @transform_1, window_bounds = array<i64: 1, 128, 64>}, {pipeline_mode = #tpu.pipeline_mode<synchronous>, transform_indices = @transform_2, window_bounds = array<i64: 1, 128>}, {pipeline_mode = #tpu.pipeline_mode<synchronous>, transform_indices = @transform_3, window_bounds = array<i64: 1, 128>}, {pipeline_mode = #tpu.pipeline_mode<synchronous>, transform_indices = @transform_4, window_bounds = array<i64: 4, 128, 32>}, {pipeline_mode = #tpu.pipeline_mode<synchronous>, transform_indices = @transform_5, window_bounds = array<i64: 4, 128, 32>}, {pipeline_mode = #tpu.pipeline_mode<synchronous>, transform_indices = @transform_6, window_bounds = array<i64: 4, 64, 32>}, {pipeline_mode = #tpu.pipeline_mode<synchronous>, transform_indices = @transform_7, window_bounds = array<i64: 4, 64, 32>}, {transform_indices = @transform_8, window_bounds = array<i64: 1, 4, 256, 32>}, {transform_indices = @transform_9, window_bounds = array<i64: 1, 4, 256, 32>}, {transform_indices = @transform_10, window_bounds = array<i64: 1, 4, 128, 32>}, {transform_indices = @transform_11, window_bounds = array<i64: 1, 4, 128, 32>}]} {
    %c0 = arith.constant 0 : index
    %c0_0 = arith.constant 0 : index
    %c0_1 = arith.constant 0 : index
    %0 = vector.load %arg1[%c0, %c0_0, %c0_1] : memref<1x256x128xf32, #tpu.memory_space<vmem>>, vector<1x256x128xf32>
    %1 = vector.shape_cast %0 : vector<1x256x128xf32> to vector<256x128xf32>
    %c0_2 = arith.constant 0 : index
    %c0_3 = arith.constant 0 : index
    %2 = vector.load %arg3[%c0_2, %c0_3] : memref<1x128xf32, #tpu.memory_space<vmem>>, vector<1x128xf32>
    %c0_4 = arith.constant 0 : index
    %c0_5 = arith.constant 0 : index
    %3 = vector.load %arg4[%c0_4, %c0_5] : memref<1x128xf32, #tpu.memory_space<vmem>>, vector<1x128xf32>
    %cst = arith.constant dense<0.000000e+00> : vector<256xf32>
    %4 = vector.multi_reduction <add>, %1, %cst [1] : vector<256x128xf32> to vector<256xf32>
    %5 = vector.shape_cast %4 : vector<256xf32> to vector<256x1xf32>
    %cst_6 = arith.constant 1.280000e+02 : f32
    %6 = vector.broadcast %cst_6 : f32 to vector<256x1xf32>
    %7 = arith.divf %5, %6 : vector<256x1xf32>
    %8 = vector.broadcast %7 : vector<256x1xf32> to vector<256x128xf32>
    %9 = arith.subf %1, %8 : vector<256x128xf32>
    %10 = arith.mulf %9, %9 : vector<256x128xf32>
    %cst_7 = arith.constant dense<0.000000e+00> : vector<256xf32>
    %11 = vector.multi_reduction <add>, %10, %cst_7 [1] : vector<256x128xf32> to vector<256xf32>
    %12 = vector.shape_cast %11 : vector<256xf32> to vector<256x1xf32>
    %cst_8 = arith.constant 1.280000e+02 : f32
    %13 = vector.broadcast %cst_8 : f32 to vector<256x1xf32>
    %14 = arith.divf %12, %13 : vector<256x1xf32>
    %cst_9 = arith.constant 9.99999974E-6 : f32
    %15 = vector.broadcast %cst_9 : f32 to vector<256x1xf32>
    %16 = arith.addf %14, %15 : vector<256x1xf32>
    %17 = math.rsqrt %16 : vector<256x1xf32>
    %18 = vector.broadcast %17 : vector<256x1xf32> to vector<256x128xf32>
    %19 = arith.mulf %9, %18 : vector<256x128xf32>
    %20 = vector.broadcast %2 : vector<1x128xf32> to vector<256x128xf32>
    %21 = arith.mulf %19, %20 : vector<256x128xf32>
    %22 = vector.broadcast %3 : vector<1x128xf32> to vector<256x128xf32>
    %23 = arith.addf %21, %22 : vector<256x128xf32>
    %24 = arith.truncf %23 : vector<256x128xf32> to vector<256x128xbf16>
    %c0_10 = arith.constant 0 : index
    %c0_11 = arith.constant 0 : index
    %c0_12 = arith.constant 0 : index
    %25 = vector.load %arg2[%c0_10, %c0_11, %c0_12] : memref<1x128x64xf32, #tpu.memory_space<vmem>>, vector<1x128x64xf32>
    %26 = vector.shape_cast %25 : vector<1x128x64xf32> to vector<128x64xf32>
    %27 = arith.truncf %26 : vector<128x64xf32> to vector<128x64xbf16>
    %c0_13 = arith.constant 0 : index
    %c0_14 = arith.constant 0 : index
    %c0_15 = arith.constant 0 : index
    %28 = vector.load %arg5[%c0_13, %c0_14, %c0_15] : memref<4x128x32xbf16, #tpu.memory_space<vmem>>, vector<1x128x32xbf16>
    %29 = vector.shape_cast %28 : vector<1x128x32xbf16> to vector<128x32xbf16>
    %cst_16 = arith.constant dense<0.000000e+00> : vector<256x32xf32>
    %30 = tpu.matmul %24, %29, %cst_16 {dimension_numbers = #tpu.dot_dimension_numbers<[1], [0], [0], [1], [0, 0, 1, 1], [], []>} : vector<256x128xbf16>, vector<128x32xbf16>, vector<256x32xf32> -> vector<256x32xf32>
    %31 = arith.truncf %30 : vector<256x32xf32> to vector<256x32xbf16>
    %c0_17 = arith.constant 0 : index
    %c0_18 = arith.constant 0 : index
    %c0_19 = arith.constant 0 : index
    %c0_20 = arith.constant 0 : index
    %32 = vector.load %arg9[%c0_17, %c0_18, %c0_19, %c0_20] : memref<1x4x256x32xbf16, #tpu.memory_space<vmem>>, vector<1x1x256x32xbf16>
    %33 = vector.shape_cast %32 : vector<1x1x256x32xbf16> to vector<256x32xbf16>
    %34 = vector.shape_cast %31 : vector<256x32xbf16> to vector<1x1x256x32xbf16>
    tpu.vector_store %arg9[%c0_17, %c0_18, %c0_19, %c0_20], %34 {strides = array<i32>} : memref<1x4x256x32xbf16, #tpu.memory_space<vmem>>, vector<1x1x256x32xbf16>,
    %c0_21 = arith.constant 0 : index
    %c0_22 = arith.constant 0 : index
    %c0_23 = arith.constant 0 : index
    %35 = vector.load %arg6[%c0_21, %c0_22, %c0_23] : memref<4x128x32xbf16, #tpu.memory_space<vmem>>, vector<1x128x32xbf16>
    %36 = vector.shape_cast %35 : vector<1x128x32xbf16> to vector<128x32xbf16>
    %cst_24 = arith.constant dense<0.000000e+00> : vector<256x32xf32>
    %37 = tpu.matmul %24, %36, %cst_24 {dimension_numbers = #tpu.dot_dimension_numbers<[1], [0], [0], [1], [0, 0, 1, 1], [], []>} : vector<256x128xbf16>, vector<128x32xbf16>, vector<256x32xf32> -> vector<256x32xf32>
    %38 = arith.truncf %37 : vector<256x32xf32> to vector<256x32xbf16>
    %c0_25 = arith.constant 0 : index
    %c0_26 = arith.constant 0 : index
    %c0_27 = arith.constant 0 : index
    %c0_28 = arith.constant 0 : index
    %39 = vector.load %arg10[%c0_25, %c0_26, %c0_27, %c0_28] : memref<1x4x256x32xbf16, #tpu.memory_space<vmem>>, vector<1x1x256x32xbf16>
    %40 = vector.shape_cast %39 : vector<1x1x256x32xbf16> to vector<256x32xbf16>
    %41 = vector.shape_cast %38 : vector<256x32xbf16> to vector<1x1x256x32xbf16>
    tpu.vector_store %arg10[%c0_25, %c0_26, %c0_27, %c0_28], %41 {strides = array<i32>} : memref<1x4x256x32xbf16, #tpu.memory_space<vmem>>, vector<1x1x256x32xbf16>,
    %c0_29 = arith.constant 0 : index
    %c0_30 = arith.constant 0 : index
    %c0_31 = arith.constant 0 : index
    %42 = vector.load %arg7[%c0_29, %c0_30, %c0_31] : memref<4x64x32xbf16, #tpu.memory_space<vmem>>, vector<1x64x32xbf16>
    %43 = vector.shape_cast %42 : vector<1x64x32xbf16> to vector<64x32xbf16>
    %cst_32 = arith.constant dense<0.000000e+00> : vector<128x32xf32>
    %44 = tpu.matmul %27, %43, %cst_32 {dimension_numbers = #tpu.dot_dimension_numbers<[1], [0], [0], [1], [0, 0, 1, 1], [], []>} : vector<128x64xbf16>, vector<64x32xbf16>, vector<128x32xf32> -> vector<128x32xf32>
    %45 = arith.truncf %44 : vector<128x32xf32> to vector<128x32xbf16>
    %c0_33 = arith.constant 0 : index
    %c0_34 = arith.constant 0 : index
    %c0_35 = arith.constant 0 : index
    %c0_36 = arith.constant 0 : index
    %46 = vector.load %arg11[%c0_33, %c0_34, %c0_35, %c0_36] : memref<1x4x128x32xbf16, #tpu.memory_space<vmem>>, vector<1x1x128x32xbf16>
    %47 = vector.shape_cast %46 : vector<1x1x128x32xbf16> to vector<128x32xbf16>
    %48 = vector.shape_cast %45 : vector<128x32xbf16> to vector<1x1x128x32xbf16>
    tpu.vector_store %arg11[%c0_33, %c0_34, %c0_35, %c0_36], %48 {strides = array<i32>} : memref<1x4x128x32xbf16, #tpu.memory_space<vmem>>, vector<1x1x128x32xbf16>,
    %c0_37 = arith.constant 0 : index
    %c0_38 = arith.constant 0 : index
    %c0_39 = arith.constant 0 : index
    %49 = vector.load %arg8[%c0_37, %c0_38, %c0_39] : memref<4x64x32xbf16, #tpu.memory_space<vmem>>, vector<1x64x32xbf16>
    %50 = vector.shape_cast %49 : vector<1x64x32xbf16> to vector<64x32xbf16>
    %cst_40 = arith.constant dense<0.000000e+00> : vector<128x32xf32>
    %51 = tpu.matmul %27, %50, %cst_40 {dimension_numbers = #tpu.dot_dimension_numbers<[1], [0], [0], [1], [0, 0, 1, 1], [], []>} : vector<128x64xbf16>, vector<64x32xbf16>, vector<128x32xf32> -> vector<128x32xf32>
    %52 = arith.truncf %51 : vector<128x32xf32> to vector<128x32xbf16>
    %c0_41 = arith.constant 0 : index
    %c0_42 = arith.constant 0 : index
    %c0_43 = arith.constant 0 : index
    %c0_44 = arith.constant 0 : index
    %53 = vector.load %arg12[%c0_41, %c0_42, %c0_43, %c0_44] : memref<1x4x128x32xbf16, #tpu.memory_space<vmem>>, vector<1x1x128x32xbf16>
    %54 = vector.shape_cast %53 : vector<1x1x128x32xbf16> to vector<128x32xbf16>
    %55 = vector.shape_cast %52 : vector<128x32xbf16> to vector<1x1x128x32xbf16>
    tpu.vector_store %arg12[%c0_41, %c0_42, %c0_43, %c0_44], %55 {strides = array<i32>} : memref<1x4x128x32xbf16, #tpu.memory_space<vmem>>, vector<1x1x128x32xbf16>,
    %c1 = arith.constant 1 : index
    %c0_45 = arith.constant 0 : index
    %c0_46 = arith.constant 0 : index
    %56 = vector.load %arg5[%c1, %c0_45, %c0_46] : memref<4x128x32xbf16, #tpu.memory_space<vmem>>, vector<1x128x32xbf16>
    %57 = vector.shape_cast %56 : vector<1x128x32xbf16> to vector<128x32xbf16>
    %cst_47 = arith.constant dense<0.000000e+00> : vector<256x32xf32>
    %58 = tpu.matmul %24, %57, %cst_47 {dimension_numbers = #tpu.dot_dimension_numbers<[1], [0], [0], [1], [0, 0, 1, 1], [], []>} : vector<256x128xbf16>, vector<128x32xbf16>, vector<256x32xf32> -> vector<256x32xf32>
    %59 = arith.truncf %58 : vector<256x32xf32> to vector<256x32xbf16>
    %c0_48 = arith.constant 0 : index
    %c1_49 = arith.constant 1 : index
    %c0_50 = arith.constant 0 : index
    %c0_51 = arith.constant 0 : index
    %60 = vector.load %arg9[%c0_48, %c1_49, %c0_50, %c0_51] : memref<1x4x256x32xbf16, #tpu.memory_space<vmem>>, vector<1x1x256x32xbf16>
    %61 = vector.shape_cast %60 : vector<1x1x256x32xbf16> to vector<256x32xbf16>
    %62 = vector.shape_cast %59 : vector<256x32xbf16> to vector<1x1x256x32xbf16>
    tpu.vector_store %arg9[%c0_48, %c1_49, %c0_50, %c0_51], %62 {strides = array<i32>} : memref<1x4x256x32xbf16, #tpu.memory_space<vmem>>, vector<1x1x256x32xbf16>,
    %c1_52 = arith.constant 1 : index
    %c0_53 = arith.constant 0 : index
    %c0_54 = arith.constant 0 : index
    %63 = vector.load %arg6[%c1_52, %c0_53, %c0_54] : memref<4x128x32xbf16, #tpu.memory_space<vmem>>, vector<1x128x32xbf16>
    %64 = vector.shape_cast %63 : vector<1x128x32xbf16> to vector<128x32xbf16>
    %cst_55 = arith.constant dense<0.000000e+00> : vector<256x32xf32>
    %65 = tpu.matmul %24, %64, %cst_55 {dimension_numbers = #tpu.dot_dimension_numbers<[1], [0], [0], [1], [0, 0, 1, 1], [], []>} : vector<256x128xbf16>, vector<128x32xbf16>, vector<256x32xf32> -> vector<256x32xf32>
    %66 = arith.truncf %65 : vector<256x32xf32> to vector<256x32xbf16>
    %c0_56 = arith.constant 0 : index
    %c1_57 = arith.constant 1 : index
    %c0_58 = arith.constant 0 : index
    %c0_59 = arith.constant 0 : index
    %67 = vector.load %arg10[%c0_56, %c1_57, %c0_58, %c0_59] : memref<1x4x256x32xbf16, #tpu.memory_space<vmem>>, vector<1x1x256x32xbf16>
    %68 = vector.shape_cast %67 : vector<1x1x256x32xbf16> to vector<256x32xbf16>
    %69 = vector.shape_cast %66 : vector<256x32xbf16> to vector<1x1x256x32xbf16>
    tpu.vector_store %arg10[%c0_56, %c1_57, %c0_58, %c0_59], %69 {strides = array<i32>} : memref<1x4x256x32xbf16, #tpu.memory_space<vmem>>, vector<1x1x256x32xbf16>,
    %c1_60 = arith.constant 1 : index
    %c0_61 = arith.constant 0 : index
    %c0_62 = arith.constant 0 : index
    %70 = vector.load %arg7[%c1_60, %c0_61, %c0_62] : memref<4x64x32xbf16, #tpu.memory_space<vmem>>, vector<1x64x32xbf16>
    %71 = vector.shape_cast %70 : vector<1x64x32xbf16> to vector<64x32xbf16>
    %cst_63 = arith.constant dense<0.000000e+00> : vector<128x32xf32>
    %72 = tpu.matmul %27, %71, %cst_63 {dimension_numbers = #tpu.dot_dimension_numbers<[1], [0], [0], [1], [0, 0, 1, 1], [], []>} : vector<128x64xbf16>, vector<64x32xbf16>, vector<128x32xf32> -> vector<128x32xf32>
    %73 = arith.truncf %72 : vector<128x32xf32> to vector<128x32xbf16>
    %c0_64 = arith.constant 0 : index
    %c1_65 = arith.constant 1 : index
    %c0_66 = arith.constant 0 : index
    %c0_67 = arith.constant 0 : index
    %74 = vector.load %arg11[%c0_64, %c1_65, %c0_66, %c0_67] : memref<1x4x128x32xbf16, #tpu.memory_space<vmem>>, vector<1x1x128x32xbf16>
    %75 = vector.shape_cast %74 : vector<1x1x128x32xbf16> to vector<128x32xbf16>
    %76 = vector.shape_cast %73 : vector<128x32xbf16> to vector<1x1x128x32xbf16>
    tpu.vector_store %arg11[%c0_64, %c1_65, %c0_66, %c0_67], %76 {strides = array<i32>} : memref<1x4x128x32xbf16, #tpu.memory_space<vmem>>, vector<1x1x128x32xbf16>,
    %c1_68 = arith.constant 1 : index
    %c0_69 = arith.constant 0 : index
    %c0_70 = arith.constant 0 : index
    %77 = vector.load %arg8[%c1_68, %c0_69, %c0_70] : memref<4x64x32xbf16, #tpu.memory_space<vmem>>, vector<1x64x32xbf16>
    %78 = vector.shape_cast %77 : vector<1x64x32xbf16> to vector<64x32xbf16>
    %cst_71 = arith.constant dense<0.000000e+00> : vector<128x32xf32>
    %79 = tpu.matmul %27, %78, %cst_71 {dimension_numbers = #tpu.dot_dimension_numbers<[1], [0], [0], [1], [0, 0, 1, 1], [], []>} : vector<128x64xbf16>, vector<64x32xbf16>, vector<128x32xf32> -> vector<128x32xf32>
    %80 = arith.truncf %79 : vector<128x32xf32> to vector<128x32xbf16>
    %c0_72 = arith.constant 0 : index
    %c1_73 = arith.constant 1 : index
    %c0_74 = arith.constant 0 : index
    %c0_75 = arith.constant 0 : index
    %81 = vector.load %arg12[%c0_72, %c1_73, %c0_74, %c0_75] : memref<1x4x128x32xbf16, #tpu.memory_space<vmem>>, vector<1x1x128x32xbf16>
    %82 = vector.shape_cast %81 : vector<1x1x128x32xbf16> to vector<128x32xbf16>
    %83 = vector.shape_cast %80 : vector<128x32xbf16> to vector<1x1x128x32xbf16>
    tpu.vector_store %arg12[%c0_72, %c1_73, %c0_74, %c0_75], %83 {strides = array<i32>} : memref<1x4x128x32xbf16, #tpu.memory_space<vmem>>, vector<1x1x128x32xbf16>,
    %c2 = arith.constant 2 : index
    %c0_76 = arith.constant 0 : index
    %c0_77 = arith.constant 0 : index
    %84 = vector.load %arg5[%c2, %c0_76, %c0_77] : memref<4x128x32xbf16, #tpu.memory_space<vmem>>, vector<1x128x32xbf16>
    %85 = vector.shape_cast %84 : vector<1x128x32xbf16> to vector<128x32xbf16>
    %cst_78 = arith.constant dense<0.000000e+00> : vector<256x32xf32>
    %86 = tpu.matmul %24, %85, %cst_78 {dimension_numbers = #tpu.dot_dimension_numbers<[1], [0], [0], [1], [0, 0, 1, 1], [], []>} : vector<256x128xbf16>, vector<128x32xbf16>, vector<256x32xf32> -> vector<256x32xf32>
    %87 = arith.truncf %86 : vector<256x32xf32> to vector<256x32xbf16>
    %c0_79 = arith.constant 0 : index
    %c2_80 = arith.constant 2 : index
    %c0_81 = arith.constant 0 : index
    %c0_82 = arith.constant 0 : index
    %88 = vector.load %arg9[%c0_79, %c2_80, %c0_81, %c0_82] : memref<1x4x256x32xbf16, #tpu.memory_space<vmem>>, vector<1x1x256x32xbf16>
    %89 = vector.shape_cast %88 : vector<1x1x256x32xbf16> to vector<256x32xbf16>
    %90 = vector.shape_cast %87 : vector<256x32xbf16> to vector<1x1x256x32xbf16>
    tpu.vector_store %arg9[%c0_79, %c2_80, %c0_81, %c0_82], %90 {strides = array<i32>} : memref<1x4x256x32xbf16, #tpu.memory_space<vmem>>, vector<1x1x256x32xbf16>,
    %c2_83 = arith.constant 2 : index
    %c0_84 = arith.constant 0 : index
    %c0_85 = arith.constant 0 : index
    %91 = vector.load %arg6[%c2_83, %c0_84, %c0_85] : memref<4x128x32xbf16, #tpu.memory_space<vmem>>, vector<1x128x32xbf16>
    %92 = vector.shape_cast %91 : vector<1x128x32xbf16> to vector<128x32xbf16>
    %cst_86 = arith.constant dense<0.000000e+00> : vector<256x32xf32>
    %93 = tpu.matmul %24, %92, %cst_86 {dimension_numbers = #tpu.dot_dimension_numbers<[1], [0], [0], [1], [0, 0, 1, 1], [], []>} : vector<256x128xbf16>, vector<128x32xbf16>, vector<256x32xf32> -> vector<256x32xf32>
    %94 = arith.truncf %93 : vector<256x32xf32> to vector<256x32xbf16>
    %c0_87 = arith.constant 0 : index
    %c2_88 = arith.constant 2 : index
    %c0_89 = arith.constant 0 : index
    %c0_90 = arith.constant 0 : index
    %95 = vector.load %arg10[%c0_87, %c2_88, %c0_89, %c0_90] : memref<1x4x256x32xbf16, #tpu.memory_space<vmem>>, vector<1x1x256x32xbf16>
    %96 = vector.shape_cast %95 : vector<1x1x256x32xbf16> to vector<256x32xbf16>
    %97 = vector.shape_cast %94 : vector<256x32xbf16> to vector<1x1x256x32xbf16>
    tpu.vector_store %arg10[%c0_87, %c2_88, %c0_89, %c0_90], %97 {strides = array<i32>} : memref<1x4x256x32xbf16, #tpu.memory_space<vmem>>, vector<1x1x256x32xbf16>,
    %c2_91 = arith.constant 2 : index
    %c0_92 = arith.constant 0 : index
    %c0_93 = arith.constant 0 : index
    %98 = vector.load %arg7[%c2_91, %c0_92, %c0_93] : memref<4x64x32xbf16, #tpu.memory_space<vmem>>, vector<1x64x32xbf16>
    %99 = vector.shape_cast %98 : vector<1x64x32xbf16> to vector<64x32xbf16>
    %cst_94 = arith.constant dense<0.000000e+00> : vector<128x32xf32>
    %100 = tpu.matmul %27, %99, %cst_94 {dimension_numbers = #tpu.dot_dimension_numbers<[1], [0], [0], [1], [0, 0, 1, 1], [], []>} : vector<128x64xbf16>, vector<64x32xbf16>, vector<128x32xf32> -> vector<128x32xf32>
    %101 = arith.truncf %100 : vector<128x32xf32> to vector<128x32xbf16>
    %c0_95 = arith.constant 0 : index
    %c2_96 = arith.constant 2 : index
    %c0_97 = arith.constant 0 : index
    %c0_98 = arith.constant 0 : index
    %102 = vector.load %arg11[%c0_95, %c2_96, %c0_97, %c0_98] : memref<1x4x128x32xbf16, #tpu.memory_space<vmem>>, vector<1x1x128x32xbf16>
    %103 = vector.shape_cast %102 : vector<1x1x128x32xbf16> to vector<128x32xbf16>
    %104 = vector.shape_cast %101 : vector<128x32xbf16> to vector<1x1x128x32xbf16>
    tpu.vector_store %arg11[%c0_95, %c2_96, %c0_97, %c0_98], %104 {strides = array<i32>} : memref<1x4x128x32xbf16, #tpu.memory_space<vmem>>, vector<1x1x128x32xbf16>,
    %c2_99 = arith.constant 2 : index
    %c0_100 = arith.constant 0 : index
    %c0_101 = arith.constant 0 : index
    %105 = vector.load %arg8[%c2_99, %c0_100, %c0_101] : memref<4x64x32xbf16, #tpu.memory_space<vmem>>, vector<1x64x32xbf16>
    %106 = vector.shape_cast %105 : vector<1x64x32xbf16> to vector<64x32xbf16>
    %cst_102 = arith.constant dense<0.000000e+00> : vector<128x32xf32>
    %107 = tpu.matmul %27, %106, %cst_102 {dimension_numbers = #tpu.dot_dimension_numbers<[1], [0], [0], [1], [0, 0, 1, 1], [], []>} : vector<128x64xbf16>, vector<64x32xbf16>, vector<128x32xf32> -> vector<128x32xf32>
    %108 = arith.truncf %107 : vector<128x32xf32> to vector<128x32xbf16>
    %c0_103 = arith.constant 0 : index
    %c2_104 = arith.constant 2 : index
    %c0_105 = arith.constant 0 : index
    %c0_106 = arith.constant 0 : index
    %109 = vector.load %arg12[%c0_103, %c2_104, %c0_105, %c0_106] : memref<1x4x128x32xbf16, #tpu.memory_space<vmem>>, vector<1x1x128x32xbf16>
    %110 = vector.shape_cast %109 : vector<1x1x128x32xbf16> to vector<128x32xbf16>
    %111 = vector.shape_cast %108 : vector<128x32xbf16> to vector<1x1x128x32xbf16>
    tpu.vector_store %arg12[%c0_103, %c2_104, %c0_105, %c0_106], %111 {strides = array<i32>} : memref<1x4x128x32xbf16, #tpu.memory_space<vmem>>, vector<1x1x128x32xbf16>,
    %c3 = arith.constant 3 : index
    %c0_107 = arith.constant 0 : index
    %c0_108 = arith.constant 0 : index
    %112 = vector.load %arg5[%c3, %c0_107, %c0_108] : memref<4x128x32xbf16, #tpu.memory_space<vmem>>, vector<1x128x32xbf16>
    %113 = vector.shape_cast %112 : vector<1x128x32xbf16> to vector<128x32xbf16>
    %cst_109 = arith.constant dense<0.000000e+00> : vector<256x32xf32>
    %114 = tpu.matmul %24, %113, %cst_109 {dimension_numbers = #tpu.dot_dimension_numbers<[1], [0], [0], [1], [0, 0, 1, 1], [], []>} : vector<256x128xbf16>, vector<128x32xbf16>, vector<256x32xf32> -> vector<256x32xf32>
    %115 = arith.truncf %114 : vector<256x32xf32> to vector<256x32xbf16>
    %c0_110 = arith.constant 0 : index
    %c3_111 = arith.constant 3 : index
    %c0_112 = arith.constant 0 : index
    %c0_113 = arith.constant 0 : index
    %116 = vector.load %arg9[%c0_110, %c3_111, %c0_112, %c0_113] : memref<1x4x256x32xbf16, #tpu.memory_space<vmem>>, vector<1x1x256x32xbf16>
    %117 = vector.shape_cast %116 : vector<1x1x256x32xbf16> to vector<256x32xbf16>
    %118 = vector.shape_cast %115 : vector<256x32xbf16> to vector<1x1x256x32xbf16>
    tpu.vector_store %arg9[%c0_110, %c3_111, %c0_112, %c0_113], %118 {strides = array<i32>} : memref<1x4x256x32xbf16, #tpu.memory_space<vmem>>, vector<1x1x256x32xbf16>,
    %c3_114 = arith.constant 3 : index
    %c0_115 = arith.constant 0 : index
    %c0_116 = arith.constant 0 : index
    %119 = vector.load %arg6[%c3_114, %c0_115, %c0_116] : memref<4x128x32xbf16, #tpu.memory_space<vmem>>, vector<1x128x32xbf16>
    %120 = vector.shape_cast %119 : vector<1x128x32xbf16> to vector<128x32xbf16>
    %cst_117 = arith.constant dense<0.000000e+00> : vector<256x32xf32>
    %121 = tpu.matmul %24, %120, %cst_117 {dimension_numbers = #tpu.dot_dimension_numbers<[1], [0], [0], [1], [0, 0, 1, 1], [], []>} : vector<256x128xbf16>, vector<128x32xbf16>, vector<256x32xf32> -> vector<256x32xf32>
    %122 = arith.truncf %121 : vector<256x32xf32> to vector<256x32xbf16>
    %c0_118 = arith.constant 0 : index
    %c3_119 = arith.constant 3 : index
    %c0_120 = arith.constant 0 : index
    %c0_121 = arith.constant 0 : index
    %123 = vector.load %arg10[%c0_118, %c3_119, %c0_120, %c0_121] : memref<1x4x256x32xbf16, #tpu.memory_space<vmem>>, vector<1x1x256x32xbf16>
    %124 = vector.shape_cast %123 : vector<1x1x256x32xbf16> to vector<256x32xbf16>
    %125 = vector.shape_cast %122 : vector<256x32xbf16> to vector<1x1x256x32xbf16>
    tpu.vector_store %arg10[%c0_118, %c3_119, %c0_120, %c0_121], %125 {strides = array<i32>} : memref<1x4x256x32xbf16, #tpu.memory_space<vmem>>, vector<1x1x256x32xbf16>,
    %c3_122 = arith.constant 3 : index
    %c0_123 = arith.constant 0 : index
    %c0_124 = arith.constant 0 : index
    %126 = vector.load %arg7[%c3_122, %c0_123, %c0_124] : memref<4x64x32xbf16, #tpu.memory_space<vmem>>, vector<1x64x32xbf16>
    %127 = vector.shape_cast %126 : vector<1x64x32xbf16> to vector<64x32xbf16>
    %cst_125 = arith.constant dense<0.000000e+00> : vector<128x32xf32>
    %128 = tpu.matmul %27, %127, %cst_125 {dimension_numbers = #tpu.dot_dimension_numbers<[1], [0], [0], [1], [0, 0, 1, 1], [], []>} : vector<128x64xbf16>, vector<64x32xbf16>, vector<128x32xf32> -> vector<128x32xf32>
    %129 = arith.truncf %128 : vector<128x32xf32> to vector<128x32xbf16>
    %c0_126 = arith.constant 0 : index
    %c3_127 = arith.constant 3 : index
    %c0_128 = arith.constant 0 : index
    %c0_129 = arith.constant 0 : index
    %130 = vector.load %arg11[%c0_126, %c3_127, %c0_128, %c0_129] : memref<1x4x128x32xbf16, #tpu.memory_space<vmem>>, vector<1x1x128x32xbf16>
    %131 = vector.shape_cast %130 : vector<1x1x128x32xbf16> to vector<128x32xbf16>
    %132 = vector.shape_cast %129 : vector<128x32xbf16> to vector<1x1x128x32xbf16>
    tpu.vector_store %arg11[%c0_126, %c3_127, %c0_128, %c0_129], %132 {strides = array<i32>} : memref<1x4x128x32xbf16, #tpu.memory_space<vmem>>, vector<1x1x128x32xbf16>,
    %c3_130 = arith.constant 3 : index
    %c0_131 = arith.constant 0 : index
    %c0_132 = arith.constant 0 : index
    %133 = vector.load %arg8[%c3_130, %c0_131, %c0_132] : memref<4x64x32xbf16, #tpu.memory_space<vmem>>, vector<1x64x32xbf16>
    %134 = vector.shape_cast %133 : vector<1x64x32xbf16> to vector<64x32xbf16>
    %cst_133 = arith.constant dense<0.000000e+00> : vector<128x32xf32>
    %135 = tpu.matmul %27, %134, %cst_133 {dimension_numbers = #tpu.dot_dimension_numbers<[1], [0], [0], [1], [0, 0, 1, 1], [], []>} : vector<128x64xbf16>, vector<64x32xbf16>, vector<128x32xf32> -> vector<128x32xf32>
    %136 = arith.truncf %135 : vector<128x32xf32> to vector<128x32xbf16>
    %c0_134 = arith.constant 0 : index
    %c3_135 = arith.constant 3 : index
    %c0_136 = arith.constant 0 : index
    %c0_137 = arith.constant 0 : index
    %137 = vector.load %arg12[%c0_134, %c3_135, %c0_136, %c0_137] : memref<1x4x128x32xbf16, #tpu.memory_space<vmem>>, vector<1x1x128x32xbf16>
    %138 = vector.shape_cast %137 : vector<1x1x128x32xbf16> to vector<128x32xbf16>
    %139 = vector.shape_cast %136 : vector<128x32xbf16> to vector<1x1x128x32xbf16>
    tpu.vector_store %arg12[%c0_134, %c3_135, %c0_136, %c0_137], %139 {strides = array<i32>} : memref<1x4x128x32xbf16, #tpu.memory_space<vmem>>, vector<1x1x128x32xbf16>,
    return
  }
  func.func @transform_0(%arg0: i32) -> (i32, i32, i32) {
    %c0_i32 = arith.constant 0 : i32
    %c0_i32_0 = arith.constant 0 : i32
    %c0_i32_1 = arith.constant 0 : i32
    return %arg0, %c0_i32, %c0_i32_0 : i32, i32, i32
  }
  func.func @transform_1(%arg0: i32) -> (i32, i32, i32) {
    %c0_i32 = arith.constant 0 : i32
    %c0_i32_0 = arith.constant 0 : i32
    %c0_i32_1 = arith.constant 0 : i32
    return %arg0, %c0_i32, %c0_i32_0 : i32, i32, i32
  }
  func.func @transform_2(%arg0: i32) -> (i32, i32) {
    %c0_i32 = arith.constant 0 : i32
    %c0_i32_0 = arith.constant 0 : i32
    %c0_i32_1 = arith.constant 0 : i32
    return %c0_i32, %c0_i32_0 : i32, i32
  }
  func.func @transform_3(%arg0: i32) -> (i32, i32) {
    %c0_i32 = arith.constant 0 : i32
    %c0_i32_0 = arith.constant 0 : i32
    %c0_i32_1 = arith.constant 0 : i32
    return %c0_i32, %c0_i32_0 : i32, i32
  }
  func.func @transform_4(%arg0: i32) -> (i32, i32, i32) {
    %c0_i32 = arith.constant 0 : i32
    %c0_i32_0 = arith.constant 0 : i32
    %c0_i32_1 = arith.constant 0 : i32
    %c0_i32_2 = arith.constant 0 : i32
    return %c0_i32, %c0_i32_0, %c0_i32_1 : i32, i32, i32
  }
  func.func @transform_5(%arg0: i32) -> (i32, i32, i32) {
    %c0_i32 = arith.constant 0 : i32
    %c0_i32_0 = arith.constant 0 : i32
    %c0_i32_1 = arith.constant 0 : i32
    %c0_i32_2 = arith.constant 0 : i32
    return %c0_i32, %c0_i32_0, %c0_i32_1 : i32, i32, i32
  }
  func.func @transform_6(%arg0: i32) -> (i32, i32, i32) {
    %c0_i32 = arith.constant 0 : i32
    %c0_i32_0 = arith.constant 0 : i32
    %c0_i32_1 = arith.constant 0 : i32
    %c0_i32_2 = arith.constant 0 : i32
    return %c0_i32, %c0_i32_0, %c0_i32_1 : i32, i32, i32
  }
  func.func @transform_7(%arg0: i32) -> (i32, i32, i32) {
    %c0_i32 = arith.constant 0 : i32
    %c0_i32_0 = arith.constant 0 : i32
    %c0_i32_1 = arith.constant 0 : i32
    %c0_i32_2 = arith.constant 0 : i32
    return %c0_i32, %c0_i32_0, %c0_i32_1 : i32, i32, i32
  }
  func.func @transform_8(%arg0: i32) -> (i32, i32, i32, i32) {
    %c0_i32 = arith.constant 0 : i32
    %c0_i32_0 = arith.constant 0 : i32
    %c0_i32_1 = arith.constant 0 : i32
    %c0_i32_2 = arith.constant 0 : i32
    return %arg0, %c0_i32, %c0_i32_0, %c0_i32_1 : i32, i32, i32, i32
  }
  func.func @transform_9(%arg0: i32) -> (i32, i32, i32, i32) {
    %c0_i32 = arith.constant 0 : i32
    %c0_i32_0 = arith.constant 0 : i32
    %c0_i32_1 = arith.constant 0 : i32
    %c0_i32_2 = arith.constant 0 : i32
    return %arg0, %c0_i32, %c0_i32_0, %c0_i32_1 : i32, i32, i32, i32
  }
  func.func @transform_10(%arg0: i32) -> (i32, i32, i32, i32) {
    %c0_i32 = arith.constant 0 : i32
    %c0_i32_0 = arith.constant 0 : i32
    %c0_i32_1 = arith.constant 0 : i32
    %c0_i32_2 = arith.constant 0 : i32
    return %arg0, %c0_i32, %c0_i32_0, %c0_i32_1 : i32, i32, i32, i32
  }
  func.func @transform_11(%arg0: i32) -> (i32, i32, i32, i32) {
    %c0_i32 = arith.constant 0 : i32
    %c0_i32_0 = arith.constant 0 : i32
    %c0_i32_1 = arith.constant 0 : i32
    %c0_i32_2 = arith.constant 0 : i32
    return %arg0, %c0_i32, %c0_i32_0, %c0_i32_1 : i32, i32, i32, i32
  }
}

</mosaic_0001>

<llo_original>
// kernel: tpu_custom_call.1
$region0: #{tpu_custom_call.1}
  #allocation0 [shape = 'u32[]', space=smem, size = 0x4, offset = 0x4, fixed_abs, tag = 'smem constant byte address 0x4 - core index']
  #allocation1 [shape = 'u32[72,128]{1,0:T(1,128)}', space=vmem, size = 0x9000, scoped, tag = 'internal scratch']
  %s0 = inlined_call_operand.vmem [shape: f32[2,256,128], index: 0, kind: input, shape index: {}]
  %s1 = inlined_call_operand.vmem [shape: f32[2,128,64], index: 1, kind: input, shape index: {}]
  %s2 = inlined_call_operand.vmem [shape: f32[1,128], index: 2, kind: input, shape index: {}]
  %s3 = inlined_call_operand.vmem [shape: f32[1,128], index: 3, kind: input, shape index: {}]
  %s4 = inlined_call_operand.vmem [shape: bf16[4,128,32], index: 4, kind: input, shape index: {}]
  %s5 = inlined_call_operand.vmem [shape: bf16[4,128,32], index: 5, kind: input, shape index: {}]
  %s6 = inlined_call_operand.vmem [shape: bf16[4,64,32], index: 6, kind: input, shape index: {}]
  %s7 = inlined_call_operand.vmem [shape: bf16[4,64,32], index: 7, kind: input, shape index: {}]
  %s8 = inlined_call_operand.vmem [shape: bf16[2,4,256,32], index: 8, kind: output, shape index: {0}]
  %s9 = inlined_call_operand.vmem [shape: bf16[2,4,256,32], index: 9, kind: output, shape index: {1}]
  %s10 = inlined_call_operand.vmem [shape: bf16[2,4,128,32], index: 10, kind: output, shape index: {2}]
  %s11 = inlined_call_operand.vmem [shape: bf16[2,4,128,32], index: 11, kind: output, shape index: {3}]
  %12 = xla_tuple %s8, %s9, %s10, %s11
  %s13 = sld [smem:[#allocation0]]
  $region89: #{tpu_custom_call.1} parent=0
    _
  %s15 = ssub.s32 1, %s13
  %s16 = scalar_select 0, %s15, %s13
  loop: start=0, step=1, limit=4
  $region2: #{tpu_custom_call.1} parent=0 // loop_pre_header
    _
  $region3: #{tpu_custom_call.1} parent=0 // loop_header
    %s18 = sphi 0, %s22
    %p19 = scmp.ge.s32.totalorder %s18, 4
    %s28 = sphi 0, %s30
    %s31 = sphi 0, %s28
    %s32 = sphi 0, %s31
    %s48 = sphi 0, %s32
    %s54 = sphi 0, %s56
    %s57 = sphi 0, %s54
    %s58 = sphi 0, %s57
    %s74 = sphi 0, %s58
    %s78 = sphi 0, %s78
    %s80 = sphi 0, %s78
    %s81 = sphi 0, %s80
    %s95 = sphi 0, %s81
    %s99 = sphi 0, %s99
    %s101 = sphi 0, %s99
    %s102 = sphi 0, %s101
    %s116 = sphi 0, %s102
    %s120 = sphi 0, %s120
    %s122 = sphi 0, %s120
    %s123 = sphi 0, %s122
    %s137 = sphi 0, %s123
    %s141 = sphi 0, %s141
    %s143 = sphi 0, %s141
    %s144 = sphi 0, %s143
    %s158 = sphi 0, %s144
    %s162 = sphi 0, %s162
    %s164 = sphi 0, %s162
    %s165 = sphi 0, %s164
    %s179 = sphi 0, %s165
    %s183 = sphi 0, %s183
    %s185 = sphi 0, %s183
    %s186 = sphi 0, %s185
    %s200 = sphi 0, %s186
    %s206 = sphi 0, %s208
    %s209 = sphi 0, %s206
    %s210 = sphi 0, %s209
    %s226 = sphi 0, %s210
    %s232 = sphi 0, %s234
    %s235 = sphi 0, %s232
    %s236 = sphi 0, %s235
    %s252 = sphi 0, %s236
    %s258 = sphi 0, %s260
    %s261 = sphi 0, %s258
    %s262 = sphi 0, %s261
    %s278 = sphi 0, %s262
    %s284 = sphi 0, %s286
    %s287 = sphi 0, %s284
    %s288 = sphi 0, %s287
    %s304 = sphi 0, %s288
  $region4: #{tpu_custom_call.1} parent=0 // loop_header_branch
    %21 = sbr.rel (%p19) target = $region8
  $region5: #{tpu_custom_call.1} parent=0 // loop_body
    %s23 = ssub.s32 %s18, 1
    %s24 = ssub.s32 %s18, 2
    %s25 = sadd.s32 %s18, 1
    %s26 = ssub.s32 %s18, %s25
    %p27 = scmp.eq.s32.totalorder %s26, 0
    %s29 = sadd.s32 %s28, 1
    %s30 = scalar_select %p27, %s28, %s29
    %p33 = pneg %p27
    %p34 = scmp.eq.s32.totalorder %s18, 1
    %p35 = por %p33, %p34
    %p36 = scmp.ne.s32.totalorder %s28, %s31
    %p37 = scmp.eq.s32.totalorder %s18, 0
    %p38 = por %p36, %p37
    %p39 = scmp.ne.s32.totalorder %s28, %s31
    %p40 = scmp.eq.s32.totalorder %s23, 1
    %p41 = por %p39, %p40
    %p42 = scmp.ne.s32.totalorder %s31, %s32
    %p43 = scmp.eq.s32.totalorder %s23, 0
    %p44 = por %p42, %p43
    %p45 = scmp.ne.s32.totalorder %s31, %s32
    %p46 = scmp.eq.s32.totalorder %s24, 1
    %p47 = por %p45, %p46
    %p49 = scmp.ne.s32.totalorder %s32, %s48
    %p50 = scmp.eq.s32.totalorder %s24, 0
    %p51 = por %p49, %p50
    %s52 = ssub.s32 %s18, %s25
    %p53 = scmp.eq.s32.totalorder %s52, 0
    %s55 = sadd.s32 %s54, 1
    %s56 = scalar_select %p53, %s54, %s55
    %p59 = pneg %p53
    %p60 = scmp.eq.s32.totalorder %s18, 1
    %p61 = por %p59, %p60
    %p62 = scmp.ne.s32.totalorder %s54, %s57
    %p63 = scmp.eq.s32.totalorder %s18, 0
    %p64 = por %p62, %p63
    %p65 = scmp.ne.s32.totalorder %s54, %s57
    %p66 = scmp.eq.s32.totalorder %s23, 1
    %p67 = por %p65, %p66
    %p68 = scmp.ne.s32.totalorder %s57, %s58
    %p69 = scmp.eq.s32.totalorder %s23, 0
    %p70 = por %p68, %p69
    %p71 = scmp.ne.s32.totalorder %s57, %s58
    %p72 = scmp.eq.s32.totalorder %s24, 1
    %p73 = por %p71, %p72
    %p75 = scmp.ne.s32.totalorder %s58, %s74
    %p76 = scmp.eq.s32.totalorder %s24, 0
    %p77 = por %p75, %p76
    %s79 = sadd.s32 %s78, 1
    %p82 = scmp.eq.s32.totalorder %s18, 1
    %p83 = scmp.ne.s32.totalorder %s78, %s80
    %p84 = scmp.eq.s32.totalorder %s18, 0
    %p85 = por %p83, %p84
    %p86 = scmp.ne.s32.totalorder %s78, %s80
    %p87 = scmp.eq.s32.totalorder %s23, 1
    %p88 = por %p86, %p87
    %p89 = scmp.ne.s32.totalorder %s80, %s81
    %p90 = scmp.eq.s32.totalorder %s23, 0
    %p91 = por %p89, %p90
    %p92 = scmp.ne.s32.totalorder %s80, %s81
    %p93 = scmp.eq.s32.totalorder %s24, 1
    %p94 = por %p92, %p93
    %p96 = scmp.ne.s32.totalorder %s81, %s95
    %p97 = scmp.eq.s32.totalorder %s24, 0
    %p98 = por %p96, %p97
    %s100 = sadd.s32 %s99, 1
    %p103 = scmp.eq.s32.totalorder %s18, 1
    %p104 = scmp.ne.s32.totalorder %s99, %s101
    %p105 = scmp.eq.s32.totalorder %s18, 0
    %p106 = por %p104, %p105
    %p107 = scmp.ne.s32.totalorder %s99, %s101
    %p108 = scmp.eq.s32.totalorder %s23, 1
    %p109 = por %p107, %p108
    %p110 = scmp.ne.s32.totalorder %s101, %s102
    %p111 = scmp.eq.s32.totalorder %s23, 0
    %p112 = por %p110, %p111
    %p113 = scmp.ne.s32.totalorder %s101, %s102
    %p114 = scmp.eq.s32.totalorder %s24, 1
    %p115 = por %p113, %p114
    %p117 = scmp.ne.s32.totalorder %s102, %s116
    %p118 = scmp.eq.s32.totalorder %s24, 0
    %p119 = por %p117, %p118
    %s121 = sadd.s32 %s120, 1
    %p124 = scmp.eq.s32.totalorder %s18, 1
    %p125 = scmp.ne.s32.totalorder %s120, %s122
    %p126 = scmp.eq.s32.totalorder %s18, 0
    %p127 = por %p125, %p126
    %p128 = scmp.ne.s32.totalorder %s120, %s122
    %p129 = scmp.eq.s32.totalorder %s23, 1
    %p130 = por %p128, %p129
    %p131 = scmp.ne.s32.totalorder %s122, %s123
    %p132 = scmp.eq.s32.totalorder %s23, 0
    %p133 = por %p131, %p132
    %p134 = scmp.ne.s32.totalorder %s122, %s123
    %p135 = scmp.eq.s32.totalorder %s24, 1
    %p136 = por %p134, %p135
    %p138 = scmp.ne.s32.totalorder %s123, %s137
    %p139 = scmp.eq.s32.totalorder %s24, 0
    %p140 = por %p138, %p139
    %s142 = sadd.s32 %s141, 1
    %p145 = scmp.eq.s32.totalorder %s18, 1
    %p146 = scmp.ne.s32.totalorder %s141, %s143
    %p147 = scmp.eq.s32.totalorder %s18, 0
    %p148 = por %p146, %p147
    %p149 = scmp.ne.s32.totalorder %s141, %s143
    %p150 = scmp.eq.s32.totalorder %s23, 1
    %p151 = por %p149, %p150
    %p152 = scmp.ne.s32.totalorder %s143, %s144
    %p153 = scmp.eq.s32.totalorder %s23, 0
    %p154 = por %p152, %p153
    %p155 = scmp.ne.s32.totalorder %s143, %s144
    %p156 = scmp.eq.s32.totalorder %s24, 1
    %p157 = por %p155, %p156
    %p159 = scmp.ne.s32.totalorder %s144, %s158
    %p160 = scmp.eq.s32.totalorder %s24, 0
    %p161 = por %p159, %p160
    %s163 = sadd.s32 %s162, 1
    %p166 = scmp.eq.s32.totalorder %s18, 1
    %p167 = scmp.ne.s32.totalorder %s162, %s164
    %p168 = scmp.eq.s32.totalorder %s18, 0
    %p169 = por %p167, %p168
    %p170 = scmp.ne.s32.totalorder %s162, %s164
    %p171 = scmp.eq.s32.totalorder %s23, 1
    %p172 = por %p170, %p171
    %p173 = scmp.ne.s32.totalorder %s164, %s165
    %p174 = scmp.eq.s32.totalorder %s23, 0
    %p175 = por %p173, %p174
    %p176 = scmp.ne.s32.totalorder %s164, %s165
    %p177 = scmp.eq.s32.totalorder %s24, 1
    %p178 = por %p176, %p177
    %p180 = scmp.ne.s32.totalorder %s165, %s179
    %p181 = scmp.eq.s32.totalorder %s24, 0
    %p182 = por %p180, %p181
    %s184 = sadd.s32 %s183, 1
    %p187 = scmp.eq.s32.totalorder %s18, 1
    %p188 = scmp.ne.s32.totalorder %s183, %s185
    %p189 = scmp.eq.s32.totalorder %s18, 0
    %p190 = por %p188, %p189
    %p191 = scmp.ne.s32.totalorder %s183, %s185
    %p192 = scmp.eq.s32.totalorder %s23, 1
    %p193 = por %p191, %p192
    %p194 = scmp.ne.s32.totalorder %s185, %s186
    %p195 = scmp.eq.s32.totalorder %s23, 0
    %p196 = por %p194, %p195
    %p197 = scmp.ne.s32.totalorder %s185, %s186
    %p198 = scmp.eq.s32.totalorder %s24, 1
    %p199 = por %p197, %p198
    %p201 = scmp.ne.s32.totalorder %s186, %s200
    %p202 = scmp.eq.s32.totalorder %s24, 0
    %p203 = por %p201, %p202
    %s204 = ssub.s32 %s18, %s25
    %p205 = scmp.eq.s32.totalorder %s204, 0
    %s207 = sadd.s32 %s206, 1
    %s208 = scalar_select %p205, %s206, %s207
    %p211 = pneg %p205
    %p212 = scmp.eq.s32.totalorder %s18, 1
    %p213 = por %p211, %p212
    %p214 = scmp.ne.s32.totalorder %s206, %s209
    %p215 = scmp.eq.s32.totalorder %s18, 0
    %p216 = por %p214, %p215
    %p217 = scmp.ne.s32.totalorder %s206, %s209
    %p218 = scmp.eq.s32.totalorder %s23, 1
    %p219 = por %p217, %p218
    %p220 = scmp.ne.s32.totalorder %s209, %s210
    %p221 = scmp.eq.s32.totalorder %s23, 0
    %p222 = por %p220, %p221
    %p223 = scmp.ne.s32.totalorder %s209, %s210
    %p224 = scmp.eq.s32.totalorder %s24, 1
    %p225 = por %p223, %p224
    %p227 = scmp.ne.s32.totalorder %s210, %s226
    %p228 = scmp.eq.s32.totalorder %s24, 0
    %p229 = por %p227, %p228
    %s230 = ssub.s32 %s18, %s25
    %p231 = scmp.eq.s32.totalorder %s230, 0
    %s233 = sadd.s32 %s232, 1
    %s234 = scalar_select %p231, %s232, %s233
    %p237 = pneg %p231
    %p238 = scmp.eq.s32.totalorder %s18, 1
    %p239 = por %p237, %p238
    %p240 = scmp.ne.s32.totalorder %s232, %s235
    %p241 = scmp.eq.s32.totalorder %s18, 0
    %p242 = por %p240, %p241
    %p243 = scmp.ne.s32.totalorder %s232, %s235
    %p244 = scmp.eq.s32.totalorder %s23, 1
    %p245 = por %p243, %p244
    %p246 = scmp.ne.s32.totalorder %s235, %s236
    %p247 = scmp.eq.s32.totalorder %s23, 0
    %p248 = por %p246, %p247
    %p249 = scmp.ne.s32.totalorder %s235, %s236
    %p250 = scmp.eq.s32.totalorder %s24, 1
    %p251 = por %p249, %p250
    %p253 = scmp.ne.s32.totalorder %s236, %s252
    %p254 = scmp.eq.s32.totalorder %s24, 0
    %p255 = por %p253, %p254
    %s256 = ssub.s32 %s18, %s25
    %p257 = scmp.eq.s32.totalorder %s256, 0
    %s259 = sadd.s32 %s258, 1
    %s260 = scalar_select %p257, %s258, %s259
    %p263 = pneg %p257
    %p264 = scmp.eq.s32.totalorder %s18, 1
    %p265 = por %p263, %p264
    %p266 = scmp.ne.s32.totalorder %s258, %s261
    %p267 = scmp.eq.s32.totalorder %s18, 0
    %p268 = por %p266, %p267
    %p269 = scmp.ne.s32.totalorder %s258, %s261
    %p270 = scmp.eq.s32.totalorder %s23, 1
    %p271 = por %p269, %p270
    %p272 = scmp.ne.s32.totalorder %s261, %s262
    %p273 = scmp.eq.s32.totalorder %s23, 0
    %p274 = por %p272, %p273
    %p275 = scmp.ne.s32.totalorder %s261, %s262
    %p276 = scmp.eq.s32.totalorder %s24, 1
    %p277 = por %p275, %p276
    %p279 = scmp.ne.s32.totalorder %s262, %s278
    %p280 = scmp.eq.s32.totalorder %s24, 0
    %p281 = por %p279, %p280
    %s282 = ssub.s32 %s18, %s25
    %p283 = scmp.eq.s32.totalorder %s282, 0
    %s285 = sadd.s32 %s284, 1
    %s286 = scalar_select %p283, %s284, %s285
    %p289 = pneg %p283
    %p290 = scmp.eq.s32.totalorder %s18, 1
    %p291 = por %p289, %p290
    %p292 = scmp.ne.s32.totalorder %s284, %s287
    %p293 = scmp.eq.s32.totalorder %s18, 0
    %p294 = por %p292, %p293
    %p295 = scmp.ne.s32.totalorder %s284, %s287
    %p296 = scmp.eq.s32.totalorder %s23, 1
    %p297 = por %p295, %p296
    %p298 = scmp.ne.s32.totalorder %s287, %s288
    %p299 = scmp.eq.s32.totalorder %s23, 0
    %p300 = por %p298, %p299
    %p301 = scmp.ne.s32.totalorder %s287, %s288
    %p302 = scmp.eq.s32.totalorder %s24, 1
    %p303 = por %p301, %p302
    %p305 = scmp.ne.s32.totalorder %s288, %s304
    %p306 = scmp.eq.s32.totalorder %s24, 0
    %p307 = por %p305, %p306
    %p308 = scmp.le.s32.totalorder 1, %s18
    %p309 = scmp.lt.s32.totalorder %s18, 3
    %p310 = pnand %p308, %p309
    %p311 = pneg %p310
    // Predicated region
    $region9: #{tpu_custom_call.1} parent=5 // pred_check
      _
    $region10: #{tpu_custom_call.1} parent=5 // pred_check_branch
      %313 = sbr.rel (%p310) target = $region12
    $region11: #{tpu_custom_call.1} parent=5 // pred_region
      %s314 = ssub.s32 %s18, 1
      // Predicated region
      $region13: #{tpu_custom_call.1} parent=11 // pred_check
        %p315 = pneg %p91
      $region14: #{tpu_custom_call.1} parent=11 // pred_check_branch
        %317 = sbr.rel (%p315) target = $region16
      $region15: #{tpu_custom_call.1} parent=11 // pred_region
        _
      $region16: #{tpu_custom_call.1} parent=11 // pred_fallthru
        _
      // Predicated region
      $region17: #{tpu_custom_call.1} parent=11 // pred_check
        %p318 = pneg %p112
      $region18: #{tpu_custom_call.1} parent=11 // pred_check_branch
        %320 = sbr.rel (%p318) target = $region20
      $region19: #{tpu_custom_call.1} parent=11 // pred_region
        _
      $region20: #{tpu_custom_call.1} parent=11 // pred_fallthru
        _
      // Predicated region
      $region21: #{tpu_custom_call.1} parent=11 // pred_check
        %p321 = pneg %p133
      $region22: #{tpu_custom_call.1} parent=11 // pred_check_branch
        %323 = sbr.rel (%p321) target = $region24
      $region23: #{tpu_custom_call.1} parent=11 // pred_region
        _
      $region24: #{tpu_custom_call.1} parent=11 // pred_fallthru
        _
      // Predicated region
      $region25: #{tpu_custom_call.1} parent=11 // pred_check
        %p324 = pneg %p154
      $region26: #{tpu_custom_call.1} parent=11 // pred_check_branch
        %326 = sbr.rel (%p324) target = $region28
      $region27: #{tpu_custom_call.1} parent=11 // pred_region
        _
      $region28: #{tpu_custom_call.1} parent=11 // pred_fallthru
        _
      // Predicated region
      $region29: #{tpu_custom_call.1} parent=11 // pred_check
        %p327 = pneg %p175
      $region30: #{tpu_custom_call.1} parent=11 // pred_check_branch
        %329 = sbr.rel (%p327) target = $region32
      $region31: #{tpu_custom_call.1} parent=11 // pred_region
        _
      $region32: #{tpu_custom_call.1} parent=11 // pred_fallthru
        _
      // Predicated region
      $region33: #{tpu_custom_call.1} parent=11 // pred_check
        %p330 = pneg %p196
      $region34: #{tpu_custom_call.1} parent=11 // pred_check_branch
        %332 = sbr.rel (%p330) target = $region36
      $region35: #{tpu_custom_call.1} parent=11 // pred_region
        _
      $region36: #{tpu_custom_call.1} parent=11 // pred_fallthru
        _
    $region12: #{tpu_custom_call.1} parent=5 // pred_fallthru
      _
    %p333 = scmp.lt.s32.totalorder %s18, 2
    // Predicated region
    $region37: #{tpu_custom_call.1} parent=5 // pred_check
      %p334 = pneg %p333
    $region38: #{tpu_custom_call.1} parent=5 // pred_check_branch
      %336 = sbr.rel (%p334) target = $region40
    $region39: #{tpu_custom_call.1} parent=5 // pred_region
      // Predicated region
      $region41: #{tpu_custom_call.1} parent=39 // pred_check
        %p337 = pneg %p38
      $region42: #{tpu_custom_call.1} parent=39 // pred_check_branch
        %339 = sbr.rel (%p337) target = $region44
      $region43: #{tpu_custom_call.1} parent=39 // pred_region
        %p340 = scmp.lt.s32.totalorder %s18, 1
        %s341 = scalar_select %p340, %s18, 1
        %s342 = smul.addr %s341, 32
        %s343 = smul.addr %s342, 8
        %s344 = scalar_lea.vmem %s0, %s343
      $region44: #{tpu_custom_call.1} parent=39 // pred_fallthru
        _
      // Predicated region
      $region45: #{tpu_custom_call.1} parent=39 // pred_check
        %p345 = pneg %p64
      $region46: #{tpu_custom_call.1} parent=39 // pred_check_branch
        %347 = sbr.rel (%p345) target = $region48
      $region47: #{tpu_custom_call.1} parent=39 // pred_region
        %p348 = scmp.lt.s32.totalorder %s18, 1
        %s349 = scalar_select %p348, %s18, 1
        %s350 = smul.addr %s349, 16
        %s351 = smul.addr %s350, 8
        %s352 = scalar_lea.vmem %s1, %s351
      $region48: #{tpu_custom_call.1} parent=39 // pred_fallthru
        _
    $region40: #{tpu_custom_call.1} parent=5 // pred_fallthru
      _
    %p353 = scmp.le.s32.totalorder 1, %s18
    %p354 = scmp.lt.s32.totalorder %s18, 3
    %p355 = pnand %p353, %p354
    %p356 = pneg %p355
    // Predicated region
    $region49: #{tpu_custom_call.1} parent=5 // pred_check
      _
    $region50: #{tpu_custom_call.1} parent=5 // pred_check_branch
      %358 = sbr.rel (%p355) target = $region52
    $region51: #{tpu_custom_call.1} parent=5 // pred_region
      %s359 = ssub.s32 %s18, 1
      %p360 = scmp.lt.s32.totalorder %s23, 1
      %s361 = scalar_select %p360, %s23, 1
      %s362 = smul.addr %s361, 32
      %s363 = smul.addr %s362, 8
      %s364 = scalar_lea.vmem %s0, %s363
      %p365 = pneg %p44
      %p366 = pneg %p41
      %p367 = scmp.lt.s32.totalorder %s23, 1
      %s368 = scalar_select %p367, %s23, 1
      %s369 = smul.addr %s368, 16
      %s370 = smul.addr %s369, 8
      %s371 = scalar_lea.vmem %s1, %s370
      %p372 = pneg %p70
      %p373 = pneg %p67
      %p374 = pneg %p91
      %p375 = pneg %p88
      %p376 = pneg %p112
      %p377 = pneg %p109
      %p378 = pneg %p133
      %p379 = pneg %p130
      %p380 = pneg %p154
      %p381 = pneg %p151
      %p382 = pneg %p175
      %p383 = pneg %p172
      %p384 = pneg %p196
      %p385 = pneg %p193
      %p386 = pneg %p222
      %p387 = pneg %p219
      %p388 = scmp.lt.s32.totalorder %s23, 1
      %s389 = scalar_select %p388, %s23, 1
      %s390 = smul.addr %s389, 128
      %s391 = smul.addr %s390, 4
      %s392 = scalar_lea.vmem %s8, %s391
      %p393 = pneg %p248
      %p394 = pneg %p245
      %p395 = scmp.lt.s32.totalorder %s23, 1
      %s396 = scalar_select %p395, %s23, 1
      %s397 = smul.addr %s396, 128
      %s398 = smul.addr %s397, 4
      %s399 = scalar_lea.vmem %s9, %s398
      %p400 = pneg %p274
      %p401 = pneg %p271
      %p402 = scmp.lt.s32.totalorder %s23, 1
      %s403 = scalar_select %p402, %s23, 1
      %s404 = smul.addr %s403, 64
      %s405 = smul.addr %s404, 4
      %s406 = scalar_lea.vmem %s10, %s405
      %p407 = pneg %p300
      %p408 = pneg %p297
      %p409 = scmp.lt.s32.totalorder %s23, 1
      %s410 = scalar_select %p409, %s23, 1
      %s411 = smul.addr %s410, 64
      %s412 = smul.addr %s411, 4
      %s413 = scalar_lea.vmem %s11, %s412
      %p414 = scmp.lt.s32.totalorder %s23, 1
      %s415 = scalar_select %p414, %s23, 1
      %s416 = smul.addr %s415, 32
      %s417 = smul.addr %s416, 8
      %s418 = scalar_lea.vmem %s0, %s417
      %p419 = scmp.lt.s32.totalorder %s23, 1
      %s420 = scalar_select %p419, %s23, 1
      %s421 = smul.addr %s420, 16
      %s422 = smul.addr %s421, 8
      %s423 = scalar_lea.vmem %s1, %s422
      %p424 = scmp.lt.s32.totalorder %s23, 1
      %s425 = scalar_select %p424, %s23, 1
      %s426 = smul.addr %s425, 128
      %s427 = smul.addr %s426, 4
      %s428 = scalar_lea.vmem %s8, %s427
      %p429 = scmp.lt.s32.totalorder %s23, 1
      %s430 = scalar_select %p429, %s23, 1
      %s431 = smul.addr %s430, 128
      %s432 = smul.addr %s431, 4
      %s433 = scalar_lea.vmem %s9, %s432
      %p434 = scmp.lt.s32.totalorder %s23, 1
      %s435 = scalar_select %p434, %s23, 1
      %s436 = smul.addr %s435, 64
      %s437 = smul.addr %s436, 4
      %s438 = scalar_lea.vmem %s10, %s437
      %p439 = scmp.lt.s32.totalorder %s23, 1
      %s440 = scalar_select %p439, %s23, 1
      %s441 = smul.addr %s440, 64
      %s442 = smul.addr %s441, 4
      %s443 = scalar_lea.vmem %s11, %s442
      %v445 = vld [vmem:[%s418] sm:$0xff]
      %v446 = vld [vmem:[%s418 + $0x8] sm:$0xff]
      %v447 = vld [vmem:[%s418 + $0x10] sm:$0xff]
      %v448 = vld [vmem:[%s418 + $0x18] sm:$0xff]
      %v449 = vld [vmem:[%s418 + $0x20] sm:$0xff]
      %v450 = vld [vmem:[%s418 + $0x28] sm:$0xff]
      %v451 = vld [vmem:[%s418 + $0x30] sm:$0xff]
      %v452 = vld [vmem:[%s418 + $0x38] sm:$0xff]
      %v453 = vld [vmem:[%s418 + $0x40] sm:$0xff]
      %v454 = vld [vmem:[%s418 + $0x48] sm:$0xff]
      %v455 = vld [vmem:[%s418 + $0x50] sm:$0xff]
      %v456 = vld [vmem:[%s418 + $0x58] sm:$0xff]
      %v457 = vld [vmem:[%s418 + $0x60] sm:$0xff]
      %v458 = vld [vmem:[%s418 + $0x68] sm:$0xff]
      %v459 = vld [vmem:[%s418 + $0x70] sm:$0xff]
      %v460 = vld [vmem:[%s418 + $0x78] sm:$0xff]
      %v461 = vld [vmem:[%s418 + $0x80] sm:$0xff]
      %v462 = vld [vmem:[%s418 + $0x88] sm:$0xff]
      %v463 = vld [vmem:[%s418 + $0x90] sm:$0xff]
      %v464 = vld [vmem:[%s418 + $0x98] sm:$0xff]
      %v465 = vld [vmem:[%s418 + $0xa0] sm:$0xff]
      %v466 = vld [vmem:[%s418 + $0xa8] sm:$0xff]
      %v467 = vld [vmem:[%s418 + $0xb0] sm:$0xff]
      %v468 = vld [vmem:[%s418 + $0xb8] sm:$0xff]
      %v469 = vld [vmem:[%s418 + $0xc0] sm:$0xff]
      %v470 = vld [vmem:[%s418 + $0xc8] sm:$0xff]
      %v471 = vld [vmem:[%s418 + $0xd0] sm:$0xff]
      %v472 = vld [vmem:[%s418 + $0xd8] sm:$0xff]
      %v473 = vld [vmem:[%s418 + $0xe0] sm:$0xff]
      %v474 = vld [vmem:[%s418 + $0xe8] sm:$0xff]
      %v475 = vld [vmem:[%s418 + $0xf0] sm:$0xff]
      %v476 = vld [vmem:[%s418 + $0xf8] sm:$0xff]
      %v477 = vld [vmem:[%s2] sm:$0x1]
      %v478 = vld [vmem:[%s3] sm:$0x1]
      %479 = vadd.xlane.f32.xlu0 %v445
      %v480 = vpop.xlane.xlu0 %479
      %481 = vadd.xlane.f32.xlu0 %v446
      %v482 = vpop.xlane.xlu0 %481
      %483 = vadd.xlane.f32.xlu0 %v447
      %v484 = vpop.xlane.xlu0 %483
      %485 = vadd.xlane.f32.xlu0 %v448
      %v486 = vpop.xlane.xlu0 %485
      %487 = vadd.xlane.f32.xlu0 %v449
      %v488 = vpop.xlane.xlu0 %487
      %489 = vadd.xlane.f32.xlu0 %v450
      %v490 = vpop.xlane.xlu0 %489
      %491 = vadd.xlane.f32.xlu0 %v451
      %v492 = vpop.xlane.xlu0 %491
      %493 = vadd.xlane.f32.xlu0 %v452
      %v494 = vpop.xlane.xlu0 %493
      %495 = vadd.xlane.f32.xlu0 %v453
      %v496 = vpop.xlane.xlu0 %495
      %497 = vadd.xlane.f32.xlu0 %v454
      %v498 = vpop.xlane.xlu0 %497
      %499 = vadd.xlane.f32.xlu0 %v455
      %v500 = vpop.xlane.xlu0 %499
      %501 = vadd.xlane.f32.xlu0 %v456
      %v502 = vpop.xlane.xlu0 %501
      %503 = vadd.xlane.f32.xlu0 %v457
      %v504 = vpop.xlane.xlu0 %503
      %505 = vadd.xlane.f32.xlu0 %v458
      %v506 = vpop.xlane.xlu0 %505
      %507 = vadd.xlane.f32.xlu0 %v459
      %v508 = vpop.xlane.xlu0 %507
      %509 = vadd.xlane.f32.xlu0 %v460
      %v510 = vpop.xlane.xlu0 %509
      %511 = vadd.xlane.f32.xlu0 %v461
      %v512 = vpop.xlane.xlu0 %511
      %513 = vadd.xlane.f32.xlu0 %v462
      %v514 = vpop.xlane.xlu0 %513
      %515 = vadd.xlane.f32.xlu0 %v463
      %v516 = vpop.xlane.xlu0 %515
      %517 = vadd.xlane.f32.xlu0 %v464
      %v518 = vpop.xlane.xlu0 %517
      %519 = vadd.xlane.f32.xlu0 %v465
      %v520 = vpop.xlane.xlu0 %519
      %521 = vadd.xlane.f32.xlu0 %v466
      %v522 = vpop.xlane.xlu0 %521
      %523 = vadd.xlane.f32.xlu0 %v467
      %v524 = vpop.xlane.xlu0 %523
      %525 = vadd.xlane.f32.xlu0 %v468
      %v526 = vpop.xlane.xlu0 %525
      %527 = vadd.xlane.f32.xlu0 %v469
      %v528 = vpop.xlane.xlu0 %527
      %529 = vadd.xlane.f32.xlu0 %v470
      %v530 = vpop.xlane.xlu0 %529
      %531 = vadd.xlane.f32.xlu0 %v471
      %v532 = vpop.xlane.xlu0 %531
      %533 = vadd.xlane.f32.xlu0 %v472
      %v534 = vpop.xlane.xlu0 %533
      %535 = vadd.xlane.f32.xlu0 %v473
      %v536 = vpop.xlane.xlu0 %535
      %537 = vadd.xlane.f32.xlu0 %v474
      %v538 = vpop.xlane.xlu0 %537
      %539 = vadd.xlane.f32.xlu0 %v475
      %v540 = vpop.xlane.xlu0 %539
      %541 = vadd.xlane.f32.xlu0 %v476
      %v542 = vpop.xlane.xlu0 %541
      %v543 = vrcp.pop 128.0
      %v544 = vmul.f32 128.0, %v543
      %v545 = vsub.f32 1.0, %v544
      %v546 = vmul.f32 %v543, %v545
      %v547 = vadd.f32 %v543, %v546
      %vm548 = vweird.f32 %v543
      %v549 = vsel %vm548, %v543, %v547
      %v550 = vmul.f32 %v480, %v549
      %v551 = vmul.f32 %v482, %v549
      %v552 = vmul.f32 %v484, %v549
      %v553 = vmul.f32 %v486, %v549
      %v554 = vmul.f32 %v488, %v549
      %v555 = vmul.f32 %v490, %v549
      %v556 = vmul.f32 %v492, %v549
      %v557 = vmul.f32 %v494, %v549
      %v558 = vmul.f32 %v496, %v549
      %v559 = vmul.f32 %v498, %v549
      %v560 = vmul.f32 %v500, %v549
      %v561 = vmul.f32 %v502, %v549
      %v562 = vmul.f32 %v504, %v549
      %v563 = vmul.f32 %v506, %v549
      %v564 = vmul.f32 %v508, %v549
      %v565 = vmul.f32 %v510, %v549
      %v566 = vmul.f32 %v512, %v549
      %v567 = vmul.f32 %v514, %v549
      %v568 = vmul.f32 %v516, %v549
      %v569 = vmul.f32 %v518, %v549
      %v570 = vmul.f32 %v520, %v549
      %v571 = vmul.f32 %v522, %v549
      %v572 = vmul.f32 %v524, %v549
      %v573 = vmul.f32 %v526, %v549
      %v574 = vmul.f32 %v528, %v549
      %v575 = vmul.f32 %v530, %v549
      %v576 = vmul.f32 %v532, %v549
      %v577 = vmul.f32 %v534, %v549
      %v578 = vmul.f32 %v536, %v549
      %v579 = vmul.f32 %v538, %v549
      %v580 = vmul.f32 %v540, %v549
      %v581 = vmul.f32 %v542, %v549
      %v582 = vsub.f32 %v445, %v550
      %v583 = vsub.f32 %v446, %v551
      %v584 = vsub.f32 %v447, %v552
      %v585 = vsub.f32 %v448, %v553
      %v586 = vsub.f32 %v449, %v554
      %v587 = vsub.f32 %v450, %v555
      %v588 = vsub.f32 %v451, %v556
      %v589 = vsub.f32 %v452, %v557
      %v590 = vsub.f32 %v453, %v558
      %v591 = vsub.f32 %v454, %v559
      %v592 = vsub.f32 %v455, %v560
      %v593 = vsub.f32 %v456, %v561
      %v594 = vsub.f32 %v457, %v562
      %v595 = vsub.f32 %v458, %v563
      %v596 = vsub.f32 %v459, %v564
      %v597 = vsub.f32 %v460, %v565
      %v598 = vsub.f32 %v461, %v566
      %v599 = vsub.f32 %v462, %v567
      %v600 = vsub.f32 %v463, %v568
      %v601 = vsub.f32 %v464, %v569
      %v602 = vsub.f32 %v465, %v570
      %v603 = vsub.f32 %v466, %v571
      %v604 = vsub.f32 %v467, %v572
      %v605 = vsub.f32 %v468, %v573
      %v606 = vsub.f32 %v469, %v574
      %v607 = vsub.f32 %v470, %v575
      %v608 = vsub.f32 %v471, %v576
      %v609 = vsub.f32 %v472, %v577
      %v610 = vsub.f32 %v473, %v578
      %v611 = vsub.f32 %v474, %v579
      %v612 = vsub.f32 %v475, %v580
      %v613 = vsub.f32 %v476, %v581
      %v614 = vmul.f32 %v582, %v582
      %v615 = vmul.f32 %v583, %v583
      %v616 = vmul.f32 %v584, %v584
      %v617 = vmul.f32 %v585, %v585
      %v618 = vmul.f32 %v586, %v586
      %v619 = vmul.f32 %v587, %v587
      %v620 = vmul.f32 %v588, %v588
      %v621 = vmul.f32 %v589, %v589
      %v622 = vmul.f32 %v590, %v590
      %v623 = vmul.f32 %v591, %v591
      %v624 = vmul.f32 %v592, %v592
      %v625 = vmul.f32 %v593, %v593
      %v626 = vmul.f32 %v594, %v594
      %v627 = vmul.f32 %v595, %v595
      %v628 = vmul.f32 %v596, %v596
      %v629 = vmul.f32 %v597, %v597
      %v630 = vmul.f32 %v598, %v598
      %v631 = vmul.f32 %v599, %v599
      %v632 = vmul.f32 %v600, %v600
      %v633 = vmul.f32 %v601, %v601
      %v634 = vmul.f32 %v602, %v602
      %v635 = vmul.f32 %v603, %v603
      %v636 = vmul.f32 %v604, %v604
      %v637 = vmul.f32 %v605, %v605
      %v638 = vmul.f32 %v606, %v606
      %v639 = vmul.f32 %v607, %v607
      %v640 = vmul.f32 %v608, %v608
      %v641 = vmul.f32 %v609, %v609
      %v642 = vmul.f32 %v610, %v610
      %v643 = vmul.f32 %v611, %v611
      %v644 = vmul.f32 %v612, %v612
      %v645 = vmul.f32 %v613, %v613
      %646 = vadd.xlane.f32.xlu0 %v614
      %v647 = vpop.xlane.xlu0 %646
      %648 = vadd.xlane.f32.xlu0 %v615
      %v649 = vpop.xlane.xlu0 %648
      %650 = vadd.xlane.f32.xlu0 %v616
      %v651 = vpop.xlane.xlu0 %650
      %652 = vadd.xlane.f32.xlu0 %v617
      %v653 = vpop.xlane.xlu0 %652
      %654 = vadd.xlane.f32.xlu0 %v618
      %v655 = vpop.xlane.xlu0 %654
      %656 = vadd.xlane.f32.xlu0 %v619
      %v657 = vpop.xlane.xlu0 %656
      %658 = vadd.xlane.f32.xlu0 %v620
      %v659 = vpop.xlane.xlu0 %658
      %660 = vadd.xlane.f32.xlu0 %v621
      %v661 = vpop.xlane.xlu0 %660
      %662 = vadd.xlane.f32.xlu0 %v622
      %v663 = vpop.xlane.xlu0 %662
      %664 = vadd.xlane.f32.xlu0 %v623
      %v665 = vpop.xlane.xlu0 %664
      %666 = vadd.xlane.f32.xlu0 %v624
      %v667 = vpop.xlane.xlu0 %666
      %668 = vadd.xlane.f32.xlu0 %v625
      %v669 = vpop.xlane.xlu0 %668
      %670 = vadd.xlane.f32.xlu0 %v626
      %v671 = vpop.xlane.xlu0 %670
      %672 = vadd.xlane.f32.xlu0 %v627
      %v673 = vpop.xlane.xlu0 %672
      %674 = vadd.xlane.f32.xlu0 %v628
      %v675 = vpop.xlane.xlu0 %674
      %676 = vadd.xlane.f32.xlu0 %v629
      %v677 = vpop.xlane.xlu0 %676
      %678 = vadd.xlane.f32.xlu0 %v630
      %v679 = vpop.xlane.xlu0 %678
      %680 = vadd.xlane.f32.xlu0 %v631
      %v681 = vpop.xlane.xlu0 %680
      %682 = vadd.xlane.f32.xlu0 %v632
      %v683 = vpop.xlane.xlu0 %682
      %684 = vadd.xlane.f32.xlu0 %v633
      %v685 = vpop.xlane.xlu0 %684
      %686 = vadd.xlane.f32.xlu0 %v634
      %v687 = vpop.xlane.xlu0 %686
      %688 = vadd.xlane.f32.xlu0 %v635
      %v689 = vpop.xlane.xlu0 %688
      %690 = vadd.xlane.f32.xlu0 %v636
      %v691 = vpop.xlane.xlu0 %690
      %692 = vadd.xlane.f32.xlu0 %v637
      %v693 = vpop.xlane.xlu0 %692
      %694 = vadd.xlane.f32.xlu0 %v638
      %v695 = vpop.xlane.xlu0 %694
      %696 = vadd.xlane.f32.xlu0 %v639
      %v697 = vpop.xlane.xlu0 %696
      %698 = vadd.xlane.f32.xlu0 %v640
      %v699 = vpop.xlane.xlu0 %698
      %700 = vadd.xlane.f32.xlu0 %v641
      %v701 = vpop.xlane.xlu0 %700
      %702 = vadd.xlane.f32.xlu0 %v642
      %v703 = vpop.xlane.xlu0 %702
      %704 = vadd.xlane.f32.xlu0 %v643
      %v705 = vpop.xlane.xlu0 %704
      %706 = vadd.xlane.f32.xlu0 %v644
      %v707 = vpop.xlane.xlu0 %706
      %708 = vadd.xlane.f32.xlu0 %v645
      %v709 = vpop.xlane.xlu0 %708
      %v710 = vmul.f32 %v647, %v549
      %v711 = vmul.f32 %v649, %v549
      %v712 = vmul.f32 %v651, %v549
      %v713 = vmul.f32 %v653, %v549
      %v714 = vmul.f32 %v655, %v549
      %v715 = vmul.f32 %v657, %v549
      %v716 = vmul.f32 %v659, %v549
      %v717 = vmul.f32 %v661, %v549
      %v718 = vmul.f32 %v663, %v549
      %v719 = vmul.f32 %v665, %v549
      %v720 = vmul.f32 %v667, %v549
      %v721 = vmul.f32 %v669, %v549
      %v722 = vmul.f32 %v671, %v549
      %v723 = vmul.f32 %v673, %v549
      %v724 = vmul.f32 %v675, %v549
      %v725 = vmul.f32 %v677, %v549
      %v726 = vmul.f32 %v679, %v549
      %v727 = vmul.f32 %v681, %v549
      %v728 = vmul.f32 %v683, %v549
      %v729 = vmul.f32 %v685, %v549
      %v730 = vmul.f32 %v687, %v549
      %v731 = vmul.f32 %v689, %v549
      %v732 = vmul.f32 %v691, %v549
      %v733 = vmul.f32 %v693, %v549
      %v734 = vmul.f32 %v695, %v549
      %v735 = vmul.f32 %v697, %v549
      %v736 = vmul.f32 %v699, %v549
      %v737 = vmul.f32 %v701, %v549
      %v738 = vmul.f32 %v703, %v549
      %v739 = vmul.f32 %v705, %v549
      %v740 = vmul.f32 %v707, %v549
      %v741 = vmul.f32 %v709, %v549
      %v742 = vadd.f32 %v710, 1e-05
      %v743 = vadd.f32 %v711, 1e-05
      %v744 = vadd.f32 %v712, 1e-05
      %v745 = vadd.f32 %v713, 1e-05
      %v746 = vadd.f32 %v714, 1e-05
      %v747 = vadd.f32 %v715, 1e-05
      %v748 = vadd.f32 %v716, 1e-05
      %v749 = vadd.f32 %v717, 1e-05
      %v750 = vadd.f32 %v718, 1e-05
      %v751 = vadd.f32 %v719, 1e-05
      %v752 = vadd.f32 %v720, 1e-05
      %v753 = vadd.f32 %v721, 1e-05
      %v754 = vadd.f32 %v722, 1e-05
      %v755 = vadd.f32 %v723, 1e-05
      %v756 = vadd.f32 %v724, 1e-05
      %v757 = vadd.f32 %v725, 1e-05
      %v758 = vadd.f32 %v726, 1e-05
      %v759 = vadd.f32 %v727, 1e-05
      %v760 = vadd.f32 %v728, 1e-05
      %v761 = vadd.f32 %v729, 1e-05
      %v762 = vadd.f32 %v730, 1e-05
      %v763 = vadd.f32 %v731, 1e-05
      %v764 = vadd.f32 %v732, 1e-05
      %v765 = vadd.f32 %v733, 1e-05
      %v766 = vadd.f32 %v734, 1e-05
      %v767 = vadd.f32 %v735, 1e-05
      %v768 = vadd.f32 %v736, 1e-05
      %v769 = vadd.f32 %v737, 1e-05
      %v770 = vadd.f32 %v738, 1e-05
      %v771 = vadd.f32 %v739, 1e-05
      %v772 = vadd.f32 %v740, 1e-05
      %v773 = vadd.f32 %v741, 1e-05
      %v774 = vrsqrt.pop %v742
      %v775 = vmul.f32 %v774, %v742
      %v776 = vmul.f32 %v775, %v774
      %v777 = vmul.f32 0.5, %v776
      %v778 = vsub.f32 1.5, %v777
      %v779 = vmul.f32 %v774, %v778
      %vm780 = vweird.f32 %v742
      %vm781 = vweird.f32 %v774
      %vm782 = vmor %vm780, %vm781
      %v783 = vsel %vm782, %v774, %v779
      %v784 = vrsqrt.pop %v743
      %v785 = vmul.f32 %v784, %v743
      %v786 = vmul.f32 %v785, %v784
      %v787 = vmul.f32 0.5, %v786
      %v788 = vsub.f32 1.5, %v787
      %v789 = vmul.f32 %v784, %v788
      %vm790 = vweird.f32 %v743
      %vm791 = vweird.f32 %v784
      %vm792 = vmor %vm790, %vm791
      %v793 = vsel %vm792, %v784, %v789
      %v794 = vrsqrt.pop %v744
      %v795 = vmul.f32 %v794, %v744
      %v796 = vmul.f32 %v795, %v794
      %v797 = vmul.f32 0.5, %v796
      %v798 = vsub.f32 1.5, %v797
      %v799 = vmul.f32 %v794, %v798
      %vm800 = vweird.f32 %v744
      %vm801 = vweird.f32 %v794
      %vm802 = vmor %vm800, %vm801
      %v803 = vsel %vm802, %v794, %v799
      %v804 = vrsqrt.pop %v745
      %v805 = vmul.f32 %v804, %v745
      %v806 = vmul.f32 %v805, %v804
      %v807 = vmul.f32 0.5, %v806
      %v808 = vsub.f32 1.5, %v807
      %v809 = vmul.f32 %v804, %v808
      %vm810 = vweird.f32 %v745
      %vm811 = vweird.f32 %v804
      %vm812 = vmor %vm810, %vm811
      %v813 = vsel %vm812, %v804, %v809
      %v814 = vrsqrt.pop %v746
      %v815 = vmul.f32 %v814, %v746
      %v816 = vmul.f32 %v815, %v814
      %v817 = vmul.f32 0.5, %v816
      %v818 = vsub.f32 1.5, %v817
      %v819 = vmul.f32 %v814, %v818
      %vm820 = vweird.f32 %v746
      %vm821 = vweird.f32 %v814
      %vm822 = vmor %vm820, %vm821
      %v823 = vsel %vm822, %v814, %v819
      %v824 = vrsqrt.pop %v747
      %v825 = vmul.f32 %v824, %v747
      %v826 = vmul.f32 %v825, %v824
      %v827 = vmul.f32 0.5, %v826
      %v828 = vsub.f32 1.5, %v827
      %v829 = vmul.f32 %v824, %v828
      %vm830 = vweird.f32 %v747
      %vm831 = vweird.f32 %v824
      %vm832 = vmor %vm830, %vm831
      %v833 = vsel %vm832, %v824, %v829
      %v834 = vrsqrt.pop %v748
      %v835 = vmul.f32 %v834, %v748
      %v836 = vmul.f32 %v835, %v834
      %v837 = vmul.f32 0.5, %v836
      %v838 = vsub.f32 1.5, %v837
      %v839 = vmul.f32 %v834, %v838
      %vm840 = vweird.f32 %v748
      %vm841 = vweird.f32 %v834
      %vm842 = vmor %vm840, %vm841
      %v843 = vsel %vm842, %v834, %v839
      %v844 = vrsqrt.pop %v749
      %v845 = vmul.f32 %v844, %v749
      %v846 = vmul.f32 %v845, %v844
      %v847 = vmul.f32 0.5, %v846
      %v848 = vsub.f32 1.5, %v847
      %v849 = vmul.f32 %v844, %v848
      %vm850 = vweird.f32 %v749
      %vm851 = vweird.f32 %v844
      %vm852 = vmor %vm850, %vm851
      %v853 = vsel %vm852, %v844, %v849
      %v854 = vrsqrt.pop %v750
      %v855 = vmul.f32 %v854, %v750
      %v856 = vmul.f32 %v855, %v854
      %v857 = vmul.f32 0.5, %v856
      %v858 = vsub.f32 1.5, %v857
      %v859 = vmul.f32 %v854, %v858
      %vm860 = vweird.f32 %v750
      %vm861 = vweird.f32 %v854
      %vm862 = vmor %vm860, %vm861
      %v863 = vsel %vm862, %v854, %v859
      %v864 = vrsqrt.pop %v751
      %v865 = vmul.f32 %v864, %v751
      %v866 = vmul.f32 %v865, %v864
      %v867 = vmul.f32 0.5, %v866
      %v868 = vsub.f32 1.5, %v867
      %v869 = vmul.f32 %v864, %v868
      %vm870 = vweird.f32 %v751
      %vm871 = vweird.f32 %v864
      %vm872 = vmor %vm870, %vm871
      %v873 = vsel %vm872, %v864, %v869
      %v874 = vrsqrt.pop %v752
      %v875 = vmul.f32 %v874, %v752
      %v876 = vmul.f32 %v875, %v874
      %v877 = vmul.f32 0.5, %v876
      %v878 = vsub.f32 1.5, %v877
      %v879 = vmul.f32 %v874, %v878
      %vm880 = vweird.f32 %v752
      %vm881 = vweird.f32 %v874
      %vm882 = vmor %vm880, %vm881
      %v883 = vsel %vm882, %v874, %v879
      %v884 = vrsqrt.pop %v753
      %v885 = vmul.f32 %v884, %v753
      %v886 = vmul.f32 %v885, %v884
      %v887 = vmul.f32 0.5, %v886
      %v888 = vsub.f32 1.5, %v887
      %v889 = vmul.f32 %v884, %v888
      %vm890 = vweird.f32 %v753
      %vm891 = vweird.f32 %v884
      %vm892 = vmor %vm890, %vm891
      %v893 = vsel %vm892, %v884, %v889
      %v894 = vrsqrt.pop %v754
      %v895 = vmul.f32 %v894, %v754
      %v896 = vmul.f32 %v895, %v894
      %v897 = vmul.f32 0.5, %v896
      %v898 = vsub.f32 1.5, %v897
      %v899 = vmul.f32 %v894, %v898
      %vm900 = vweird.f32 %v754
      %vm901 = vweird.f32 %v894
      %vm902 = vmor %vm900, %vm901
      %v903 = vsel %vm902, %v894, %v899
      %v904 = vrsqrt.pop %v755
      %v905 = vmul.f32 %v904, %v755
      %v906 = vmul.f32 %v905, %v904
      %v907 = vmul.f32 0.5, %v906
      %v908 = vsub.f32 1.5, %v907
      %v909 = vmul.f32 %v904, %v908
      %vm910 = vweird.f32 %v755
      %vm911 = vweird.f32 %v904
      %vm912 = vmor %vm910, %vm911
      %v913 = vsel %vm912, %v904, %v909
      %v914 = vrsqrt.pop %v756
      %v915 = vmul.f32 %v914, %v756
      %v916 = vmul.f32 %v915, %v914
      %v917 = vmul.f32 0.5, %v916
      %v918 = vsub.f32 1.5, %v917
      %v919 = vmul.f32 %v914, %v918
      %vm920 = vweird.f32 %v756
      %vm921 = vweird.f32 %v914
      %vm922 = vmor %vm920, %vm921
      %v923 = vsel %vm922, %v914, %v919
      %v924 = vrsqrt.pop %v757
      %v925 = vmul.f32 %v924, %v757
      %v926 = vmul.f32 %v925, %v924
      %v927 = vmul.f32 0.5, %v926
      %v928 = vsub.f32 1.5, %v927
      %v929 = vmul.f32 %v924, %v928
      %vm930 = vweird.f32 %v757
      %vm931 = vweird.f32 %v924
      %vm932 = vmor %vm930, %vm931
      %v933 = vsel %vm932, %v924, %v929
      %v934 = vrsqrt.pop %v758
      %v935 = vmul.f32 %v934, %v758
      %v936 = vmul.f32 %v935, %v934
      %v937 = vmul.f32 0.5, %v936
      %v938 = vsub.f32 1.5, %v937
      %v939 = vmul.f32 %v934, %v938
      %vm940 = vweird.f32 %v758
      %vm941 = vweird.f32 %v934
      %vm942 = vmor %vm940, %vm941
      %v943 = vsel %vm942, %v934, %v939
      %v944 = vrsqrt.pop %v759
      %v945 = vmul.f32 %v944, %v759
      %v946 = vmul.f32 %v945, %v944
      %v947 = vmul.f32 0.5, %v946
      %v948 = vsub.f32 1.5, %v947
      %v949 = vmul.f32 %v944, %v948
      %vm950 = vweird.f32 %v759
      %vm951 = vweird.f32 %v944
      %vm952 = vmor %vm950, %vm951
      %v953 = vsel %vm952, %v944, %v949
      %v954 = vrsqrt.pop %v760
      %v955 = vmul.f32 %v954, %v760
      %v956 = vmul.f32 %v955, %v954
      %v957 = vmul.f32 0.5, %v956
      %v958 = vsub.f32 1.5, %v957
      %v959 = vmul.f32 %v954, %v958
      %vm960 = vweird.f32 %v760
      %vm961 = vweird.f32 %v954
      %vm962 = vmor %vm960, %vm961
      %v963 = vsel %vm962, %v954, %v959
      %v964 = vrsqrt.pop %v761
      %v965 = vmul.f32 %v964, %v761
      %v966 = vmul.f32 %v965, %v964
      %v967 = vmul.f32 0.5, %v966
      %v968 = vsub.f32 1.5, %v967
      %v969 = vmul.f32 %v964, %v968
      %vm970 = vweird.f32 %v761
      %vm971 = vweird.f32 %v964
      %vm972 = vmor %vm970, %vm971
      %v973 = vsel %vm972, %v964, %v969
      %v974 = vrsqrt.pop %v762
      %v975 = vmul.f32 %v974, %v762
      %v976 = vmul.f32 %v975, %v974
      %v977 = vmul.f32 0.5, %v976
      %v978 = vsub.f32 1.5, %v977
      %v979 = vmul.f32 %v974, %v978
      %vm980 = vweird.f32 %v762
      %vm981 = vweird.f32 %v974
      %vm982 = vmor %vm980, %vm981
      %v983 = vsel %vm982, %v974, %v979
      %v984 = vrsqrt.pop %v763
      %v985 = vmul.f32 %v984, %v763
      %v986 = vmul.f32 %v985, %v984
      %v987 = vmul.f32 0.5, %v986
      %v988 = vsub.f32 1.5, %v987
      %v989 = vmul.f32 %v984, %v988
      %vm990 = vweird.f32 %v763
      %vm991 = vweird.f32 %v984
      %vm992 = vmor %vm990, %vm991
      %v993 = vsel %vm992, %v984, %v989
      %v994 = vrsqrt.pop %v764
      %v995 = vmul.f32 %v994, %v764
      %v996 = vmul.f32 %v995, %v994
      %v997 = vmul.f32 0.5, %v996
      %v998 = vsub.f32 1.5, %v997
      %v999 = vmul.f32 %v994, %v998
      %vm1000 = vweird.f32 %v764
      %vm1001 = vweird.f32 %v994
      %vm1002 = vmor %vm1000, %vm1001
      %v1003 = vsel %vm1002, %v994, %v999
      %v1004 = vrsqrt.pop %v765
      %v1005 = vmul.f32 %v1004, %v765
      %v1006 = vmul.f32 %v1005, %v1004
      %v1007 = vmul.f32 0.5, %v1006
      %v1008 = vsub.f32 1.5, %v1007
      %v1009 = vmul.f32 %v1004, %v1008
      %vm1010 = vweird.f32 %v765
      %vm1011 = vweird.f32 %v1004
      %vm1012 = vmor %vm1010, %vm1011
      %v1013 = vsel %vm1012, %v1004, %v1009
      %v1014 = vrsqrt.pop %v766
      %v1015 = vmul.f32 %v1014, %v766
      %v1016 = vmul.f32 %v1015, %v1014
      %v1017 = vmul.f32 0.5, %v1016
      %v1018 = vsub.f32 1.5, %v1017
      %v1019 = vmul.f32 %v1014, %v1018
      %vm1020 = vweird.f32 %v766
      %vm1021 = vweird.f32 %v1014
      %vm1022 = vmor %vm1020, %vm1021
      %v1023 = vsel %vm1022, %v1014, %v1019
      %v1024 = vrsqrt.pop %v767
      %v1025 = vmul.f32 %v1024, %v767
      %v1026 = vmul.f32 %v1025, %v1024
      %v1027 = vmul.f32 0.5, %v1026
      %v1028 = vsub.f32 1.5, %v1027
      %v1029 = vmul.f32 %v1024, %v1028
      %vm1030 = vweird.f32 %v767
      %vm1031 = vweird.f32 %v1024
      %vm1032 = vmor %vm1030, %vm1031
      %v1033 = vsel %vm1032, %v1024, %v1029
      %v1034 = vrsqrt.pop %v768
      %v1035 = vmul.f32 %v1034, %v768
      %v1036 = vmul.f32 %v1035, %v1034
      %v1037 = vmul.f32 0.5, %v1036
      %v1038 = vsub.f32 1.5, %v1037
      %v1039 = vmul.f32 %v1034, %v1038
      %vm1040 = vweird.f32 %v768
      %vm1041 = vweird.f32 %v1034
      %vm1042 = vmor %vm1040, %vm1041
      %v1043 = vsel %vm1042, %v1034, %v1039
      %v1044 = vrsqrt.pop %v769
      %v1045 = vmul.f32 %v1044, %v769
      %v1046 = vmul.f32 %v1045, %v1044
      %v1047 = vmul.f32 0.5, %v1046
      %v1048 = vsub.f32 1.5, %v1047
      %v1049 = vmul.f32 %v1044, %v1048
      %vm1050 = vweird.f32 %v769
      %vm1051 = vweird.f32 %v1044
      %vm1052 = vmor %vm1050, %vm1051
      %v1053 = vsel %vm1052, %v1044, %v1049
      %v1054 = vrsqrt.pop %v770
      %v1055 = vmul.f32 %v1054, %v770
      %v1056 = vmul.f32 %v1055, %v1054
      %v1057 = vmul.f32 0.5, %v1056
      %v1058 = vsub.f32 1.5, %v1057
      %v1059 = vmul.f32 %v1054, %v1058
      %vm1060 = vweird.f32 %v770
      %vm1061 = vweird.f32 %v1054
      %vm1062 = vmor %vm1060, %vm1061
      %v1063 = vsel %vm1062, %v1054, %v1059
      %v1064 = vrsqrt.pop %v771
      %v1065 = vmul.f32 %v1064, %v771
      %v1066 = vmul.f32 %v1065, %v1064
      %v1067 = vmul.f32 0.5, %v1066
      %v1068 = vsub.f32 1.5, %v1067
      %v1069 = vmul.f32 %v1064, %v1068
      %vm1070 = vweird.f32 %v771
      %vm1071 = vweird.f32 %v1064
      %vm1072 = vmor %vm1070, %vm1071
      %v1073 = vsel %vm1072, %v1064, %v1069
      %v1074 = vrsqrt.pop %v772
      %v1075 = vmul.f32 %v1074, %v772
      %v1076 = vmul.f32 %v1075, %v1074
      %v1077 = vmul.f32 0.5, %v1076
      %v1078 = vsub.f32 1.5, %v1077
      %v1079 = vmul.f32 %v1074, %v1078
      %vm1080 = vweird.f32 %v772
      %vm1081 = vweird.f32 %v1074
      %vm1082 = vmor %vm1080, %vm1081
      %v1083 = vsel %vm1082, %v1074, %v1079
      %v1084 = vrsqrt.pop %v773
      %v1085 = vmul.f32 %v1084, %v773
      %v1086 = vmul.f32 %v1085, %v1084
      %v1087 = vmul.f32 0.5, %v1086
      %v1088 = vsub.f32 1.5, %v1087
      %v1089 = vmul.f32 %v1084, %v1088
      %vm1090 = vweird.f32 %v773
      %vm1091 = vweird.f32 %v1084
      %vm1092 = vmor %vm1090, %vm1091
      %v1093 = vsel %vm1092, %v1084, %v1089
      %v1094 = vmul.f32 %v582, %v783
      %v1095 = vmul.f32 %v583, %v793
      %v1096 = vmul.f32 %v584, %v803
      %v1097 = vmul.f32 %v585, %v813
      %v1098 = vmul.f32 %v586, %v823
      %v1099 = vmul.f32 %v587, %v833
      %v1100 = vmul.f32 %v588, %v843
      %v1101 = vmul.f32 %v589, %v853
      %v1102 = vmul.f32 %v590, %v863
      %v1103 = vmul.f32 %v591, %v873
      %v1104 = vmul.f32 %v592, %v883
      %v1105 = vmul.f32 %v593, %v893
      %v1106 = vmul.f32 %v594, %v903
      %v1107 = vmul.f32 %v595, %v913
      %v1108 = vmul.f32 %v596, %v923
      %v1109 = vmul.f32 %v597, %v933
      %v1110 = vmul.f32 %v598, %v943
      %v1111 = vmul.f32 %v599, %v953
      %v1112 = vmul.f32 %v600, %v963
      %v1113 = vmul.f32 %v601, %v973
      %v1114 = vmul.f32 %v602, %v983
      %v1115 = vmul.f32 %v603, %v993
      %v1116 = vmul.f32 %v604, %v1003
      %v1117 = vmul.f32 %v605, %v1013
      %v1118 = vmul.f32 %v606, %v1023
      %v1119 = vmul.f32 %v607, %v1033
      %v1120 = vmul.f32 %v608, %v1043
      %v1121 = vmul.f32 %v609, %v1053
      %v1122 = vmul.f32 %v610, %v1063
      %v1123 = vmul.f32 %v611, %v1073
      %v1124 = vmul.f32 %v612, %v1083
      %v1125 = vmul.f32 %v613, %v1093
      %v1127 = vperm.slane %v477, 0
      %v1129 = vmul.f32 %v1094, %v1127
      %v1130 = vmul.f32 %v1095, %v1127
      %v1131 = vmul.f32 %v1096, %v1127
      %v1132 = vmul.f32 %v1097, %v1127
      %v1133 = vmul.f32 %v1098, %v1127
      %v1134 = vmul.f32 %v1099, %v1127
      %v1135 = vmul.f32 %v1100, %v1127
      %v1136 = vmul.f32 %v1101, %v1127
      %v1137 = vmul.f32 %v1102, %v1127
      %v1138 = vmul.f32 %v1103, %v1127
      %v1139 = vmul.f32 %v1104, %v1127
      %v1140 = vmul.f32 %v1105, %v1127
      %v1141 = vmul.f32 %v1106, %v1127
      %v1142 = vmul.f32 %v1107, %v1127
      %v1143 = vmul.f32 %v1108, %v1127
      %v1144 = vmul.f32 %v1109, %v1127
      %v1145 = vmul.f32 %v1110, %v1127
      %v1146 = vmul.f32 %v1111, %v1127
      %v1147 = vmul.f32 %v1112, %v1127
      %v1148 = vmul.f32 %v1113, %v1127
      %v1149 = vmul.f32 %v1114, %v1127
      %v1150 = vmul.f32 %v1115, %v1127
      %v1151 = vmul.f32 %v1116, %v1127
      %v1152 = vmul.f32 %v1117, %v1127
      %v1153 = vmul.f32 %v1118, %v1127
      %v1154 = vmul.f32 %v1119, %v1127
      %v1155 = vmul.f32 %v1120, %v1127
      %v1156 = vmul.f32 %v1121, %v1127
      %v1157 = vmul.f32 %v1122, %v1127
      %v1158 = vmul.f32 %v1123, %v1127
      %v1159 = vmul.f32 %v1124, %v1127
      %v1160 = vmul.f32 %v1125, %v1127
      %v1162 = vperm.slane %v478, 0
      %v1164 = vadd.f32 %v1129, %v1162
      %v1165 = vadd.f32 %v1130, %v1162
      %v1166 = vadd.f32 %v1131, %v1162
      %v1167 = vadd.f32 %v1132, %v1162
      %v1168 = vadd.f32 %v1133, %v1162
      %v1169 = vadd.f32 %v1134, %v1162
      %v1170 = vadd.f32 %v1135, %v1162
      %v1171 = vadd.f32 %v1136, %v1162
      %v1172 = vadd.f32 %v1137, %v1162
      %v1173 = vadd.f32 %v1138, %v1162
      %v1174 = vadd.f32 %v1139, %v1162
      %v1175 = vadd.f32 %v1140, %v1162
      %v1176 = vadd.f32 %v1141, %v1162
      %v1177 = vadd.f32 %v1142, %v1162
      %v1178 = vadd.f32 %v1143, %v1162
      %v1179 = vadd.f32 %v1144, %v1162
      %v1180 = vadd.f32 %v1145, %v1162
      %v1181 = vadd.f32 %v1146, %v1162
      %v1182 = vadd.f32 %v1147, %v1162
      %v1183 = vadd.f32 %v1148, %v1162
      %v1184 = vadd.f32 %v1149, %v1162
      %v1185 = vadd.f32 %v1150, %v1162
      %v1186 = vadd.f32 %v1151, %v1162
      %v1187 = vadd.f32 %v1152, %v1162
      %v1188 = vadd.f32 %v1153, %v1162
      %v1189 = vadd.f32 %v1154, %v1162
      %v1190 = vadd.f32 %v1155, %v1162
      %v1191 = vadd.f32 %v1156, %v1162
      %v1192 = vadd.f32 %v1157, %v1162
      %v1193 = vadd.f32 %v1158, %v1162
      %v1194 = vadd.f32 %v1159, %v1162
      %v1195 = vadd.f32 %v1160, %v1162
      %v1196 = vpack.c.bf16 %v1165, %v1164
      %v1197 = vpack.c.bf16 %v1167, %v1166
      %v1198 = vpack.c.bf16 %v1169, %v1168
      %v1199 = vpack.c.bf16 %v1171, %v1170
      %v1200 = vpack.c.bf16 %v1173, %v1172
      %v1201 = vpack.c.bf16 %v1175, %v1174
      %v1202 = vpack.c.bf16 %v1177, %v1176
      %v1203 = vpack.c.bf16 %v1179, %v1178
      %v1204 = vpack.c.bf16 %v1181, %v1180
      %v1205 = vpack.c.bf16 %v1183, %v1182
      %v1206 = vpack.c.bf16 %v1185, %v1184
      %v1207 = vpack.c.bf16 %v1187, %v1186
      %v1208 = vpack.c.bf16 %v1189, %v1188
      %v1209 = vpack.c.bf16 %v1191, %v1190
      %v1210 = vpack.c.bf16 %v1193, %v1192
      %v1211 = vpack.c.bf16 %v1195, %v1194
      %v1212 = vld [vmem:[%s423] sm:$0xff]
      %v1213 = vld [vmem:[%s423 + $0x8] sm:$0xff]
      %v1214 = vld [vmem:[%s423 + $0x10] sm:$0xff]
      %v1215 = vld [vmem:[%s423 + $0x18] sm:$0xff]
      %v1216 = vld [vmem:[%s423 + $0x20] sm:$0xff]
      %v1217 = vld [vmem:[%s423 + $0x28] sm:$0xff]
      %v1218 = vld [vmem:[%s423 + $0x30] sm:$0xff]
      %v1219 = vld [vmem:[%s423 + $0x38] sm:$0xff]
      %v1220 = vld [vmem:[%s423 + $0x40] sm:$0xff]
      %v1221 = vld [vmem:[%s423 + $0x48] sm:$0xff]
      %v1222 = vld [vmem:[%s423 + $0x50] sm:$0xff]
      %v1223 = vld [vmem:[%s423 + $0x58] sm:$0xff]
      %v1224 = vld [vmem:[%s423 + $0x60] sm:$0xff]
      %v1225 = vld [vmem:[%s423 + $0x68] sm:$0xff]
      %v1226 = vld [vmem:[%s423 + $0x70] sm:$0xff]
      %v1227 = vld [vmem:[%s423 + $0x78] sm:$0xff]
      %v1228 = vpack.c.bf16 %v1213, %v1212
      %v1229 = vpack.c.bf16 %v1215, %v1214
      %v1230 = vpack.c.bf16 %v1217, %v1216
      %v1231 = vpack.c.bf16 %v1219, %v1218
      %v1232 = vpack.c.bf16 %v1221, %v1220
      %v1233 = vpack.c.bf16 %v1223, %v1222
      %v1234 = vpack.c.bf16 %v1225, %v1224
      %v1235 = vpack.c.bf16 %v1227, %v1226
      %v1236 = vld [vmem:[%s4] sm:$0xf]
      %v1237 = vld [vmem:[%s4 + $0x4] sm:$0xf]
      %v1238 = vld [vmem:[%s4 + $0x8] sm:$0xf]
      %v1239 = vld [vmem:[%s4 + $0xc] sm:$0xf]
      %v1240 = vld [vmem:[%s4 + $0x10] sm:$0xf]
      %v1241 = vld [vmem:[%s4 + $0x14] sm:$0xf]
      %v1242 = vld [vmem:[%s4 + $0x18] sm:$0xf]
      %v1243 = vld [vmem:[%s4 + $0x1c] sm:$0xf]
      %v1244 = vld [vmem:[%s4 + $0x20] sm:$0xf]
      %v1245 = vld [vmem:[%s4 + $0x24] sm:$0xf]
      %v1246 = vld [vmem:[%s4 + $0x28] sm:$0xf]
      %v1247 = vld [vmem:[%s4 + $0x2c] sm:$0xf]
      %v1248 = vld [vmem:[%s4 + $0x30] sm:$0xf]
      %v1249 = vld [vmem:[%s4 + $0x34] sm:$0xf]
      %v1250 = vld [vmem:[%s4 + $0x38] sm:$0xf]
      %v1251 = vld [vmem:[%s4 + $0x3c] sm:$0xf]
      %v1268 = vunpack.c.l.b16 %v1236
      %v1269 = vunpack.c.l.b16 %v1237
      %v1270 = vunpack.c.l.b16 %v1238
      %v1271 = vunpack.c.l.b16 %v1239
      %v1272 = vunpack.c.l.b16 %v1240
      %v1273 = vunpack.c.l.b16 %v1241
      %v1274 = vunpack.c.l.b16 %v1242
      %v1275 = vunpack.c.l.b16 %v1243
      %v1276 = vunpack.c.l.b16 %v1244
      %v1277 = vunpack.c.l.b16 %v1245
      %v1278 = vunpack.c.l.b16 %v1246
      %v1279 = vunpack.c.l.b16 %v1247
      %v1280 = vunpack.c.l.b16 %v1248
      %v1281 = vunpack.c.l.b16 %v1249
      %v1282 = vunpack.c.l.b16 %v1250
      %v1283 = vunpack.c.l.b16 %v1251
      %v1284 = vpack.c.b16 %v1269, %v1268
      %v1285 = vpack.c.b16 %v1271, %v1270
      %v1286 = vpack.c.b16 %v1273, %v1272
      %v1287 = vpack.c.b16 %v1275, %v1274
      %v1288 = vpack.c.b16 %v1277, %v1276
      %v1289 = vpack.c.b16 %v1279, %v1278
      %v1290 = vpack.c.b16 %v1281, %v1280
      %v1291 = vpack.c.b16 %v1283, %v1282
      %1300 = vmatpush.bf16.msra.mxu0 %v1291
      %1301 = vmatpush.bf16.msra.mxu0 %v1290
      %1302 = vmatpush.bf16.msra.mxu0 %v1289
      %1303 = vmatpush.bf16.msra.mxu0 %v1288
      %1304 = vmatpush.bf16.msra.mxu0 %v1287
      %1305 = vmatpush.bf16.msra.mxu0 %v1286
      %1306 = vmatpush.bf16.msra.mxu0 %v1285
      %1307 = vmatpush.bf16.msra.mxu0 %v1284
      %1308 = vmatmul.bf16.gmra.mxu0 %v1196
      %v1309 = vpop.f32.mrf.mxu0
      %v1310 = vadd.f32 0.0, %v1309
      %v1311 = vpop.f32.mrf.mxu0
      %v1312 = vadd.f32 0.0, %v1311
      %1313 = vmatmul.bf16.gmra.mxu0 %v1197
      %v1314 = vpop.f32.mrf.mxu0
      %v1315 = vadd.f32 0.0, %v1314
      %v1316 = vpop.f32.mrf.mxu0
      %v1317 = vadd.f32 0.0, %v1316
      %1318 = vmatmul.bf16.gmra.mxu0 %v1198
      %v1319 = vpop.f32.mrf.mxu0
      %v1320 = vadd.f32 0.0, %v1319
      %v1321 = vpop.f32.mrf.mxu0
      %v1322 = vadd.f32 0.0, %v1321
      %1323 = vmatmul.bf16.gmra.mxu0 %v1199
      %v1324 = vpop.f32.mrf.mxu0
      %v1325 = vadd.f32 0.0, %v1324
      %v1326 = vpop.f32.mrf.mxu0
      %v1327 = vadd.f32 0.0, %v1326
      %1328 = vmatmul.bf16.gmra.mxu0 %v1200
      %v1329 = vpop.f32.mrf.mxu0
      %v1330 = vadd.f32 0.0, %v1329
      %v1331 = vpop.f32.mrf.mxu0
      %v1332 = vadd.f32 0.0, %v1331
      %1333 = vmatmul.bf16.gmra.mxu0 %v1201
      %v1334 = vpop.f32.mrf.mxu0
      %v1335 = vadd.f32 0.0, %v1334
      %v1336 = vpop.f32.mrf.mxu0
      %v1337 = vadd.f32 0.0, %v1336
      %1338 = vmatmul.bf16.gmra.mxu0 %v1202
      %v1339 = vpop.f32.mrf.mxu0
      %v1340 = vadd.f32 0.0, %v1339
      %v1341 = vpop.f32.mrf.mxu0
      %v1342 = vadd.f32 0.0, %v1341
      %1343 = vmatmul.bf16.gmra.mxu0 %v1203
      %v1344 = vpop.f32.mrf.mxu0
      %v1345 = vadd.f32 0.0, %v1344
      %v1346 = vpop.f32.mrf.mxu0
      %v1347 = vadd.f32 0.0, %v1346
      %1348 = vmatmul.bf16.gmra.mxu0 %v1204
      %v1349 = vpop.f32.mrf.mxu0
      %v1350 = vadd.f32 0.0, %v1349
      %v1351 = vpop.f32.mrf.mxu0
      %v1352 = vadd.f32 0.0, %v1351
      %1353 = vmatmul.bf16.gmra.mxu0 %v1205
      %v1354 = vpop.f32.mrf.mxu0
      %v1355 = vadd.f32 0.0, %v1354
      %v1356 = vpop.f32.mrf.mxu0
      %v1357 = vadd.f32 0.0, %v1356
      %1358 = vmatmul.bf16.gmra.mxu0 %v1206
      %v1359 = vpop.f32.mrf.mxu0
      %v1360 = vadd.f32 0.0, %v1359
      %v1361 = vpop.f32.mrf.mxu0
      %v1362 = vadd.f32 0.0, %v1361
      %1363 = vmatmul.bf16.gmra.mxu0 %v1207
      %v1364 = vpop.f32.mrf.mxu0
      %v1365 = vadd.f32 0.0, %v1364
      %v1366 = vpop.f32.mrf.mxu0
      %v1367 = vadd.f32 0.0, %v1366
      %1368 = vmatmul.bf16.gmra.mxu0 %v1208
      %v1369 = vpop.f32.mrf.mxu0
      %v1370 = vadd.f32 0.0, %v1369
      %v1371 = vpop.f32.mrf.mxu0
      %v1372 = vadd.f32 0.0, %v1371
      %1373 = vmatmul.bf16.gmra.mxu0 %v1209
      %v1374 = vpop.f32.mrf.mxu0
      %v1375 = vadd.f32 0.0, %v1374
      %v1376 = vpop.f32.mrf.mxu0
      %v1377 = vadd.f32 0.0, %v1376
      %1378 = vmatmul.bf16.gmra.mxu0 %v1210
      %v1379 = vpop.f32.mrf.mxu0
      %v1380 = vadd.f32 0.0, %v1379
      %v1381 = vpop.f32.mrf.mxu0
      %v1382 = vadd.f32 0.0, %v1381
      %1383 = vmatmul.bf16.gmra.mxu0 %v1211
      %v1384 = vpop.f32.mrf.mxu0
      %v1385 = vadd.f32 0.0, %v1384
      %v1386 = vpop.f32.mrf.mxu0
      %v1387 = vadd.f32 0.0, %v1386
      %1388 = vdwg.mxu0
      %v1389 = vpack.c.bf16 %v1310, %v1310
      %v1390 = vpack.c.bf16 %v1312, %v1312
      %v1391 = vpack.c.bf16 %v1315, %v1315
      %v1392 = vpack.c.bf16 %v1317, %v1317
      %v1393 = vpack.c.bf16 %v1320, %v1320
      %v1394 = vpack.c.bf16 %v1322, %v1322
      %v1395 = vpack.c.bf16 %v1325, %v1325
      %v1396 = vpack.c.bf16 %v1327, %v1327
      %v1397 = vpack.c.bf16 %v1330, %v1330
      %v1398 = vpack.c.bf16 %v1332, %v1332
      %v1399 = vpack.c.bf16 %v1335, %v1335
      %v1400 = vpack.c.bf16 %v1337, %v1337
      %v1401 = vpack.c.bf16 %v1340, %v1340
      %v1402 = vpack.c.bf16 %v1342, %v1342
      %v1403 = vpack.c.bf16 %v1345, %v1345
      %v1404 = vpack.c.bf16 %v1347, %v1347
      %v1405 = vpack.c.bf16 %v1350, %v1350
      %v1406 = vpack.c.bf16 %v1352, %v1352
      %v1407 = vpack.c.bf16 %v1355, %v1355
      %v1408 = vpack.c.bf16 %v1357, %v1357
      %v1409 = vpack.c.bf16 %v1360, %v1360
      %v1410 = vpack.c.bf16 %v1362, %v1362
      %v1411 = vpack.c.bf16 %v1365, %v1365
      %v1412 = vpack.c.bf16 %v1367, %v1367
      %v1413 = vpack.c.bf16 %v1370, %v1370
      %v1414 = vpack.c.bf16 %v1372, %v1372
      %v1415 = vpack.c.bf16 %v1375, %v1375
      %v1416 = vpack.c.bf16 %v1377, %v1377
      %v1417 = vpack.c.bf16 %v1380, %v1380
      %v1418 = vpack.c.bf16 %v1382, %v1382
      %v1419 = vpack.c.bf16 %v1385, %v1385
      %v1420 = vpack.c.bf16 %v1387, %v1387
      %vm1421 = vcmask 257024
      %1422 = vst.msk [vmem:[%s428] sm:$0xf] %vm1421, %v1389
      %1423 = vst.msk [vmem:[%s428 + $0x4] sm:$0xf] %vm1421, %v1390
      %1424 = vst.msk [vmem:[%s428 + $0x8] sm:$0xf] %vm1421, %v1391
      %1425 = vst.msk [vmem:[%s428 + $0xc] sm:$0xf] %vm1421, %v1392
      %1426 = vst.msk [vmem:[%s428 + $0x10] sm:$0xf] %vm1421, %v1393
      %1427 = vst.msk [vmem:[%s428 + $0x14] sm:$0xf] %vm1421, %v1394
      %1428 = vst.msk [vmem:[%s428 + $0x18] sm:$0xf] %vm1421, %v1395
      %1429 = vst.msk [vmem:[%s428 + $0x1c] sm:$0xf] %vm1421, %v1396
      %1430 = vst.msk [vmem:[%s428 + $0x20] sm:$0xf] %vm1421, %v1397
      %1431 = vst.msk [vmem:[%s428 + $0x24] sm:$0xf] %vm1421, %v1398
      %1432 = vst.msk [vmem:[%s428 + $0x28] sm:$0xf] %vm1421, %v1399
      %1433 = vst.msk [vmem:[%s428 + $0x2c] sm:$0xf] %vm1421, %v1400
      %1434 = vst.msk [vmem:[%s428 + $0x30] sm:$0xf] %vm1421, %v1401
      %1435 = vst.msk [vmem:[%s428 + $0x34] sm:$0xf] %vm1421, %v1402
      %1436 = vst.msk [vmem:[%s428 + $0x38] sm:$0xf] %vm1421, %v1403
      %1437 = vst.msk [vmem:[%s428 + $0x3c] sm:$0xf] %vm1421, %v1404
      %1438 = vst.msk [vmem:[%s428 + $0x40] sm:$0xf] %vm1421, %v1405
      %1439 = vst.msk [vmem:[%s428 + $0x44] sm:$0xf] %vm1421, %v1406
      %1440 = vst.msk [vmem:[%s428 + $0x48] sm:$0xf] %vm1421, %v1407
      %1441 = vst.msk [vmem:[%s428 + $0x4c] sm:$0xf] %vm1421, %v1408
      %1442 = vst.msk [vmem:[%s428 + $0x50] sm:$0xf] %vm1421, %v1409
      %1443 = vst.msk [vmem:[%s428 + $0x54] sm:$0xf] %vm1421, %v1410
      %1444 = vst.msk [vmem:[%s428 + $0x58] sm:$0xf] %vm1421, %v1411
      %1445 = vst.msk [vmem:[%s428 + $0x5c] sm:$0xf] %vm1421, %v1412
      %1446 = vst.msk [vmem:[%s428 + $0x60] sm:$0xf] %vm1421, %v1413
      %1447 = vst.msk [vmem:[%s428 + $0x64] sm:$0xf] %vm1421, %v1414
      %1448 = vst.msk [vmem:[%s428 + $0x68] sm:$0xf] %vm1421, %v1415
      %1449 = vst.msk [vmem:[%s428 + $0x6c] sm:$0xf] %vm1421, %v1416
      %1450 = vst.msk [vmem:[%s428 + $0x70] sm:$0xf] %vm1421, %v1417
      %1451 = vst.msk [vmem:[%s428 + $0x74] sm:$0xf] %vm1421, %v1418
      %1452 = vst.msk [vmem:[%s428 + $0x78] sm:$0xf] %vm1421, %v1419
      %1453 = vst.msk [vmem:[%s428 + $0x7c] sm:$0xf] %vm1421, %v1420
      %v1454 = vld [vmem:[%s5] sm:$0xf]
      %v1455 = vld [vmem:[%s5 + $0x4] sm:$0xf]
      %v1456 = vld [vmem:[%s5 + $0x8] sm:$0xf]
      %v1457 = vld [vmem:[%s5 + $0xc] sm:$0xf]
      %v1458 = vld [vmem:[%s5 + $0x10] sm:$0xf]
      %v1459 = vld [vmem:[%s5 + $0x14] sm:$0xf]
      %v1460 = vld [vmem:[%s5 + $0x18] sm:$0xf]
      %v1461 = vld [vmem:[%s5 + $0x1c] sm:$0xf]
      %v1462 = vld [vmem:[%s5 + $0x20] sm:$0xf]
      %v1463 = vld [vmem:[%s5 + $0x24] sm:$0xf]
      %v1464 = vld [vmem:[%s5 + $0x28] sm:$0xf]
      %v1465 = vld [vmem:[%s5 + $0x2c] sm:$0xf]
      %v1466 = vld [vmem:[%s5 + $0x30] sm:$0xf]
      %v1467 = vld [vmem:[%s5 + $0x34] sm:$0xf]
      %v1468 = vld [vmem:[%s5 + $0x38] sm:$0xf]
      %v1469 = vld [vmem:[%s5 + $0x3c] sm:$0xf]
      %v1486 = vunpack.c.l.b16 %v1454
      %v1487 = vunpack.c.l.b16 %v1455
      %v1488 = vunpack.c.l.b16 %v1456
      %v1489 = vunpack.c.l.b16 %v1457
      %v1490 = vunpack.c.l.b16 %v1458
      %v1491 = vunpack.c.l.b16 %v1459
      %v1492 = vunpack.c.l.b16 %v1460
      %v1493 = vunpack.c.l.b16 %v1461
      %v1494 = vunpack.c.l.b16 %v1462
      %v1495 = vunpack.c.l.b16 %v1463
      %v1496 = vunpack.c.l.b16 %v1464
      %v1497 = vunpack.c.l.b16 %v1465
      %v1498 = vunpack.c.l.b16 %v1466
      %v1499 = vunpack.c.l.b16 %v1467
      %v1500 = vunpack.c.l.b16 %v1468
      %v1501 = vunpack.c.l.b16 %v1469
      %v1502 = vpack.c.b16 %v1487, %v1486
      %v1503 = vpack.c.b16 %v1489, %v1488
      %v1504 = vpack.c.b16 %v1491, %v1490
      %v1505 = vpack.c.b16 %v1493, %v1492
      %v1506 = vpack.c.b16 %v1495, %v1494
      %v1507 = vpack.c.b16 %v1497, %v1496
      %v1508 = vpack.c.b16 %v1499, %v1498
      %v1509 = vpack.c.b16 %v1501, %v1500
      %1518 = vmatpush.bf16.msra.mxu0 %v1509
      %1519 = vmatpush.bf16.msra.mxu0 %v1508
      %1520 = vmatpush.bf16.msra.mxu0 %v1507
      %1521 = vmatpush.bf16.msra.mxu0 %v1506
      %1522 = vmatpush.bf16.msra.mxu0 %v1505
      %1523 = vmatpush.bf16.msra.mxu0 %v1504
      %1524 = vmatpush.bf16.msra.mxu0 %v1503
      %1525 = vmatpush.bf16.msra.mxu0 %v1502
      %1526 = vmatmul.bf16.gmra.mxu0 %v1196
      %v1527 = vpop.f32.mrf.mxu0
      %v1528 = vadd.f32 0.0, %v1527
      %v1529 = vpop.f32.mrf.mxu0
      %v1530 = vadd.f32 0.0, %v1529
      %1531 = vmatmul.bf16.gmra.mxu0 %v1197
      %v1532 = vpop.f32.mrf.mxu0
      %v1533 = vadd.f32 0.0, %v1532
      %v1534 = vpop.f32.mrf.mxu0
      %v1535 = vadd.f32 0.0, %v1534
      %1536 = vmatmul.bf16.gmra.mxu0 %v1198
      %v1537 = vpop.f32.mrf.mxu0
      %v1538 = vadd.f32 0.0, %v1537
      %v1539 = vpop.f32.mrf.mxu0
      %v1540 = vadd.f32 0.0, %v1539
      %1541 = vmatmul.bf16.gmra.mxu0 %v1199
      %v1542 = vpop.f32.mrf.mxu0
      %v1543 = vadd.f32 0.0, %v1542
      %v1544 = vpop.f32.mrf.mxu0
      %v1545 = vadd.f32 0.0, %v1544
      %1546 = vmatmul.bf16.gmra.mxu0 %v1200
      %v1547 = vpop.f32.mrf.mxu0
      %v1548 = vadd.f32 0.0, %v1547
      %v1549 = vpop.f32.mrf.mxu0
      %v1550 = vadd.f32 0.0, %v1549
      %1551 = vmatmul.bf16.gmra.mxu0 %v1201
      %v1552 = vpop.f32.mrf.mxu0
      %v1553 = vadd.f32 0.0, %v1552
      %v1554 = vpop.f32.mrf.mxu0
      %v1555 = vadd.f32 0.0, %v1554
      %1556 = vmatmul.bf16.gmra.mxu0 %v1202
      %v1557 = vpop.f32.mrf.mxu0
      %v1558 = vadd.f32 0.0, %v1557
      %v1559 = vpop.f32.mrf.mxu0
      %v1560 = vadd.f32 0.0, %v1559
      %1561 = vmatmul.bf16.gmra.mxu0 %v1203
      %v1562 = vpop.f32.mrf.mxu0
      %v1563 = vadd.f32 0.0, %v1562
      %v1564 = vpop.f32.mrf.mxu0
      %v1565 = vadd.f32 0.0, %v1564
      %1566 = vmatmul.bf16.gmra.mxu0 %v1204
      %v1567 = vpop.f32.mrf.mxu0
      %v1568 = vadd.f32 0.0, %v1567
      %v1569 = vpop.f32.mrf.mxu0
      %v1570 = vadd.f32 0.0, %v1569
      %1571 = vmatmul.bf16.gmra.mxu0 %v1205
      %v1572 = vpop.f32.mrf.mxu0
      %v1573 = vadd.f32 0.0, %v1572
      %v1574 = vpop.f32.mrf.mxu0
      %v1575 = vadd.f32 0.0, %v1574
      %1576 = vmatmul.bf16.gmra.mxu0 %v1206
      %v1577 = vpop.f32.mrf.mxu0
      %v1578 = vadd.f32 0.0, %v1577
      %v1579 = vpop.f32.mrf.mxu0
      %v1580 = vadd.f32 0.0, %v1579
      %1581 = vmatmul.bf16.gmra.mxu0 %v1207
      %v1582 = vpop.f32.mrf.mxu0
      %v1583 = vadd.f32 0.0, %v1582
      %v1584 = vpop.f32.mrf.mxu0
      %v1585 = vadd.f32 0.0, %v1584
      %1586 = vmatmul.bf16.gmra.mxu0 %v1208
      %v1587 = vpop.f32.mrf.mxu0
      %v1588 = vadd.f32 0.0, %v1587
      %v1589 = vpop.f32.mrf.mxu0
      %v1590 = vadd.f32 0.0, %v1589
      %1591 = vmatmul.bf16.gmra.mxu0 %v1209
      %v1592 = vpop.f32.mrf.mxu0
      %v1593 = vadd.f32 0.0, %v1592
      %v1594 = vpop.f32.mrf.mxu0
      %v1595 = vadd.f32 0.0, %v1594
      %1596 = vmatmul.bf16.gmra.mxu0 %v1210
      %v1597 = vpop.f32.mrf.mxu0
      %v1598 = vadd.f32 0.0, %v1597
      %v1599 = vpop.f32.mrf.mxu0
      %v1600 = vadd.f32 0.0, %v1599
      %1601 = vmatmul.bf16.gmra.mxu0 %v1211
      %v1602 = vpop.f32.mrf.mxu0
      %v1603 = vadd.f32 0.0, %v1602
      %v1604 = vpop.f32.mrf.mxu0
      %v1605 = vadd.f32 0.0, %v1604
      %1606 = vdwg.mxu0
      %v1607 = vpack.c.bf16 %v1528, %v1528
      %v1608 = vpack.c.bf16 %v1530, %v1530
      %v1609 = vpack.c.bf16 %v1533, %v1533
      %v1610 = vpack.c.bf16 %v1535, %v1535
      %v1611 = vpack.c.bf16 %v1538, %v1538
      %v1612 = vpack.c.bf16 %v1540, %v1540
      %v1613 = vpack.c.bf16 %v1543, %v1543
      %v1614 = vpack.c.bf16 %v1545, %v1545
      %v1615 = vpack.c.bf16 %v1548, %v1548
      %v1616 = vpack.c.bf16 %v1550, %v1550
      %v1617 = vpack.c.bf16 %v1553, %v1553
      %v1618 = vpack.c.bf16 %v1555, %v1555
      %v1619 = vpack.c.bf16 %v1558, %v1558
      %v1620 = vpack.c.bf16 %v1560, %v1560
      %v1621 = vpack.c.bf16 %v1563, %v1563
      %v1622 = vpack.c.bf16 %v1565, %v1565
      %v1623 = vpack.c.bf16 %v1568, %v1568
      %v1624 = vpack.c.bf16 %v1570, %v1570
      %v1625 = vpack.c.bf16 %v1573, %v1573
      %v1626 = vpack.c.bf16 %v1575, %v1575
      %v1627 = vpack.c.bf16 %v1578, %v1578
      %v1628 = vpack.c.bf16 %v1580, %v1580
      %v1629 = vpack.c.bf16 %v1583, %v1583
      %v1630 = vpack.c.bf16 %v1585, %v1585
      %v1631 = vpack.c.bf16 %v1588, %v1588
      %v1632 = vpack.c.bf16 %v1590, %v1590
      %v1633 = vpack.c.bf16 %v1593, %v1593
      %v1634 = vpack.c.bf16 %v1595, %v1595
      %v1635 = vpack.c.bf16 %v1598, %v1598
      %v1636 = vpack.c.bf16 %v1600, %v1600
      %v1637 = vpack.c.bf16 %v1603, %v1603
      %v1638 = vpack.c.bf16 %v1605, %v1605
      %1639 = vst.msk [vmem:[%s433] sm:$0xf] %vm1421, %v1607
      %1640 = vst.msk [vmem:[%s433 + $0x4] sm:$0xf] %vm1421, %v1608
      %1641 = vst.msk [vmem:[%s433 + $0x8] sm:$0xf] %vm1421, %v1609
      %1642 = vst.msk [vmem:[%s433 + $0xc] sm:$0xf] %vm1421, %v1610
      %1643 = vst.msk [vmem:[%s433 + $0x10] sm:$0xf] %vm1421, %v1611
      %1644 = vst.msk [vmem:[%s433 + $0x14] sm:$0xf] %vm1421, %v1612
      %1645 = vst.msk [vmem:[%s433 + $0x18] sm:$0xf] %vm1421, %v1613
      %1646 = vst.msk [vmem:[%s433 + $0x1c] sm:$0xf] %vm1421, %v1614
      %1647 = vst.msk [vmem:[%s433 + $0x20] sm:$0xf] %vm1421, %v1615
      %1648 = vst.msk [vmem:[%s433 + $0x24] sm:$0xf] %vm1421, %v1616
      %1649 = vst.msk [vmem:[%s433 + $0x28] sm:$0xf] %vm1421, %v1617
      %1650 = vst.msk [vmem:[%s433 + $0x2c] sm:$0xf] %vm1421, %v1618
      %1651 = vst.msk [vmem:[%s433 + $0x30] sm:$0xf] %vm1421, %v1619
      %1652 = vst.msk [vmem:[%s433 + $0x34] sm:$0xf] %vm1421, %v1620
      %1653 = vst.msk [vmem:[%s433 + $0x38] sm:$0xf] %vm1421, %v1621
      %1654 = vst.msk [vmem:[%s433 + $0x3c] sm:$0xf] %vm1421, %v1622
      %1655 = vst.msk [vmem:[%s433 + $0x40] sm:$0xf] %vm1421, %v1623
      %1656 = vst.msk [vmem:[%s433 + $0x44] sm:$0xf] %vm1421, %v1624
      %1657 = vst.msk [vmem:[%s433 + $0x48] sm:$0xf] %vm1421, %v1625
      %1658 = vst.msk [vmem:[%s433 + $0x4c] sm:$0xf] %vm1421, %v1626
      %1659 = vst.msk [vmem:[%s433 + $0x50] sm:$0xf] %vm1421, %v1627
      %1660 = vst.msk [vmem:[%s433 + $0x54] sm:$0xf] %vm1421, %v1628
      %1661 = vst.msk [vmem:[%s433 + $0x58] sm:$0xf] %vm1421, %v1629
      %1662 = vst.msk [vmem:[%s433 + $0x5c] sm:$0xf] %vm1421, %v1630
      %1663 = vst.msk [vmem:[%s433 + $0x60] sm:$0xf] %vm1421, %v1631
      %1664 = vst.msk [vmem:[%s433 + $0x64] sm:$0xf] %vm1421, %v1632
      %1665 = vst.msk [vmem:[%s433 + $0x68] sm:$0xf] %vm1421, %v1633
      %1666 = vst.msk [vmem:[%s433 + $0x6c] sm:$0xf] %vm1421, %v1634
      %1667 = vst.msk [vmem:[%s433 + $0x70] sm:$0xf] %vm1421, %v1635
      %1668 = vst.msk [vmem:[%s433 + $0x74] sm:$0xf] %vm1421, %v1636
      %1669 = vst.msk [vmem:[%s433 + $0x78] sm:$0xf] %vm1421, %v1637
      %1670 = vst.msk [vmem:[%s433 + $0x7c] sm:$0xf] %vm1421, %v1638
      %v1671 = vld [vmem:[%s6] sm:$0xf]
      %v1672 = vld [vmem:[%s6 + $0x4] sm:$0xf]
      %v1673 = vld [vmem:[%s6 + $0x8] sm:$0xf]
      %v1674 = vld [vmem:[%s6 + $0xc] sm:$0xf]
      %v1675 = vld [vmem:[%s6 + $0x10] sm:$0xf]
      %v1676 = vld [vmem:[%s6 + $0x14] sm:$0xf]
      %v1677 = vld [vmem:[%s6 + $0x18] sm:$0xf]
      %v1678 = vld [vmem:[%s6 + $0x1c] sm:$0xf]
      %v1687 = vunpack.c.l.b16 %v1671
      %v1688 = vunpack.c.l.b16 %v1672
      %v1689 = vunpack.c.l.b16 %v1673
      %v1690 = vunpack.c.l.b16 %v1674
      %v1691 = vunpack.c.l.b16 %v1675
      %v1692 = vunpack.c.l.b16 %v1676
      %v1693 = vunpack.c.l.b16 %v1677
      %v1694 = vunpack.c.l.b16 %v1678
      %v1695 = vpack.c.b16 %v1688, %v1687
      %v1696 = vpack.c.b16 %v1690, %v1689
      %v1697 = vpack.c.b16 %v1692, %v1691
      %v1698 = vpack.c.b16 %v1694, %v1693
      %vm1703 = vcmask 523264
      %v1705 = vsel %vm1703, %v1228, 0
      %v1708 = vsel %vm1703, %v1229, 0
      %v1711 = vsel %vm1703, %v1230, 0
      %v1714 = vsel %vm1703, %v1231, 0
      %v1717 = vsel %vm1703, %v1232, 0
      %v1720 = vsel %vm1703, %v1233, 0
      %v1723 = vsel %vm1703, %v1234, 0
      %v1726 = vsel %vm1703, %v1235, 0
      %1728 = vmatpush.bf16.msra.mxu0 0
      %1729 = vmatpush.bf16.msra.mxu0 0
      %1730 = vmatpush.bf16.msra.mxu0 0
      %1731 = vmatpush.bf16.msra.mxu0 0
      %1732 = vmatpush.bf16.msra.mxu0 %v1698
      %1733 = vmatpush.bf16.msra.mxu0 %v1697
      %1734 = vmatpush.bf16.msra.mxu0 %v1696
      %1735 = vmatpush.bf16.msra.mxu0 %v1695
      %1736 = vmatmul.bf16.gmra.mxu0 %v1705
      %v1737 = vpop.f32.mrf.mxu0
      %v1738 = vadd.f32 0.0, %v1737
      %v1739 = vpop.f32.mrf.mxu0
      %v1740 = vadd.f32 0.0, %v1739
      %1741 = vmatmul.bf16.gmra.mxu0 %v1708
      %v1742 = vpop.f32.mrf.mxu0
      %v1743 = vadd.f32 0.0, %v1742
      %v1744 = vpop.f32.mrf.mxu0
      %v1745 = vadd.f32 0.0, %v1744
      %1746 = vmatmul.bf16.gmra.mxu0 %v1711
      %v1747 = vpop.f32.mrf.mxu0
      %v1748 = vadd.f32 0.0, %v1747
      %v1749 = vpop.f32.mrf.mxu0
      %v1750 = vadd.f32 0.0, %v1749
      %1751 = vmatmul.bf16.gmra.mxu0 %v1714
      %v1752 = vpop.f32.mrf.mxu0
      %v1753 = vadd.f32 0.0, %v1752
      %v1754 = vpop.f32.mrf.mxu0
      %v1755 = vadd.f32 0.0, %v1754
      %1756 = vmatmul.bf16.gmra.mxu0 %v1717
      %v1757 = vpop.f32.mrf.mxu0
      %v1758 = vadd.f32 0.0, %v1757
      %v1759 = vpop.f32.mrf.mxu0
      %v1760 = vadd.f32 0.0, %v1759
      %1761 = vmatmul.bf16.gmra.mxu0 %v1720
      %v1762 = vpop.f32.mrf.mxu0
      %v1763 = vadd.f32 0.0, %v1762
      %v1764 = vpop.f32.mrf.mxu0
      %v1765 = vadd.f32 0.0, %v1764
      %1766 = vmatmul.bf16.gmra.mxu0 %v1723
      %v1767 = vpop.f32.mrf.mxu0
      %v1768 = vadd.f32 0.0, %v1767
      %v1769 = vpop.f32.mrf.mxu0
      %v1770 = vadd.f32 0.0, %v1769
      %1771 = vmatmul.bf16.gmra.mxu0 %v1726
      %v1772 = vpop.f32.mrf.mxu0
      %v1773 = vadd.f32 0.0, %v1772
      %v1774 = vpop.f32.mrf.mxu0
      %v1775 = vadd.f32 0.0, %v1774
      %1776 = vdwg.mxu0
      %v1777 = vpack.c.bf16 %v1738, %v1738
      %v1778 = vpack.c.bf16 %v1740, %v1740
      %v1779 = vpack.c.bf16 %v1743, %v1743
      %v1780 = vpack.c.bf16 %v1745, %v1745
      %v1781 = vpack.c.bf16 %v1748, %v1748
      %v1782 = vpack.c.bf16 %v1750, %v1750
      %v1783 = vpack.c.bf16 %v1753, %v1753
      %v1784 = vpack.c.bf16 %v1755, %v1755
      %v1785 = vpack.c.bf16 %v1758, %v1758
      %v1786 = vpack.c.bf16 %v1760, %v1760
      %v1787 = vpack.c.bf16 %v1763, %v1763
      %v1788 = vpack.c.bf16 %v1765, %v1765
      %v1789 = vpack.c.bf16 %v1768, %v1768
      %v1790 = vpack.c.bf16 %v1770, %v1770
      %v1791 = vpack.c.bf16 %v1773, %v1773
      %v1792 = vpack.c.bf16 %v1775, %v1775
      %1793 = vst.msk [vmem:[%s438] sm:$0xf] %vm1421, %v1777
      %1794 = vst.msk [vmem:[%s438 + $0x4] sm:$0xf] %vm1421, %v1778
      %1795 = vst.msk [vmem:[%s438 + $0x8] sm:$0xf] %vm1421, %v1779
      %1796 = vst.msk [vmem:[%s438 + $0xc] sm:$0xf] %vm1421, %v1780
      %1797 = vst.msk [vmem:[%s438 + $0x10] sm:$0xf] %vm1421, %v1781
      %1798 = vst.msk [vmem:[%s438 + $0x14] sm:$0xf] %vm1421, %v1782
      %1799 = vst.msk [vmem:[%s438 + $0x18] sm:$0xf] %vm1421, %v1783
      %1800 = vst.msk [vmem:[%s438 + $0x1c] sm:$0xf] %vm1421, %v1784
      %1801 = vst.msk [vmem:[%s438 + $0x20] sm:$0xf] %vm1421, %v1785
      %1802 = vst.msk [vmem:[%s438 + $0x24] sm:$0xf] %vm1421, %v1786
      %1803 = vst.msk [vmem:[%s438 + $0x28] sm:$0xf] %vm1421, %v1787
      %1804 = vst.msk [vmem:[%s438 + $0x2c] sm:$0xf] %vm1421, %v1788
      %1805 = vst.msk [vmem:[%s438 + $0x30] sm:$0xf] %vm1421, %v1789
      %1806 = vst.msk [vmem:[%s438 + $0x34] sm:$0xf] %vm1421, %v1790
      %1807 = vst.msk [vmem:[%s438 + $0x38] sm:$0xf] %vm1421, %v1791
      %1808 = vst.msk [vmem:[%s438 + $0x3c] sm:$0xf] %vm1421, %v1792
      %v1809 = vld [vmem:[%s7] sm:$0xf]
      %v1810 = vld [vmem:[%s7 + $0x4] sm:$0xf]
      %v1811 = vld [vmem:[%s7 + $0x8] sm:$0xf]
      %v1812 = vld [vmem:[%s7 + $0xc] sm:$0xf]
      %v1813 = vld [vmem:[%s7 + $0x10] sm:$0xf]
      %v1814 = vld [vmem:[%s7 + $0x14] sm:$0xf]
      %v1815 = vld [vmem:[%s7 + $0x18] sm:$0xf]
      %v1816 = vld [vmem:[%s7 + $0x1c] sm:$0xf]
      %v1825 = vunpack.c.l.b16 %v1809
      %v1826 = vunpack.c.l.b16 %v1810
      %v1827 = vunpack.c.l.b16 %v1811
      %v1828 = vunpack.c.l.b16 %v1812
      %v1829 = vunpack.c.l.b16 %v1813
      %v1830 = vunpack.c.l.b16 %v1814
      %v1831 = vunpack.c.l.b16 %v1815
      %v1832 = vunpack.c.l.b16 %v1816
      %v1833 = vpack.c.b16 %v1826, %v1825
      %v1834 = vpack.c.b16 %v1828, %v1827
      %v1835 = vpack.c.b16 %v1830, %v1829
      %v1836 = vpack.c.b16 %v1832, %v1831
      %1841 = vmatpush.bf16.msra.mxu0 0
      %1842 = vmatpush.bf16.msra.mxu0 0
      %1843 = vmatpush.bf16.msra.mxu0 0
      %1844 = vmatpush.bf16.msra.mxu0 0
      %1845 = vmatpush.bf16.msra.mxu0 %v1836
      %1846 = vmatpush.bf16.msra.mxu0 %v1835
      %1847 = vmatpush.bf16.msra.mxu0 %v1834
      %1848 = vmatpush.bf16.msra.mxu0 %v1833
      %1849 = vmatmul.bf16.gmra.mxu0 %v1705
      %v1850 = vpop.f32.mrf.mxu0
      %v1851 = vadd.f32 0.0, %v1850
      %v1852 = vpop.f32.mrf.mxu0
      %v1853 = vadd.f32 0.0, %v1852
      %1854 = vmatmul.bf16.gmra.mxu0 %v1708
      %v1855 = vpop.f32.mrf.mxu0
      %v1856 = vadd.f32 0.0, %v1855
      %v1857 = vpop.f32.mrf.mxu0
      %v1858 = vadd.f32 0.0, %v1857
      %1859 = vmatmul.bf16.gmra.mxu0 %v1711
      %v1860 = vpop.f32.mrf.mxu0
      %v1861 = vadd.f32 0.0, %v1860
      %v1862 = vpop.f32.mrf.mxu0
      %v1863 = vadd.f32 0.0, %v1862
      %1864 = vmatmul.bf16.gmra.mxu0 %v1714
      %v1865 = vpop.f32.mrf.mxu0
      %v1866 = vadd.f32 0.0, %v1865
      %v1867 = vpop.f32.mrf.mxu0
      %v1868 = vadd.f32 0.0, %v1867
      %1869 = vmatmul.bf16.gmra.mxu0 %v1717
      %v1870 = vpop.f32.mrf.mxu0
      %v1871 = vadd.f32 0.0, %v1870
      %v1872 = vpop.f32.mrf.mxu0
      %v1873 = vadd.f32 0.0, %v1872
      %1874 = vmatmul.bf16.gmra.mxu0 %v1720
      %v1875 = vpop.f32.mrf.mxu0
      %v1876 = vadd.f32 0.0, %v1875
      %v1877 = vpop.f32.mrf.mxu0
      %v1878 = vadd.f32 0.0, %v1877
      %1879 = vmatmul.bf16.gmra.mxu0 %v1723
      %v1880 = vpop.f32.mrf.mxu0
      %v1881 = vadd.f32 0.0, %v1880
      %v1882 = vpop.f32.mrf.mxu0
      %v1883 = vadd.f32 0.0, %v1882
      %1884 = vmatmul.bf16.gmra.mxu0 %v1726
      %v1885 = vpop.f32.mrf.mxu0
      %v1886 = vadd.f32 0.0, %v1885
      %v1887 = vpop.f32.mrf.mxu0
      %v1888 = vadd.f32 0.0, %v1887
      %1889 = vdwg.mxu0
      %v1890 = vpack.c.bf16 %v1851, %v1851
      %v1891 = vpack.c.bf16 %v1853, %v1853
      %v1892 = vpack.c.bf16 %v1856, %v1856
      %v1893 = vpack.c.bf16 %v1858, %v1858
      %v1894 = vpack.c.bf16 %v1861, %v1861
      %v1895 = vpack.c.bf16 %v1863, %v1863
      %v1896 = vpack.c.bf16 %v1866, %v1866
      %v1897 = vpack.c.bf16 %v1868, %v1868
      %v1898 = vpack.c.bf16 %v1871, %v1871
      %v1899 = vpack.c.bf16 %v1873, %v1873
      %v1900 = vpack.c.bf16 %v1876, %v1876
      %v1901 = vpack.c.bf16 %v1878, %v1878
      %v1902 = vpack.c.bf16 %v1881, %v1881
      %v1903 = vpack.c.bf16 %v1883, %v1883
      %v1904 = vpack.c.bf16 %v1886, %v1886
      %v1905 = vpack.c.bf16 %v1888, %v1888
      %1906 = vst.msk [vmem:[%s443] sm:$0xf] %vm1421, %v1890
      %1907 = vst.msk [vmem:[%s443 + $0x4] sm:$0xf] %vm1421, %v1891
      %1908 = vst.msk [vmem:[%s443 + $0x8] sm:$0xf] %vm1421, %v1892
      %1909 = vst.msk [vmem:[%s443 + $0xc] sm:$0xf] %vm1421, %v1893
      %1910 = vst.msk [vmem:[%s443 + $0x10] sm:$0xf] %vm1421, %v1894
      %1911 = vst.msk [vmem:[%s443 + $0x14] sm:$0xf] %vm1421, %v1895
      %1912 = vst.msk [vmem:[%s443 + $0x18] sm:$0xf] %vm1421, %v1896
      %1913 = vst.msk [vmem:[%s443 + $0x1c] sm:$0xf] %vm1421, %v1897
      %1914 = vst.msk [vmem:[%s443 + $0x20] sm:$0xf] %vm1421, %v1898
      %1915 = vst.msk [vmem:[%s443 + $0x24] sm:$0xf] %vm1421, %v1899
      %1916 = vst.msk [vmem:[%s443 + $0x28] sm:$0xf] %vm1421, %v1900
      %1917 = vst.msk [vmem:[%s443 + $0x2c] sm:$0xf] %vm1421, %v1901
      %1918 = vst.msk [vmem:[%s443 + $0x30] sm:$0xf] %vm1421, %v1902
      %1919 = vst.msk [vmem:[%s443 + $0x34] sm:$0xf] %vm1421, %v1903
      %1920 = vst.msk [vmem:[%s443 + $0x38] sm:$0xf] %vm1421, %v1904
      %1921 = vst.msk [vmem:[%s443 + $0x3c] sm:$0xf] %vm1421, %v1905
      %s1922 = scalar_lea.vmem %s4, 64
      %v1923 = vld [vmem:[%s1922] sm:$0xf]
      %v1924 = vld [vmem:[%s1922 + $0x4] sm:$0xf]
      %v1925 = vld [vmem:[%s1922 + $0x8] sm:$0xf]
      %v1926 = vld [vmem:[%s1922 + $0xc] sm:$0xf]
      %v1927 = vld [vmem:[%s1922 + $0x10] sm:$0xf]
      %v1928 = vld [vmem:[%s1922 + $0x14] sm:$0xf]
      %v1929 = vld [vmem:[%s1922 + $0x18] sm:$0xf]
      %v1930 = vld [vmem:[%s1922 + $0x1c] sm:$0xf]
      %v1931 = vld [vmem:[%s1922 + $0x20] sm:$0xf]
      %v1932 = vld [vmem:[%s1922 + $0x24] sm:$0xf]
      %v1933 = vld [vmem:[%s1922 + $0x28] sm:$0xf]
      %v1934 = vld [vmem:[%s1922 + $0x2c] sm:$0xf]
      %v1935 = vld [vmem:[%s1922 + $0x30] sm:$0xf]
      %v1936 = vld [vmem:[%s1922 + $0x34] sm:$0xf]
      %v1937 = vld [vmem:[%s1922 + $0x38] sm:$0xf]
      %v1938 = vld [vmem:[%s1922 + $0x3c] sm:$0xf]
      %v1955 = vunpack.c.l.b16 %v1923
      %v1956 = vunpack.c.l.b16 %v1924
      %v1957 = vunpack.c.l.b16 %v1925
      %v1958 = vunpack.c.l.b16 %v1926
      %v1959 = vunpack.c.l.b16 %v1927
      %v1960 = vunpack.c.l.b16 %v1928
      %v1961 = vunpack.c.l.b16 %v1929
      %v1962 = vunpack.c.l.b16 %v1930
      %v1963 = vunpack.c.l.b16 %v1931
      %v1964 = vunpack.c.l.b16 %v1932
      %v1965 = vunpack.c.l.b16 %v1933
      %v1966 = vunpack.c.l.b16 %v1934
      %v1967 = vunpack.c.l.b16 %v1935
      %v1968 = vunpack.c.l.b16 %v1936
      %v1969 = vunpack.c.l.b16 %v1937
      %v1970 = vunpack.c.l.b16 %v1938
      %v1971 = vpack.c.b16 %v1956, %v1955
      %v1972 = vpack.c.b16 %v1958, %v1957
      %v1973 = vpack.c.b16 %v1960, %v1959
      %v1974 = vpack.c.b16 %v1962, %v1961
      %v1975 = vpack.c.b16 %v1964, %v1963
      %v1976 = vpack.c.b16 %v1966, %v1965
      %v1977 = vpack.c.b16 %v1968, %v1967
      %v1978 = vpack.c.b16 %v1970, %v1969
      %1987 = vmatpush.bf16.msra.mxu0 %v1978
      %1988 = vmatpush.bf16.msra.mxu0 %v1977
      %1989 = vmatpush.bf16.msra.mxu0 %v1976
      %1990 = vmatpush.bf16.msra.mxu0 %v1975
      %1991 = vmatpush.bf16.msra.mxu0 %v1974
      %1992 = vmatpush.bf16.msra.mxu0 %v1973
      %1993 = vmatpush.bf16.msra.mxu0 %v1972
      %1994 = vmatpush.bf16.msra.mxu0 %v1971
      %1995 = vmatmul.bf16.gmra.mxu0 %v1196
      %v1996 = vpop.f32.mrf.mxu0
      %v1997 = vadd.f32 0.0, %v1996
      %v1998 = vpop.f32.mrf.mxu0
      %v1999 = vadd.f32 0.0, %v1998
      %2000 = vmatmul.bf16.gmra.mxu0 %v1197
      %v2001 = vpop.f32.mrf.mxu0
      %v2002 = vadd.f32 0.0, %v2001
      %v2003 = vpop.f32.mrf.mxu0
      %v2004 = vadd.f32 0.0, %v2003
      %2005 = vmatmul.bf16.gmra.mxu0 %v1198
      %v2006 = vpop.f32.mrf.mxu0
      %v2007 = vadd.f32 0.0, %v2006
      %v2008 = vpop.f32.mrf.mxu0
      %v2009 = vadd.f32 0.0, %v2008
      %2010 = vmatmul.bf16.gmra.mxu0 %v1199
      %v2011 = vpop.f32.mrf.mxu0
      %v2012 = vadd.f32 0.0, %v2011
      %v2013 = vpop.f32.mrf.mxu0
      %v2014 = vadd.f32 0.0, %v2013
      %2015 = vmatmul.bf16.gmra.mxu0 %v1200
      %v2016 = vpop.f32.mrf.mxu0
      %v2017 = vadd.f32 0.0, %v2016
      %v2018 = vpop.f32.mrf.mxu0
      %v2019 = vadd.f32 0.0, %v2018
      %2020 = vmatmul.bf16.gmra.mxu0 %v1201
      %v2021 = vpop.f32.mrf.mxu0
      %v2022 = vadd.f32 0.0, %v2021
      %v2023 = vpop.f32.mrf.mxu0
      %v2024 = vadd.f32 0.0, %v2023
      %2025 = vmatmul.bf16.gmra.mxu0 %v1202
      %v2026 = vpop.f32.mrf.mxu0
      %v2027 = vadd.f32 0.0, %v2026
      %v2028 = vpop.f32.mrf.mxu0
      %v2029 = vadd.f32 0.0, %v2028
      %2030 = vmatmul.bf16.gmra.mxu0 %v1203
      %v2031 = vpop.f32.mrf.mxu0
      %v2032 = vadd.f32 0.0, %v2031
      %v2033 = vpop.f32.mrf.mxu0
      %v2034 = vadd.f32 0.0, %v2033
      %2035 = vmatmul.bf16.gmra.mxu0 %v1204
      %v2036 = vpop.f32.mrf.mxu0
      %v2037 = vadd.f32 0.0, %v2036
      %v2038 = vpop.f32.mrf.mxu0
      %v2039 = vadd.f32 0.0, %v2038
      %2040 = vmatmul.bf16.gmra.mxu0 %v1205
      %v2041 = vpop.f32.mrf.mxu0
      %v2042 = vadd.f32 0.0, %v2041
      %v2043 = vpop.f32.mrf.mxu0
      %v2044 = vadd.f32 0.0, %v2043
      %2045 = vmatmul.bf16.gmra.mxu0 %v1206
      %v2046 = vpop.f32.mrf.mxu0
      %v2047 = vadd.f32 0.0, %v2046
      %v2048 = vpop.f32.mrf.mxu0
      %v2049 = vadd.f32 0.0, %v2048
      %2050 = vmatmul.bf16.gmra.mxu0 %v1207
      %v2051 = vpop.f32.mrf.mxu0
      %v2052 = vadd.f32 0.0, %v2051
      %v2053 = vpop.f32.mrf.mxu0
      %v2054 = vadd.f32 0.0, %v2053
      %2055 = vmatmul.bf16.gmra.mxu0 %v1208
      %v2056 = vpop.f32.mrf.mxu0
      %v2057 = vadd.f32 0.0, %v2056
      %v2058 = vpop.f32.mrf.mxu0
      %v2059 = vadd.f32 0.0, %v2058
      %2060 = vmatmul.bf16.gmra.mxu0 %v1209
      %v2061 = vpop.f32.mrf.mxu0
      %v2062 = vadd.f32 0.0, %v2061
      %v2063 = vpop.f32.mrf.mxu0
      %v2064 = vadd.f32 0.0, %v2063
      %2065 = vmatmul.bf16.gmra.mxu0 %v1210
      %v2066 = vpop.f32.mrf.mxu0
      %v2067 = vadd.f32 0.0, %v2066
      %v2068 = vpop.f32.mrf.mxu0
      %v2069 = vadd.f32 0.0, %v2068
      %2070 = vmatmul.bf16.gmra.mxu0 %v1211
      %v2071 = vpop.f32.mrf.mxu0
      %v2072 = vadd.f32 0.0, %v2071
      %v2073 = vpop.f32.mrf.mxu0
      %v2074 = vadd.f32 0.0, %v2073
      %2075 = vdwg.mxu0
      %v2076 = vpack.c.bf16 %v1997, %v1997
      %v2077 = vpack.c.bf16 %v1999, %v1999
      %v2078 = vpack.c.bf16 %v2002, %v2002
      %v2079 = vpack.c.bf16 %v2004, %v2004
      %v2080 = vpack.c.bf16 %v2007, %v2007
      %v2081 = vpack.c.bf16 %v2009, %v2009
      %v2082 = vpack.c.bf16 %v2012, %v2012
      %v2083 = vpack.c.bf16 %v2014, %v2014
      %v2084 = vpack.c.bf16 %v2017, %v2017
      %v2085 = vpack.c.bf16 %v2019, %v2019
      %v2086 = vpack.c.bf16 %v2022, %v2022
      %v2087 = vpack.c.bf16 %v2024, %v2024
      %v2088 = vpack.c.bf16 %v2027, %v2027
      %v2089 = vpack.c.bf16 %v2029, %v2029
      %v2090 = vpack.c.bf16 %v2032, %v2032
      %v2091 = vpack.c.bf16 %v2034, %v2034
      %v2092 = vpack.c.bf16 %v2037, %v2037
      %v2093 = vpack.c.bf16 %v2039, %v2039
      %v2094 = vpack.c.bf16 %v2042, %v2042
      %v2095 = vpack.c.bf16 %v2044, %v2044
      %v2096 = vpack.c.bf16 %v2047, %v2047
      %v2097 = vpack.c.bf16 %v2049, %v2049
      %v2098 = vpack.c.bf16 %v2052, %v2052
      %v2099 = vpack.c.bf16 %v2054, %v2054
      %v2100 = vpack.c.bf16 %v2057, %v2057
      %v2101 = vpack.c.bf16 %v2059, %v2059
      %v2102 = vpack.c.bf16 %v2062, %v2062
      %v2103 = vpack.c.bf16 %v2064, %v2064
      %v2104 = vpack.c.bf16 %v2067, %v2067
      %v2105 = vpack.c.bf16 %v2069, %v2069
      %v2106 = vpack.c.bf16 %v2072, %v2072
      %v2107 = vpack.c.bf16 %v2074, %v2074
      %s2108 = scalar_lea.vmem %s428, 128
      %2109 = vst.msk [vmem:[%s2108] sm:$0xf] %vm1421, %v2076
      %2110 = vst.msk [vmem:[%s2108 + $0x4] sm:$0xf] %vm1421, %v2077
      %2111 = vst.msk [vmem:[%s2108 + $0x8] sm:$0xf] %vm1421, %v2078
      %2112 = vst.msk [vmem:[%s2108 + $0xc] sm:$0xf] %vm1421, %v2079
      %2113 = vst.msk [vmem:[%s2108 + $0x10] sm:$0xf] %vm1421, %v2080
      %2114 = vst.msk [vmem:[%s2108 + $0x14] sm:$0xf] %vm1421, %v2081
      %2115 = vst.msk [vmem:[%s2108 + $0x18] sm:$0xf] %vm1421, %v2082
      %2116 = vst.msk [vmem:[%s2108 + $0x1c] sm:$0xf] %vm1421, %v2083
      %2117 = vst.msk [vmem:[%s2108 + $0x20] sm:$0xf] %vm1421, %v2084
      %2118 = vst.msk [vmem:[%s2108 + $0x24] sm:$0xf] %vm1421, %v2085
      %2119 = vst.msk [vmem:[%s2108 + $0x28] sm:$0xf] %vm1421, %v2086
      %2120 = vst.msk [vmem:[%s2108 + $0x2c] sm:$0xf] %vm1421, %v2087
      %2121 = vst.msk [vmem:[%s2108 + $0x30] sm:$0xf] %vm1421, %v2088
      %2122 = vst.msk [vmem:[%s2108 + $0x34] sm:$0xf] %vm1421, %v2089
      %2123 = vst.msk [vmem:[%s2108 + $0x38] sm:$0xf] %vm1421, %v2090
      %2124 = vst.msk [vmem:[%s2108 + $0x3c] sm:$0xf] %vm1421, %v2091
      %2125 = vst.msk [vmem:[%s2108 + $0x40] sm:$0xf] %vm1421, %v2092
      %2126 = vst.msk [vmem:[%s2108 + $0x44] sm:$0xf] %vm1421, %v2093
      %2127 = vst.msk [vmem:[%s2108 + $0x48] sm:$0xf] %vm1421, %v2094
      %2128 = vst.msk [vmem:[%s2108 + $0x4c] sm:$0xf] %vm1421, %v2095
      %2129 = vst.msk [vmem:[%s2108 + $0x50] sm:$0xf] %vm1421, %v2096
      %2130 = vst.msk [vmem:[%s2108 + $0x54] sm:$0xf] %vm1421, %v2097
      %2131 = vst.msk [vmem:[%s2108 + $0x58] sm:$0xf] %vm1421, %v2098
      %2132 = vst.msk [vmem:[%s2108 + $0x5c] sm:$0xf] %vm1421, %v2099
      %2133 = vst.msk [vmem:[%s2108 + $0x60] sm:$0xf] %vm1421, %v2100
      %2134 = vst.msk [vmem:[%s2108 + $0x64] sm:$0xf] %vm1421, %v2101
      %2135 = vst.msk [vmem:[%s2108 + $0x68] sm:$0xf] %vm1421, %v2102
      %2136 = vst.msk [vmem:[%s2108 + $0x6c] sm:$0xf] %vm1421, %v2103
      %2137 = vst.msk [vmem:[%s2108 + $0x70] sm:$0xf] %vm1421, %v2104
      %2138 = vst.msk [vmem:[%s2108 + $0x74] sm:$0xf] %vm1421, %v2105
      %2139 = vst.msk [vmem:[%s2108 + $0x78] sm:$0xf] %vm1421, %v2106
      %2140 = vst.msk [vmem:[%s2108 + $0x7c] sm:$0xf] %vm1421, %v2107
      %s2141 = scalar_lea.vmem %s5, 64
      %v2142 = vld [vmem:[%s2141] sm:$0xf]
      %v2143 = vld [vmem:[%s2141 + $0x4] sm:$0xf]
      %v2144 = vld [vmem:[%s2141 + $0x8] sm:$0xf]
      %v2145 = vld [vmem:[%s2141 + $0xc] sm:$0xf]
      %v2146 = vld [vmem:[%s2141 + $0x10] sm:$0xf]
      %v2147 = vld [vmem:[%s2141 + $0x14] sm:$0xf]
      %v2148 = vld [vmem:[%s2141 + $0x18] sm:$0xf]
      %v2149 = vld [vmem:[%s2141 + $0x1c] sm:$0xf]
      %v2150 = vld [vmem:[%s2141 + $0x20] sm:$0xf]
      %v2151 = vld [vmem:[%s2141 + $0x24] sm:$0xf]
      %v2152 = vld [vmem:[%s2141 + $0x28] sm:$0xf]
      %v2153 = vld [vmem:[%s2141 + $0x2c] sm:$0xf]
      %v2154 = vld [vmem:[%s2141 + $0x30] sm:$0xf]
      %v2155 = vld [vmem:[%s2141 + $0x34] sm:$0xf]
      %v2156 = vld [vmem:[%s2141 + $0x38] sm:$0xf]
      %v2157 = vld [vmem:[%s2141 + $0x3c] sm:$0xf]
      %v2174 = vunpack.c.l.b16 %v2142
      %v2175 = vunpack.c.l.b16 %v2143
      %v2176 = vunpack.c.l.b16 %v2144
      %v2177 = vunpack.c.l.b16 %v2145
      %v2178 = vunpack.c.l.b16 %v2146
      %v2179 = vunpack.c.l.b16 %v2147
      %v2180 = vunpack.c.l.b16 %v2148
      %v2181 = vunpack.c.l.b16 %v2149
      %v2182 = vunpack.c.l.b16 %v2150
      %v2183 = vunpack.c.l.b16 %v2151
      %v2184 = vunpack.c.l.b16 %v2152
      %v2185 = vunpack.c.l.b16 %v2153
      %v2186 = vunpack.c.l.b16 %v2154
      %v2187 = vunpack.c.l.b16 %v2155
      %v2188 = vunpack.c.l.b16 %v2156
      %v2189 = vunpack.c.l.b16 %v2157
      %v2190 = vpack.c.b16 %v2175, %v2174
      %v2191 = vpack.c.b16 %v2177, %v2176
      %v2192 = vpack.c.b16 %v2179, %v2178
      %v2193 = vpack.c.b16 %v2181, %v2180
      %v2194 = vpack.c.b16 %v2183, %v2182
      %v2195 = vpack.c.b16 %v2185, %v2184
      %v2196 = vpack.c.b16 %v2187, %v2186
      %v2197 = vpack.c.b16 %v2189, %v2188
      %2206 = vmatpush.bf16.msra.mxu0 %v2197
      %2207 = vmatpush.bf16.msra.mxu0 %v2196
      %2208 = vmatpush.bf16.msra.mxu0 %v2195
      %2209 = vmatpush.bf16.msra.mxu0 %v2194
      %2210 = vmatpush.bf16.msra.mxu0 %v2193
      %2211 = vmatpush.bf16.msra.mxu0 %v2192
      %2212 = vmatpush.bf16.msra.mxu0 %v2191
      %2213 = vmatpush.bf16.msra.mxu0 %v2190
      %2214 = vmatmul.bf16.gmra.mxu0 %v1196
      %v2215 = vpop.f32.mrf.mxu0
      %v2216 = vadd.f32 0.0, %v2215
      %v2217 = vpop.f32.mrf.mxu0
      %v2218 = vadd.f32 0.0, %v2217
      %2219 = vmatmul.bf16.gmra.mxu0 %v1197
      %v2220 = vpop.f32.mrf.mxu0
      %v2221 = vadd.f32 0.0, %v2220
      %v2222 = vpop.f32.mrf.mxu0
      %v2223 = vadd.f32 0.0, %v2222
      %2224 = vmatmul.bf16.gmra.mxu0 %v1198
      %v2225 = vpop.f32.mrf.mxu0
      %v2226 = vadd.f32 0.0, %v2225
      %v2227 = vpop.f32.mrf.mxu0
      %v2228 = vadd.f32 0.0, %v2227
      %2229 = vmatmul.bf16.gmra.mxu0 %v1199
      %v2230 = vpop.f32.mrf.mxu0
      %v2231 = vadd.f32 0.0, %v2230
      %v2232 = vpop.f32.mrf.mxu0
      %v2233 = vadd.f32 0.0, %v2232
      %2234 = vmatmul.bf16.gmra.mxu0 %v1200
      %v2235 = vpop.f32.mrf.mxu0
      %v2236 = vadd.f32 0.0, %v2235
      %v2237 = vpop.f32.mrf.mxu0
      %v2238 = vadd.f32 0.0, %v2237
      %2239 = vmatmul.bf16.gmra.mxu0 %v1201
      %v2240 = vpop.f32.mrf.mxu0
      %v2241 = vadd.f32 0.0, %v2240
      %v2242 = vpop.f32.mrf.mxu0
      %v2243 = vadd.f32 0.0, %v2242
      %2244 = vmatmul.bf16.gmra.mxu0 %v1202
      %v2245 = vpop.f32.mrf.mxu0
      %v2246 = vadd.f32 0.0, %v2245
      %v2247 = vpop.f32.mrf.mxu0
      %v2248 = vadd.f32 0.0, %v2247
      %2249 = vmatmul.bf16.gmra.mxu0 %v1203
      %v2250 = vpop.f32.mrf.mxu0
      %v2251 = vadd.f32 0.0, %v2250
      %v2252 = vpop.f32.mrf.mxu0
      %v2253 = vadd.f32 0.0, %v2252
      %2254 = vmatmul.bf16.gmra.mxu0 %v1204
      %v2255 = vpop.f32.mrf.mxu0
      %v2256 = vadd.f32 0.0, %v2255
      %v2257 = vpop.f32.mrf.mxu0
      %v2258 = vadd.f32 0.0, %v2257
      %2259 = vmatmul.bf16.gmra.mxu0 %v1205
      %v2260 = vpop.f32.mrf.mxu0
      %v2261 = vadd.f32 0.0, %v2260
      %v2262 = vpop.f32.mrf.mxu0
      %v2263 = vadd.f32 0.0, %v2262
      %2264 = vmatmul.bf16.gmra.mxu0 %v1206
      %v2265 = vpop.f32.mrf.mxu0
      %v2266 = vadd.f32 0.0, %v2265
      %v2267 = vpop.f32.mrf.mxu0
      %v2268 = vadd.f32 0.0, %v2267
      %2269 = vmatmul.bf16.gmra.mxu0 %v1207
      %v2270 = vpop.f32.mrf.mxu0
      %v2271 = vadd.f32 0.0, %v2270
      %v2272 = vpop.f32.mrf.mxu0
      %v2273 = vadd.f32 0.0, %v2272
      %2274 = vmatmul.bf16.gmra.mxu0 %v1208
      %v2275 = vpop.f32.mrf.mxu0
      %v2276 = vadd.f32 0.0, %v2275
      %v2277 = vpop.f32.mrf.mxu0
      %v2278 = vadd.f32 0.0, %v2277
      %2279 = vmatmul.bf16.gmra.mxu0 %v1209
      %v2280 = vpop.f32.mrf.mxu0
      %v2281 = vadd.f32 0.0, %v2280
      %v2282 = vpop.f32.mrf.mxu0
      %v2283 = vadd.f32 0.0, %v2282
      %2284 = vmatmul.bf16.gmra.mxu0 %v1210
      %v2285 = vpop.f32.mrf.mxu0
      %v2286 = vadd.f32 0.0, %v2285
      %v2287 = vpop.f32.mrf.mxu0
      %v2288 = vadd.f32 0.0, %v2287
      %2289 = vmatmul.bf16.gmra.mxu0 %v1211
      %v2290 = vpop.f32.mrf.mxu0
      %v2291 = vadd.f32 0.0, %v2290
      %v2292 = vpop.f32.mrf.mxu0
      %v2293 = vadd.f32 0.0, %v2292
      %2294 = vdwg.mxu0
      %v2295 = vpack.c.bf16 %v2216, %v2216
      %v2296 = vpack.c.bf16 %v2218, %v2218
      %v2297 = vpack.c.bf16 %v2221, %v2221
      %v2298 = vpack.c.bf16 %v2223, %v2223
      %v2299 = vpack.c.bf16 %v2226, %v2226
      %v2300 = vpack.c.bf16 %v2228, %v2228
      %v2301 = vpack.c.bf16 %v2231, %v2231
      %v2302 = vpack.c.bf16 %v2233, %v2233
      %v2303 = vpack.c.bf16 %v2236, %v2236
      %v2304 = vpack.c.bf16 %v2238, %v2238
      %v2305 = vpack.c.bf16 %v2241, %v2241
      %v2306 = vpack.c.bf16 %v2243, %v2243
      %v2307 = vpack.c.bf16 %v2246, %v2246
      %v2308 = vpack.c.bf16 %v2248, %v2248
      %v2309 = vpack.c.bf16 %v2251, %v2251
      %v2310 = vpack.c.bf16 %v2253, %v2253
      %v2311 = vpack.c.bf16 %v2256, %v2256
      %v2312 = vpack.c.bf16 %v2258, %v2258
      %v2313 = vpack.c.bf16 %v2261, %v2261
      %v2314 = vpack.c.bf16 %v2263, %v2263
      %v2315 = vpack.c.bf16 %v2266, %v2266
      %v2316 = vpack.c.bf16 %v2268, %v2268
      %v2317 = vpack.c.bf16 %v2271, %v2271
      %v2318 = vpack.c.bf16 %v2273, %v2273
      %v2319 = vpack.c.bf16 %v2276, %v2276
      %v2320 = vpack.c.bf16 %v2278, %v2278
      %v2321 = vpack.c.bf16 %v2281, %v2281
      %v2322 = vpack.c.bf16 %v2283, %v2283
      %v2323 = vpack.c.bf16 %v2286, %v2286
      %v2324 = vpack.c.bf16 %v2288, %v2288
      %v2325 = vpack.c.bf16 %v2291, %v2291
      %v2326 = vpack.c.bf16 %v2293, %v2293
      %s2327 = scalar_lea.vmem %s433, 128
      %2328 = vst.msk [vmem:[%s2327] sm:$0xf] %vm1421, %v2295
      %2329 = vst.msk [vmem:[%s2327 + $0x4] sm:$0xf] %vm1421, %v2296
      %2330 = vst.msk [vmem:[%s2327 + $0x8] sm:$0xf] %vm1421, %v2297
      %2331 = vst.msk [vmem:[%s2327 + $0xc] sm:$0xf] %vm1421, %v2298
      %2332 = vst.msk [vmem:[%s2327 + $0x10] sm:$0xf] %vm1421, %v2299
      %2333 = vst.msk [vmem:[%s2327 + $0x14] sm:$0xf] %vm1421, %v2300
      %2334 = vst.msk [vmem:[%s2327 + $0x18] sm:$0xf] %vm1421, %v2301
      %2335 = vst.msk [vmem:[%s2327 + $0x1c] sm:$0xf] %vm1421, %v2302
      %2336 = vst.msk [vmem:[%s2327 + $0x20] sm:$0xf] %vm1421, %v2303
      %2337 = vst.msk [vmem:[%s2327 + $0x24] sm:$0xf] %vm1421, %v2304
      %2338 = vst.msk [vmem:[%s2327 + $0x28] sm:$0xf] %vm1421, %v2305
      %2339 = vst.msk [vmem:[%s2327 + $0x2c] sm:$0xf] %vm1421, %v2306
      %2340 = vst.msk [vmem:[%s2327 + $0x30] sm:$0xf] %vm1421, %v2307
      %2341 = vst.msk [vmem:[%s2327 + $0x34] sm:$0xf] %vm1421, %v2308
      %2342 = vst.msk [vmem:[%s2327 + $0x38] sm:$0xf] %vm1421, %v2309
      %2343 = vst.msk [vmem:[%s2327 + $0x3c] sm:$0xf] %vm1421, %v2310
      %2344 = vst.msk [vmem:[%s2327 + $0x40] sm:$0xf] %vm1421, %v2311
      %2345 = vst.msk [vmem:[%s2327 + $0x44] sm:$0xf] %vm1421, %v2312
      %2346 = vst.msk [vmem:[%s2327 + $0x48] sm:$0xf] %vm1421, %v2313
      %2347 = vst.msk [vmem:[%s2327 + $0x4c] sm:$0xf] %vm1421, %v2314
      %2348 = vst.msk [vmem:[%s2327 + $0x50] sm:$0xf] %vm1421, %v2315
      %2349 = vst.msk [vmem:[%s2327 + $0x54] sm:$0xf] %vm1421, %v2316
      %2350 = vst.msk [vmem:[%s2327 + $0x58] sm:$0xf] %vm1421, %v2317
      %2351 = vst.msk [vmem:[%s2327 + $0x5c] sm:$0xf] %vm1421, %v2318
      %2352 = vst.msk [vmem:[%s2327 + $0x60] sm:$0xf] %vm1421, %v2319
      %2353 = vst.msk [vmem:[%s2327 + $0x64] sm:$0xf] %vm1421, %v2320
      %2354 = vst.msk [vmem:[%s2327 + $0x68] sm:$0xf] %vm1421, %v2321
      %2355 = vst.msk [vmem:[%s2327 + $0x6c] sm:$0xf] %vm1421, %v2322
      %2356 = vst.msk [vmem:[%s2327 + $0x70] sm:$0xf] %vm1421, %v2323
      %2357 = vst.msk [vmem:[%s2327 + $0x74] sm:$0xf] %vm1421, %v2324
      %2358 = vst.msk [vmem:[%s2327 + $0x78] sm:$0xf] %vm1421, %v2325
      %2359 = vst.msk [vmem:[%s2327 + $0x7c] sm:$0xf] %vm1421, %v2326
      %s2360 = scalar_lea.vmem %s6, 32
      %v2361 = vld [vmem:[%s2360] sm:$0xf]
      %v2362 = vld [vmem:[%s2360 + $0x4] sm:$0xf]
      %v2363 = vld [vmem:[%s2360 + $0x8] sm:$0xf]
      %v2364 = vld [vmem:[%s2360 + $0xc] sm:$0xf]
      %v2365 = vld [vmem:[%s2360 + $0x10] sm:$0xf]
      %v2366 = vld [vmem:[%s2360 + $0x14] sm:$0xf]
      %v2367 = vld [vmem:[%s2360 + $0x18] sm:$0xf]
      %v2368 = vld [vmem:[%s2360 + $0x1c] sm:$0xf]
      %v2377 = vunpack.c.l.b16 %v2361
      %v2378 = vunpack.c.l.b16 %v2362
      %v2379 = vunpack.c.l.b16 %v2363
      %v2380 = vunpack.c.l.b16 %v2364
      %v2381 = vunpack.c.l.b16 %v2365
      %v2382 = vunpack.c.l.b16 %v2366
      %v2383 = vunpack.c.l.b16 %v2367
      %v2384 = vunpack.c.l.b16 %v2368
      %v2385 = vpack.c.b16 %v2378, %v2377
      %v2386 = vpack.c.b16 %v2380, %v2379
      %v2387 = vpack.c.b16 %v2382, %v2381
      %v2388 = vpack.c.b16 %v2384, %v2383
      %2393 = vmatpush.bf16.msra.mxu0 0
      %2394 = vmatpush.bf16.msra.mxu0 0
      %2395 = vmatpush.bf16.msra.mxu0 0
      %2396 = vmatpush.bf16.msra.mxu0 0
      %2397 = vmatpush.bf16.msra.mxu0 %v2388
      %2398 = vmatpush.bf16.msra.mxu0 %v2387
      %2399 = vmatpush.bf16.msra.mxu0 %v2386
      %2400 = vmatpush.bf16.msra.mxu0 %v2385
      %2401 = vmatmul.bf16.gmra.mxu0 %v1705
      %v2402 = vpop.f32.mrf.mxu0
      %v2403 = vadd.f32 0.0, %v2402
      %v2404 = vpop.f32.mrf.mxu0
      %v2405 = vadd.f32 0.0, %v2404
      %2406 = vmatmul.bf16.gmra.mxu0 %v1708
      %v2407 = vpop.f32.mrf.mxu0
      %v2408 = vadd.f32 0.0, %v2407
      %v2409 = vpop.f32.mrf.mxu0
      %v2410 = vadd.f32 0.0, %v2409
      %2411 = vmatmul.bf16.gmra.mxu0 %v1711
      %v2412 = vpop.f32.mrf.mxu0
      %v2413 = vadd.f32 0.0, %v2412
      %v2414 = vpop.f32.mrf.mxu0
      %v2415 = vadd.f32 0.0, %v2414
      %2416 = vmatmul.bf16.gmra.mxu0 %v1714
      %v2417 = vpop.f32.mrf.mxu0
      %v2418 = vadd.f32 0.0, %v2417
      %v2419 = vpop.f32.mrf.mxu0
      %v2420 = vadd.f32 0.0, %v2419
      %2421 = vmatmul.bf16.gmra.mxu0 %v1717
      %v2422 = vpop.f32.mrf.mxu0
      %v2423 = vadd.f32 0.0, %v2422
      %v2424 = vpop.f32.mrf.mxu0
      %v2425 = vadd.f32 0.0, %v2424
      %2426 = vmatmul.bf16.gmra.mxu0 %v1720
      %v2427 = vpop.f32.mrf.mxu0
      %v2428 = vadd.f32 0.0, %v2427
      %v2429 = vpop.f32.mrf.mxu0
      %v2430 = vadd.f32 0.0, %v2429
      %2431 = vmatmul.bf16.gmra.mxu0 %v1723
      %v2432 = vpop.f32.mrf.mxu0
      %v2433 = vadd.f32 0.0, %v2432
      %v2434 = vpop.f32.mrf.mxu0
      %v2435 = vadd.f32 0.0, %v2434
      %2436 = vmatmul.bf16.gmra.mxu0 %v1726
      %v2437 = vpop.f32.mrf.mxu0
      %v2438 = vadd.f32 0.0, %v2437
      %v2439 = vpop.f32.mrf.mxu0
      %v2440 = vadd.f32 0.0, %v2439
      %2441 = vdwg.mxu0
      %v2442 = vpack.c.bf16 %v2403, %v2403
      %v2443 = vpack.c.bf16 %v2405, %v2405
      %v2444 = vpack.c.bf16 %v2408, %v2408
      %v2445 = vpack.c.bf16 %v2410, %v2410
      %v2446 = vpack.c.bf16 %v2413, %v2413
      %v2447 = vpack.c.bf16 %v2415, %v2415
      %v2448 = vpack.c.bf16 %v2418, %v2418
      %v2449 = vpack.c.bf16 %v2420, %v2420
      %v2450 = vpack.c.bf16 %v2423, %v2423
      %v2451 = vpack.c.bf16 %v2425, %v2425
      %v2452 = vpack.c.bf16 %v2428, %v2428
      %v2453 = vpack.c.bf16 %v2430, %v2430
      %v2454 = vpack.c.bf16 %v2433, %v2433
      %v2455 = vpack.c.bf16 %v2435, %v2435
      %v2456 = vpack.c.bf16 %v2438, %v2438
      %v2457 = vpack.c.bf16 %v2440, %v2440
      %s2458 = scalar_lea.vmem %s438, 64
      %2459 = vst.msk [vmem:[%s2458] sm:$0xf] %vm1421, %v2442
      %2460 = vst.msk [vmem:[%s2458 + $0x4] sm:$0xf] %vm1421, %v2443
      %2461 = vst.msk [vmem:[%s2458 + $0x8] sm:$0xf] %vm1421, %v2444
      %2462 = vst.msk [vmem:[%s2458 + $0xc] sm:$0xf] %vm1421, %v2445
      %2463 = vst.msk [vmem:[%s2458 + $0x10] sm:$0xf] %vm1421, %v2446
      %2464 = vst.msk [vmem:[%s2458 + $0x14] sm:$0xf] %vm1421, %v2447
      %2465 = vst.msk [vmem:[%s2458 + $0x18] sm:$0xf] %vm1421, %v2448
      %2466 = vst.msk [vmem:[%s2458 + $0x1c] sm:$0xf] %vm1421, %v2449
      %2467 = vst.msk [vmem:[%s2458 + $0x20] sm:$0xf] %vm1421, %v2450
      %2468 = vst.msk [vmem:[%s2458 + $0x24] sm:$0xf] %vm1421, %v2451
      %2469 = vst.msk [vmem:[%s2458 + $0x28] sm:$0xf] %vm1421, %v2452
      %2470 = vst.msk [vmem:[%s2458 + $0x2c] sm:$0xf] %vm1421, %v2453
      %2471 = vst.msk [vmem:[%s2458 + $0x30] sm:$0xf] %vm1421, %v2454
      %2472 = vst.msk [vmem:[%s2458 + $0x34] sm:$0xf] %vm1421, %v2455
      %2473 = vst.msk [vmem:[%s2458 + $0x38] sm:$0xf] %vm1421, %v2456
      %2474 = vst.msk [vmem:[%s2458 + $0x3c] sm:$0xf] %vm1421, %v2457
      %s2475 = scalar_lea.vmem %s7, 32
      %v2476 = vld [vmem:[%s2475] sm:$0xf]
      %v2477 = vld [vmem:[%s2475 + $0x4] sm:$0xf]
      %v2478 = vld [vmem:[%s2475 + $0x8] sm:$0xf]
      %v2479 = vld [vmem:[%s2475 + $0xc] sm:$0xf]
      %v2480 = vld [vmem:[%s2475 + $0x10] sm:$0xf]
      %v2481 = vld [vmem:[%s2475 + $0x14] sm:$0xf]
      %v2482 = vld [vmem:[%s2475 + $0x18] sm:$0xf]
      %v2483 = vld [vmem:[%s2475 + $0x1c] sm:$0xf]
      %v2492 = vunpack.c.l.b16 %v2476
      %v2493 = vunpack.c.l.b16 %v2477
      %v2494 = vunpack.c.l.b16 %v2478
      %v2495 = vunpack.c.l.b16 %v2479
      %v2496 = vunpack.c.l.b16 %v2480
      %v2497 = vunpack.c.l.b16 %v2481
      %v2498 = vunpack.c.l.b16 %v2482
      %v2499 = vunpack.c.l.b16 %v2483
      %v2500 = vpack.c.b16 %v2493, %v2492
      %v2501 = vpack.c.b16 %v2495, %v2494
      %v2502 = vpack.c.b16 %v2497, %v2496
      %v2503 = vpack.c.b16 %v2499, %v2498
      %2508 = vmatpush.bf16.msra.mxu0 0
      %2509 = vmatpush.bf16.msra.mxu0 0
      %2510 = vmatpush.bf16.msra.mxu0 0
      %2511 = vmatpush.bf16.msra.mxu0 0
      %2512 = vmatpush.bf16.msra.mxu0 %v2503
      %2513 = vmatpush.bf16.msra.mxu0 %v2502
      %2514 = vmatpush.bf16.msra.mxu0 %v2501
      %2515 = vmatpush.bf16.msra.mxu0 %v2500
      %2516 = vmatmul.bf16.gmra.mxu0 %v1705
      %v2517 = vpop.f32.mrf.mxu0
      %v2518 = vadd.f32 0.0, %v2517
      %v2519 = vpop.f32.mrf.mxu0
      %v2520 = vadd.f32 0.0, %v2519
      %2521 = vmatmul.bf16.gmra.mxu0 %v1708
      %v2522 = vpop.f32.mrf.mxu0
      %v2523 = vadd.f32 0.0, %v2522
      %v2524 = vpop.f32.mrf.mxu0
      %v2525 = vadd.f32 0.0, %v2524
      %2526 = vmatmul.bf16.gmra.mxu0 %v1711
      %v2527 = vpop.f32.mrf.mxu0
      %v2528 = vadd.f32 0.0, %v2527
      %v2529 = vpop.f32.mrf.mxu0
      %v2530 = vadd.f32 0.0, %v2529
      %2531 = vmatmul.bf16.gmra.mxu0 %v1714
      %v2532 = vpop.f32.mrf.mxu0
      %v2533 = vadd.f32 0.0, %v2532
      %v2534 = vpop.f32.mrf.mxu0
      %v2535 = vadd.f32 0.0, %v2534
      %2536 = vmatmul.bf16.gmra.mxu0 %v1717
      %v2537 = vpop.f32.mrf.mxu0
      %v2538 = vadd.f32 0.0, %v2537
      %v2539 = vpop.f32.mrf.mxu0
      %v2540 = vadd.f32 0.0, %v2539
      %2541 = vmatmul.bf16.gmra.mxu0 %v1720
      %v2542 = vpop.f32.mrf.mxu0
      %v2543 = vadd.f32 0.0, %v2542
      %v2544 = vpop.f32.mrf.mxu0
      %v2545 = vadd.f32 0.0, %v2544
      %2546 = vmatmul.bf16.gmra.mxu0 %v1723
      %v2547 = vpop.f32.mrf.mxu0
      %v2548 = vadd.f32 0.0, %v2547
      %v2549 = vpop.f32.mrf.mxu0
      %v2550 = vadd.f32 0.0, %v2549
      %2551 = vmatmul.bf16.gmra.mxu0 %v1726
      %v2552 = vpop.f32.mrf.mxu0
      %v2553 = vadd.f32 0.0, %v2552
      %v2554 = vpop.f32.mrf.mxu0
      %v2555 = vadd.f32 0.0, %v2554
      %2556 = vdwg.mxu0
      %v2557 = vpack.c.bf16 %v2518, %v2518
      %v2558 = vpack.c.bf16 %v2520, %v2520
      %v2559 = vpack.c.bf16 %v2523, %v2523
      %v2560 = vpack.c.bf16 %v2525, %v2525
      %v2561 = vpack.c.bf16 %v2528, %v2528
      %v2562 = vpack.c.bf16 %v2530, %v2530
      %v2563 = vpack.c.bf16 %v2533, %v2533
      %v2564 = vpack.c.bf16 %v2535, %v2535
      %v2565 = vpack.c.bf16 %v2538, %v2538
      %v2566 = vpack.c.bf16 %v2540, %v2540
      %v2567 = vpack.c.bf16 %v2543, %v2543
      %v2568 = vpack.c.bf16 %v2545, %v2545
      %v2569 = vpack.c.bf16 %v2548, %v2548
      %v2570 = vpack.c.bf16 %v2550, %v2550
      %v2571 = vpack.c.bf16 %v2553, %v2553
      %v2572 = vpack.c.bf16 %v2555, %v2555
      %s2573 = scalar_lea.vmem %s443, 64
      %2574 = vst.msk [vmem:[%s2573] sm:$0xf] %vm1421, %v2557
      %2575 = vst.msk [vmem:[%s2573 + $0x4] sm:$0xf] %vm1421, %v2558
      %2576 = vst.msk [vmem:[%s2573 + $0x8] sm:$0xf] %vm1421, %v2559
      %2577 = vst.msk [vmem:[%s2573 + $0xc] sm:$0xf] %vm1421, %v2560
      %2578 = vst.msk [vmem:[%s2573 + $0x10] sm:$0xf] %vm1421, %v2561
      %2579 = vst.msk [vmem:[%s2573 + $0x14] sm:$0xf] %vm1421, %v2562
      %2580 = vst.msk [vmem:[%s2573 + $0x18] sm:$0xf] %vm1421, %v2563
      %2581 = vst.msk [vmem:[%s2573 + $0x1c] sm:$0xf] %vm1421, %v2564
      %2582 = vst.msk [vmem:[%s2573 + $0x20] sm:$0xf] %vm1421, %v2565
      %2583 = vst.msk [vmem:[%s2573 + $0x24] sm:$0xf] %vm1421, %v2566
      %2584 = vst.msk [vmem:[%s2573 + $0x28] sm:$0xf] %vm1421, %v2567
      %2585 = vst.msk [vmem:[%s2573 + $0x2c] sm:$0xf] %vm1421, %v2568
      %2586 = vst.msk [vmem:[%s2573 + $0x30] sm:$0xf] %vm1421, %v2569
      %2587 = vst.msk [vmem:[%s2573 + $0x34] sm:$0xf] %vm1421, %v2570
      %2588 = vst.msk [vmem:[%s2573 + $0x38] sm:$0xf] %vm1421, %v2571
      %2589 = vst.msk [vmem:[%s2573 + $0x3c] sm:$0xf] %vm1421, %v2572
      %s2590 = scalar_lea.vmem %s4, 128
      %v2591 = vld [vmem:[%s2590] sm:$0xf]
      %v2592 = vld [vmem:[%s2590 + $0x4] sm:$0xf]
      %v2593 = vld [vmem:[%s2590 + $0x8] sm:$0xf]
      %v2594 = vld [vmem:[%s2590 + $0xc] sm:$0xf]
      %v2595 = vld [vmem:[%s2590 + $0x10] sm:$0xf]
      %v2596 = vld [vmem:[%s2590 + $0x14] sm:$0xf]
      %v2597 = vld [vmem:[%s2590 + $0x18] sm:$0xf]
      %v2598 = vld [vmem:[%s2590 + $0x1c] sm:$0xf]
      %v2599 = vld [vmem:[%s2590 + $0x20] sm:$0xf]
      %v2600 = vld [vmem:[%s2590 + $0x24] sm:$0xf]
      %v2601 = vld [vmem:[%s2590 + $0x28] sm:$0xf]
      %v2602 = vld [vmem:[%s2590 + $0x2c] sm:$0xf]
      %v2603 = vld [vmem:[%s2590 + $0x30] sm:$0xf]
      %v2604 = vld [vmem:[%s2590 + $0x34] sm:$0xf]
      %v2605 = vld [vmem:[%s2590 + $0x38] sm:$0xf]
      %v2606 = vld [vmem:[%s2590 + $0x3c] sm:$0xf]
      %v2623 = vunpack.c.l.b16 %v2591
      %v2624 = vunpack.c.l.b16 %v2592
      %v2625 = vunpack.c.l.b16 %v2593
      %v2626 = vunpack.c.l.b16 %v2594
      %v2627 = vunpack.c.l.b16 %v2595
      %v2628 = vunpack.c.l.b16 %v2596
      %v2629 = vunpack.c.l.b16 %v2597
      %v2630 = vunpack.c.l.b16 %v2598
      %v2631 = vunpack.c.l.b16 %v2599
      %v2632 = vunpack.c.l.b16 %v2600
      %v2633 = vunpack.c.l.b16 %v2601
      %v2634 = vunpack.c.l.b16 %v2602
      %v2635 = vunpack.c.l.b16 %v2603
      %v2636 = vunpack.c.l.b16 %v2604
      %v2637 = vunpack.c.l.b16 %v2605
      %v2638 = vunpack.c.l.b16 %v2606
      %v2639 = vpack.c.b16 %v2624, %v2623
      %v2640 = vpack.c.b16 %v2626, %v2625
      %v2641 = vpack.c.b16 %v2628, %v2627
      %v2642 = vpack.c.b16 %v2630, %v2629
      %v2643 = vpack.c.b16 %v2632, %v2631
      %v2644 = vpack.c.b16 %v2634, %v2633
      %v2645 = vpack.c.b16 %v2636, %v2635
      %v2646 = vpack.c.b16 %v2638, %v2637
      %2655 = vmatpush.bf16.msra.mxu0 %v2646
      %2656 = vmatpush.bf16.msra.mxu0 %v2645
      %2657 = vmatpush.bf16.msra.mxu0 %v2644
      %2658 = vmatpush.bf16.msra.mxu0 %v2643
      %2659 = vmatpush.bf16.msra.mxu0 %v2642
      %2660 = vmatpush.bf16.msra.mxu0 %v2641
      %2661 = vmatpush.bf16.msra.mxu0 %v2640
      %2662 = vmatpush.bf16.msra.mxu0 %v2639
      %2663 = vmatmul.bf16.gmra.mxu0 %v1196
      %v2664 = vpop.f32.mrf.mxu0
      %v2665 = vadd.f32 0.0, %v2664
      %v2666 = vpop.f32.mrf.mxu0
      %v2667 = vadd.f32 0.0, %v2666
      %2668 = vmatmul.bf16.gmra.mxu0 %v1197
      %v2669 = vpop.f32.mrf.mxu0
      %v2670 = vadd.f32 0.0, %v2669
      %v2671 = vpop.f32.mrf.mxu0
      %v2672 = vadd.f32 0.0, %v2671
      %2673 = vmatmul.bf16.gmra.mxu0 %v1198
      %v2674 = vpop.f32.mrf.mxu0
      %v2675 = vadd.f32 0.0, %v2674
      %v2676 = vpop.f32.mrf.mxu0
      %v2677 = vadd.f32 0.0, %v2676
      %2678 = vmatmul.bf16.gmra.mxu0 %v1199
      %v2679 = vpop.f32.mrf.mxu0
      %v2680 = vadd.f32 0.0, %v2679
      %v2681 = vpop.f32.mrf.mxu0
      %v2682 = vadd.f32 0.0, %v2681
      %2683 = vmatmul.bf16.gmra.mxu0 %v1200
      %v2684 = vpop.f32.mrf.mxu0
      %v2685 = vadd.f32 0.0, %v2684
      %v2686 = vpop.f32.mrf.mxu0
      %v2687 = vadd.f32 0.0, %v2686
      %2688 = vmatmul.bf16.gmra.mxu0 %v1201
      %v2689 = vpop.f32.mrf.mxu0
      %v2690 = vadd.f32 0.0, %v2689
      %v2691 = vpop.f32.mrf.mxu0
      %v2692 = vadd.f32 0.0, %v2691
      %2693 = vmatmul.bf16.gmra.mxu0 %v1202
      %v2694 = vpop.f32.mrf.mxu0
      %v2695 = vadd.f32 0.0, %v2694
      %v2696 = vpop.f32.mrf.mxu0
      %v2697 = vadd.f32 0.0, %v2696
      %2698 = vmatmul.bf16.gmra.mxu0 %v1203
      %v2699 = vpop.f32.mrf.mxu0
      %v2700 = vadd.f32 0.0, %v2699
      %v2701 = vpop.f32.mrf.mxu0
      %v2702 = vadd.f32 0.0, %v2701
      %2703 = vmatmul.bf16.gmra.mxu0 %v1204
      %v2704 = vpop.f32.mrf.mxu0
      %v2705 = vadd.f32 0.0, %v2704
      %v2706 = vpop.f32.mrf.mxu0
      %v2707 = vadd.f32 0.0, %v2706
      %2708 = vmatmul.bf16.gmra.mxu0 %v1205
      %v2709 = vpop.f32.mrf.mxu0
      %v2710 = vadd.f32 0.0, %v2709
      %v2711 = vpop.f32.mrf.mxu0
      %v2712 = vadd.f32 0.0, %v2711
      %2713 = vmatmul.bf16.gmra.mxu0 %v1206
      %v2714 = vpop.f32.mrf.mxu0
      %v2715 = vadd.f32 0.0, %v2714
      %v2716 = vpop.f32.mrf.mxu0
      %v2717 = vadd.f32 0.0, %v2716
      %2718 = vmatmul.bf16.gmra.mxu0 %v1207
      %v2719 = vpop.f32.mrf.mxu0
      %v2720 = vadd.f32 0.0, %v2719
      %v2721 = vpop.f32.mrf.mxu0
      %v2722 = vadd.f32 0.0, %v2721
      %2723 = vmatmul.bf16.gmra.mxu0 %v1208
      %v2724 = vpop.f32.mrf.mxu0
      %v2725 = vadd.f32 0.0, %v2724
      %v2726 = vpop.f32.mrf.mxu0
      %v2727 = vadd.f32 0.0, %v2726
      %2728 = vmatmul.bf16.gmra.mxu0 %v1209
      %v2729 = vpop.f32.mrf.mxu0
      %v2730 = vadd.f32 0.0, %v2729
      %v2731 = vpop.f32.mrf.mxu0
      %v2732 = vadd.f32 0.0, %v2731
      %2733 = vmatmul.bf16.gmra.mxu0 %v1210
      %v2734 = vpop.f32.mrf.mxu0
      %v2735 = vadd.f32 0.0, %v2734
      %v2736 = vpop.f32.mrf.mxu0
      %v2737 = vadd.f32 0.0, %v2736
      %2738 = vmatmul.bf16.gmra.mxu0 %v1211
      %v2739 = vpop.f32.mrf.mxu0
      %v2740 = vadd.f32 0.0, %v2739
      %v2741 = vpop.f32.mrf.mxu0
      %v2742 = vadd.f32 0.0, %v2741
      %2743 = vdwg.mxu0
      %v2744 = vpack.c.bf16 %v2665, %v2665
      %v2745 = vpack.c.bf16 %v2667, %v2667
      %v2746 = vpack.c.bf16 %v2670, %v2670
      %v2747 = vpack.c.bf16 %v2672, %v2672
      %v2748 = vpack.c.bf16 %v2675, %v2675
      %v2749 = vpack.c.bf16 %v2677, %v2677
      %v2750 = vpack.c.bf16 %v2680, %v2680
      %v2751 = vpack.c.bf16 %v2682, %v2682
      %v2752 = vpack.c.bf16 %v2685, %v2685
      %v2753 = vpack.c.bf16 %v2687, %v2687
      %v2754 = vpack.c.bf16 %v2690, %v2690
      %v2755 = vpack.c.bf16 %v2692, %v2692
      %v2756 = vpack.c.bf16 %v2695, %v2695
      %v2757 = vpack.c.bf16 %v2697, %v2697
      %v2758 = vpack.c.bf16 %v2700, %v2700
      %v2759 = vpack.c.bf16 %v2702, %v2702
      %v2760 = vpack.c.bf16 %v2705, %v2705
      %v2761 = vpack.c.bf16 %v2707, %v2707
      %v2762 = vpack.c.bf16 %v2710, %v2710
      %v2763 = vpack.c.bf16 %v2712, %v2712
      %v2764 = vpack.c.bf16 %v2715, %v2715
      %v2765 = vpack.c.bf16 %v2717, %v2717
      %v2766 = vpack.c.bf16 %v2720, %v2720
      %v2767 = vpack.c.bf16 %v2722, %v2722
      %v2768 = vpack.c.bf16 %v2725, %v2725
      %v2769 = vpack.c.bf16 %v2727, %v2727
      %v2770 = vpack.c.bf16 %v2730, %v2730
      %v2771 = vpack.c.bf16 %v2732, %v2732
      %v2772 = vpack.c.bf16 %v2735, %v2735
      %v2773 = vpack.c.bf16 %v2737, %v2737
      %v2774 = vpack.c.bf16 %v2740, %v2740
      %v2775 = vpack.c.bf16 %v2742, %v2742
      %s2776 = scalar_lea.vmem %s428, 256
      %2777 = vst.msk [vmem:[%s2776] sm:$0xf] %vm1421, %v2744
      %2778 = vst.msk [vmem:[%s2776 + $0x4] sm:$0xf] %vm1421, %v2745
      %2779 = vst.msk [vmem:[%s2776 + $0x8] sm:$0xf] %vm1421, %v2746
      %2780 = vst.msk [vmem:[%s2776 + $0xc] sm:$0xf] %vm1421, %v2747
      %2781 = vst.msk [vmem:[%s2776 + $0x10] sm:$0xf] %vm1421, %v2748
      %2782 = vst.msk [vmem:[%s2776 + $0x14] sm:$0xf] %vm1421, %v2749
      %2783 = vst.msk [vmem:[%s2776 + $0x18] sm:$0xf] %vm1421, %v2750
      %2784 = vst.msk [vmem:[%s2776 + $0x1c] sm:$0xf] %vm1421, %v2751
      %2785 = vst.msk [vmem:[%s2776 + $0x20] sm:$0xf] %vm1421, %v2752
      %2786 = vst.msk [vmem:[%s2776 + $0x24] sm:$0xf] %vm1421, %v2753
      %2787 = vst.msk [vmem:[%s2776 + $0x28] sm:$0xf] %vm1421, %v2754
      %2788 = vst.msk [vmem:[%s2776 + $0x2c] sm:$0xf] %vm1421, %v2755
      %2789 = vst.msk [vmem:[%s2776 + $0x30] sm:$0xf] %vm1421, %v2756
      %2790 = vst.msk [vmem:[%s2776 + $0x34] sm:$0xf] %vm1421, %v2757
      %2791 = vst.msk [vmem:[%s2776 + $0x38] sm:$0xf] %vm1421, %v2758
      %2792 = vst.msk [vmem:[%s2776 + $0x3c] sm:$0xf] %vm1421, %v2759
      %2793 = vst.msk [vmem:[%s2776 + $0x40] sm:$0xf] %vm1421, %v2760
      %2794 = vst.msk [vmem:[%s2776 + $0x44] sm:$0xf] %vm1421, %v2761
      %2795 = vst.msk [vmem:[%s2776 + $0x48] sm:$0xf] %vm1421, %v2762
      %2796 = vst.msk [vmem:[%s2776 + $0x4c] sm:$0xf] %vm1421, %v2763
      %2797 = vst.msk [vmem:[%s2776 + $0x50] sm:$0xf] %vm1421, %v2764
      %2798 = vst.msk [vmem:[%s2776 + $0x54] sm:$0xf] %vm1421, %v2765
      %2799 = vst.msk [vmem:[%s2776 + $0x58] sm:$0xf] %vm1421, %v2766
      %2800 = vst.msk [vmem:[%s2776 + $0x5c] sm:$0xf] %vm1421, %v2767
      %2801 = vst.msk [vmem:[%s2776 + $0x60] sm:$0xf] %vm1421, %v2768
      %2802 = vst.msk [vmem:[%s2776 + $0x64] sm:$0xf] %vm1421, %v2769
      %2803 = vst.msk [vmem:[%s2776 + $0x68] sm:$0xf] %vm1421, %v2770
      %2804 = vst.msk [vmem:[%s2776 + $0x6c] sm:$0xf] %vm1421, %v2771
      %2805 = vst.msk [vmem:[%s2776 + $0x70] sm:$0xf] %vm1421, %v2772
      %2806 = vst.msk [vmem:[%s2776 + $0x74] sm:$0xf] %vm1421, %v2773
      %2807 = vst.msk [vmem:[%s2776 + $0x78] sm:$0xf] %vm1421, %v2774
      %2808 = vst.msk [vmem:[%s2776 + $0x7c] sm:$0xf] %vm1421, %v2775
      %s2809 = scalar_lea.vmem %s5, 128
      %v2810 = vld [vmem:[%s2809] sm:$0xf]
      %v2811 = vld [vmem:[%s2809 + $0x4] sm:$0xf]
      %v2812 = vld [vmem:[%s2809 + $0x8] sm:$0xf]
      %v2813 = vld [vmem:[%s2809 + $0xc] sm:$0xf]
      %v2814 = vld [vmem:[%s2809 + $0x10] sm:$0xf]
      %v2815 = vld [vmem:[%s2809 + $0x14] sm:$0xf]
      %v2816 = vld [vmem:[%s2809 + $0x18] sm:$0xf]
      %v2817 = vld [vmem:[%s2809 + $0x1c] sm:$0xf]
      %v2818 = vld [vmem:[%s2809 + $0x20] sm:$0xf]
      %v2819 = vld [vmem:[%s2809 + $0x24] sm:$0xf]
      %v2820 = vld [vmem:[%s2809 + $0x28] sm:$0xf]
      %v2821 = vld [vmem:[%s2809 + $0x2c] sm:$0xf]
      %v2822 = vld [vmem:[%s2809 + $0x30] sm:$0xf]
      %v2823 = vld [vmem:[%s2809 + $0x34] sm:$0xf]
      %v2824 = vld [vmem:[%s2809 + $0x38] sm:$0xf]
      %v2825 = vld [vmem:[%s2809 + $0x3c] sm:$0xf]
      %v2842 = vunpack.c.l.b16 %v2810
      %v2843 = vunpack.c.l.b16 %v2811
      %v2844 = vunpack.c.l.b16 %v2812
      %v2845 = vunpack.c.l.b16 %v2813
      %v2846 = vunpack.c.l.b16 %v2814
      %v2847 = vunpack.c.l.b16 %v2815
      %v2848 = vunpack.c.l.b16 %v2816
      %v2849 = vunpack.c.l.b16 %v2817
      %v2850 = vunpack.c.l.b16 %v2818
      %v2851 = vunpack.c.l.b16 %v2819
      %v2852 = vunpack.c.l.b16 %v2820
      %v2853 = vunpack.c.l.b16 %v2821
      %v2854 = vunpack.c.l.b16 %v2822
      %v2855 = vunpack.c.l.b16 %v2823
      %v2856 = vunpack.c.l.b16 %v2824
      %v2857 = vunpack.c.l.b16 %v2825
      %v2858 = vpack.c.b16 %v2843, %v2842
      %v2859 = vpack.c.b16 %v2845, %v2844
      %v2860 = vpack.c.b16 %v2847, %v2846
      %v2861 = vpack.c.b16 %v2849, %v2848
      %v2862 = vpack.c.b16 %v2851, %v2850
      %v2863 = vpack.c.b16 %v2853, %v2852
      %v2864 = vpack.c.b16 %v2855, %v2854
      %v2865 = vpack.c.b16 %v2857, %v2856
      %2874 = vmatpush.bf16.msra.mxu0 %v2865
      %2875 = vmatpush.bf16.msra.mxu0 %v2864
      %2876 = vmatpush.bf16.msra.mxu0 %v2863
      %2877 = vmatpush.bf16.msra.mxu0 %v2862
      %2878 = vmatpush.bf16.msra.mxu0 %v2861
      %2879 = vmatpush.bf16.msra.mxu0 %v2860
      %2880 = vmatpush.bf16.msra.mxu0 %v2859
      %2881 = vmatpush.bf16.msra.mxu0 %v2858
      %2882 = vmatmul.bf16.gmra.mxu0 %v1196
      %v2883 = vpop.f32.mrf.mxu0
      %v2884 = vadd.f32 0.0, %v2883
      %v2885 = vpop.f32.mrf.mxu0
      %v2886 = vadd.f32 0.0, %v2885
      %2887 = vmatmul.bf16.gmra.mxu0 %v1197
      %v2888 = vpop.f32.mrf.mxu0
      %v2889 = vadd.f32 0.0, %v2888
      %v2890 = vpop.f32.mrf.mxu0
      %v2891 = vadd.f32 0.0, %v2890
      %2892 = vmatmul.bf16.gmra.mxu0 %v1198
      %v2893 = vpop.f32.mrf.mxu0
      %v2894 = vadd.f32 0.0, %v2893
      %v2895 = vpop.f32.mrf.mxu0
      %v2896 = vadd.f32 0.0, %v2895
      %2897 = vmatmul.bf16.gmra.mxu0 %v1199
      %v2898 = vpop.f32.mrf.mxu0
      %v2899 = vadd.f32 0.0, %v2898
      %v2900 = vpop.f32.mrf.mxu0
      %v2901 = vadd.f32 0.0, %v2900
      %2902 = vmatmul.bf16.gmra.mxu0 %v1200
      %v2903 = vpop.f32.mrf.mxu0
      %v2904 = vadd.f32 0.0, %v2903
      %v2905 = vpop.f32.mrf.mxu0
      %v2906 = vadd.f32 0.0, %v2905
      %2907 = vmatmul.bf16.gmra.mxu0 %v1201
      %v2908 = vpop.f32.mrf.mxu0
      %v2909 = vadd.f32 0.0, %v2908
      %v2910 = vpop.f32.mrf.mxu0
      %v2911 = vadd.f32 0.0, %v2910
      %2912 = vmatmul.bf16.gmra.mxu0 %v1202
      %v2913 = vpop.f32.mrf.mxu0
      %v2914 = vadd.f32 0.0, %v2913
      %v2915 = vpop.f32.mrf.mxu0
      %v2916 = vadd.f32 0.0, %v2915
      %2917 = vmatmul.bf16.gmra.mxu0 %v1203
      %v2918 = vpop.f32.mrf.mxu0
      %v2919 = vadd.f32 0.0, %v2918
      %v2920 = vpop.f32.mrf.mxu0
      %v2921 = vadd.f32 0.0, %v2920
      %2922 = vmatmul.bf16.gmra.mxu0 %v1204
      %v2923 = vpop.f32.mrf.mxu0
      %v2924 = vadd.f32 0.0, %v2923
      %v2925 = vpop.f32.mrf.mxu0
      %v2926 = vadd.f32 0.0, %v2925
      %2927 = vmatmul.bf16.gmra.mxu0 %v1205
      %v2928 = vpop.f32.mrf.mxu0
      %v2929 = vadd.f32 0.0, %v2928
      %v2930 = vpop.f32.mrf.mxu0
      %v2931 = vadd.f32 0.0, %v2930
      %2932 = vmatmul.bf16.gmra.mxu0 %v1206
      %v2933 = vpop.f32.mrf.mxu0
      %v2934 = vadd.f32 0.0, %v2933
      %v2935 = vpop.f32.mrf.mxu0
      %v2936 = vadd.f32 0.0, %v2935
      %2937 = vmatmul.bf16.gmra.mxu0 %v1207
      %v2938 = vpop.f32.mrf.mxu0
      %v2939 = vadd.f32 0.0, %v2938
      %v2940 = vpop.f32.mrf.mxu0
      %v2941 = vadd.f32 0.0, %v2940
      %2942 = vmatmul.bf16.gmra.mxu0 %v1208
      %v2943 = vpop.f32.mrf.mxu0
      %v2944 = vadd.f32 0.0, %v2943
      %v2945 = vpop.f32.mrf.mxu0
      %v2946 = vadd.f32 0.0, %v2945
      %2947 = vmatmul.bf16.gmra.mxu0 %v1209
      %v2948 = vpop.f32.mrf.mxu0
      %v2949 = vadd.f32 0.0, %v2948
      %v2950 = vpop.f32.mrf.mxu0
      %v2951 = vadd.f32 0.0, %v2950
      %2952 = vmatmul.bf16.gmra.mxu0 %v1210
      %v2953 = vpop.f32.mrf.mxu0
      %v2954 = vadd.f32 0.0, %v2953
      %v2955 = vpop.f32.mrf.mxu0
      %v2956 = vadd.f32 0.0, %v2955
      %2957 = vmatmul.bf16.gmra.mxu0 %v1211
      %v2958 = vpop.f32.mrf.mxu0
      %v2959 = vadd.f32 0.0, %v2958
      %v2960 = vpop.f32.mrf.mxu0
      %v2961 = vadd.f32 0.0, %v2960
      %2962 = vdwg.mxu0
      %v2963 = vpack.c.bf16 %v2884, %v2884
      %v2964 = vpack.c.bf16 %v2886, %v2886
      %v2965 = vpack.c.bf16 %v2889, %v2889
      %v2966 = vpack.c.bf16 %v2891, %v2891
      %v2967 = vpack.c.bf16 %v2894, %v2894
      %v2968 = vpack.c.bf16 %v2896, %v2896
      %v2969 = vpack.c.bf16 %v2899, %v2899
      %v2970 = vpack.c.bf16 %v2901, %v2901
      %v2971 = vpack.c.bf16 %v2904, %v2904
      %v2972 = vpack.c.bf16 %v2906, %v2906
      %v2973 = vpack.c.bf16 %v2909, %v2909
      %v2974 = vpack.c.bf16 %v2911, %v2911
      %v2975 = vpack.c.bf16 %v2914, %v2914
      %v2976 = vpack.c.bf16 %v2916, %v2916
      %v2977 = vpack.c.bf16 %v2919, %v2919
      %v2978 = vpack.c.bf16 %v2921, %v2921
      %v2979 = vpack.c.bf16 %v2924, %v2924
      %v2980 = vpack.c.bf16 %v2926, %v2926
      %v2981 = vpack.c.bf16 %v2929, %v2929
      %v2982 = vpack.c.bf16 %v2931, %v2931
      %v2983 = vpack.c.bf16 %v2934, %v2934
      %v2984 = vpack.c.bf16 %v2936, %v2936
      %v2985 = vpack.c.bf16 %v2939, %v2939
      %v2986 = vpack.c.bf16 %v2941, %v2941
      %v2987 = vpack.c.bf16 %v2944, %v2944
      %v2988 = vpack.c.bf16 %v2946, %v2946
      %v2989 = vpack.c.bf16 %v2949, %v2949
      %v2990 = vpack.c.bf16 %v2951, %v2951
      %v2991 = vpack.c.bf16 %v2954, %v2954
      %v2992 = vpack.c.bf16 %v2956, %v2956
      %v2993 = vpack.c.bf16 %v2959, %v2959
      %v2994 = vpack.c.bf16 %v2961, %v2961
      %s2995 = scalar_lea.vmem %s433, 256
      %2996 = vst.msk [vmem:[%s2995] sm:$0xf] %vm1421, %v2963
      %2997 = vst.msk [vmem:[%s2995 + $0x4] sm:$0xf] %vm1421, %v2964
      %2998 = vst.msk [vmem:[%s2995 + $0x8] sm:$0xf] %vm1421, %v2965
      %2999 = vst.msk [vmem:[%s2995 + $0xc] sm:$0xf] %vm1421, %v2966
      %3000 = vst.msk [vmem:[%s2995 + $0x10] sm:$0xf] %vm1421, %v2967
      %3001 = vst.msk [vmem:[%s2995 + $0x14] sm:$0xf] %vm1421, %v2968
      %3002 = vst.msk [vmem:[%s2995 + $0x18] sm:$0xf] %vm1421, %v2969
      %3003 = vst.msk [vmem:[%s2995 + $0x1c] sm:$0xf] %vm1421, %v2970
      %3004 = vst.msk [vmem:[%s2995 + $0x20] sm:$0xf] %vm1421, %v2971
      %3005 = vst.msk [vmem:[%s2995 + $0x24] sm:$0xf] %vm1421, %v2972
      %3006 = vst.msk [vmem:[%s2995 + $0x28] sm:$0xf] %vm1421, %v2973
      %3007 = vst.msk [vmem:[%s2995 + $0x2c] sm:$0xf] %vm1421, %v2974
      %3008 = vst.msk [vmem:[%s2995 + $0x30] sm:$0xf] %vm1421, %v2975
      %3009 = vst.msk [vmem:[%s2995 + $0x34] sm:$0xf] %vm1421, %v2976
      %3010 = vst.msk [vmem:[%s2995 + $0x38] sm:$0xf] %vm1421, %v2977
      %3011 = vst.msk [vmem:[%s2995 + $0x3c] sm:$0xf] %vm1421, %v2978
      %3012 = vst.msk [vmem:[%s2995 + $0x40] sm:$0xf] %vm1421, %v2979
      %3013 = vst.msk [vmem:[%s2995 + $0x44] sm:$0xf] %vm1421, %v2980
      %3014 = vst.msk [vmem:[%s2995 + $0x48] sm:$0xf] %vm1421, %v2981
      %3015 = vst.msk [vmem:[%s2995 + $0x4c] sm:$0xf] %vm1421, %v2982
      %3016 = vst.msk [vmem:[%s2995 + $0x50] sm:$0xf] %vm1421, %v2983
      %3017 = vst.msk [vmem:[%s2995 + $0x54] sm:$0xf] %vm1421, %v2984
      %3018 = vst.msk [vmem:[%s2995 + $0x58] sm:$0xf] %vm1421, %v2985
      %3019 = vst.msk [vmem:[%s2995 + $0x5c] sm:$0xf] %vm1421, %v2986
      %3020 = vst.msk [vmem:[%s2995 + $0x60] sm:$0xf] %vm1421, %v2987
      %3021 = vst.msk [vmem:[%s2995 + $0x64] sm:$0xf] %vm1421, %v2988
      %3022 = vst.msk [vmem:[%s2995 + $0x68] sm:$0xf] %vm1421, %v2989
      %3023 = vst.msk [vmem:[%s2995 + $0x6c] sm:$0xf] %vm1421, %v2990
      %3024 = vst.msk [vmem:[%s2995 + $0x70] sm:$0xf] %vm1421, %v2991
      %3025 = vst.msk [vmem:[%s2995 + $0x74] sm:$0xf] %vm1421, %v2992
      %3026 = vst.msk [vmem:[%s2995 + $0x78] sm:$0xf] %vm1421, %v2993
      %3027 = vst.msk [vmem:[%s2995 + $0x7c] sm:$0xf] %vm1421, %v2994
      %s3028 = scalar_lea.vmem %s6, 64
      %v3029 = vld [vmem:[%s3028] sm:$0xf]
      %v3030 = vld [vmem:[%s3028 + $0x4] sm:$0xf]
      %v3031 = vld [vmem:[%s3028 + $0x8] sm:$0xf]
      %v3032 = vld [vmem:[%s3028 + $0xc] sm:$0xf]
      %v3033 = vld [vmem:[%s3028 + $0x10] sm:$0xf]
      %v3034 = vld [vmem:[%s3028 + $0x14] sm:$0xf]
      %v3035 = vld [vmem:[%s3028 + $0x18] sm:$0xf]
      %v3036 = vld [vmem:[%s3028 + $0x1c] sm:$0xf]
      %v3045 = vunpack.c.l.b16 %v3029
      %v3046 = vunpack.c.l.b16 %v3030
      %v3047 = vunpack.c.l.b16 %v3031
      %v3048 = vunpack.c.l.b16 %v3032
      %v3049 = vunpack.c.l.b16 %v3033
      %v3050 = vunpack.c.l.b16 %v3034
      %v3051 = vunpack.c.l.b16 %v3035
      %v3052 = vunpack.c.l.b16 %v3036
      %v3053 = vpack.c.b16 %v3046, %v3045
      %v3054 = vpack.c.b16 %v3048, %v3047
      %v3055 = vpack.c.b16 %v3050, %v3049
      %v3056 = vpack.c.b16 %v3052, %v3051
      %3061 = vmatpush.bf16.msra.mxu0 0
      %3062 = vmatpush.bf16.msra.mxu0 0
      %3063 = vmatpush.bf16.msra.mxu0 0
      %3064 = vmatpush.bf16.msra.mxu0 0
      %3065 = vmatpush.bf16.msra.mxu0 %v3056
      %3066 = vmatpush.bf16.msra.mxu0 %v3055
      %3067 = vmatpush.bf16.msra.mxu0 %v3054
      %3068 = vmatpush.bf16.msra.mxu0 %v3053
      %3069 = vmatmul.bf16.gmra.mxu0 %v1705
      %v3070 = vpop.f32.mrf.mxu0
      %v3071 = vadd.f32 0.0, %v3070
      %v3072 = vpop.f32.mrf.mxu0
      %v3073 = vadd.f32 0.0, %v3072
      %3074 = vmatmul.bf16.gmra.mxu0 %v1708
      %v3075 = vpop.f32.mrf.mxu0
      %v3076 = vadd.f32 0.0, %v3075
      %v3077 = vpop.f32.mrf.mxu0
      %v3078 = vadd.f32 0.0, %v3077
      %3079 = vmatmul.bf16.gmra.mxu0 %v1711
      %v3080 = vpop.f32.mrf.mxu0
      %v3081 = vadd.f32 0.0, %v3080
      %v3082 = vpop.f32.mrf.mxu0
      %v3083 = vadd.f32 0.0, %v3082
      %3084 = vmatmul.bf16.gmra.mxu0 %v1714
      %v3085 = vpop.f32.mrf.mxu0
      %v3086 = vadd.f32 0.0, %v3085
      %v3087 = vpop.f32.mrf.mxu0
      %v3088 = vadd.f32 0.0, %v3087
      %3089 = vmatmul.bf16.gmra.mxu0 %v1717
      %v3090 = vpop.f32.mrf.mxu0
      %v3091 = vadd.f32 0.0, %v3090
      %v3092 = vpop.f32.mrf.mxu0
      %v3093 = vadd.f32 0.0, %v3092
      %3094 = vmatmul.bf16.gmra.mxu0 %v1720
      %v3095 = vpop.f32.mrf.mxu0
      %v3096 = vadd.f32 0.0, %v3095
      %v3097 = vpop.f32.mrf.mxu0
      %v3098 = vadd.f32 0.0, %v3097
      %3099 = vmatmul.bf16.gmra.mxu0 %v1723
      %v3100 = vpop.f32.mrf.mxu0
      %v3101 = vadd.f32 0.0, %v3100
      %v3102 = vpop.f32.mrf.mxu0
      %v3103 = vadd.f32 0.0, %v3102
      %3104 = vmatmul.bf16.gmra.mxu0 %v1726
      %v3105 = vpop.f32.mrf.mxu0
      %v3106 = vadd.f32 0.0, %v3105
      %v3107 = vpop.f32.mrf.mxu0
      %v3108 = vadd.f32 0.0, %v3107
      %3109 = vdwg.mxu0
      %v3110 = vpack.c.bf16 %v3071, %v3071
      %v3111 = vpack.c.bf16 %v3073, %v3073
      %v3112 = vpack.c.bf16 %v3076, %v3076
      %v3113 = vpack.c.bf16 %v3078, %v3078
      %v3114 = vpack.c.bf16 %v3081, %v3081
      %v3115 = vpack.c.bf16 %v3083, %v3083
      %v3116 = vpack.c.bf16 %v3086, %v3086
      %v3117 = vpack.c.bf16 %v3088, %v3088
      %v3118 = vpack.c.bf16 %v3091, %v3091
      %v3119 = vpack.c.bf16 %v3093, %v3093
      %v3120 = vpack.c.bf16 %v3096, %v3096
      %v3121 = vpack.c.bf16 %v3098, %v3098
      %v3122 = vpack.c.bf16 %v3101, %v3101
      %v3123 = vpack.c.bf16 %v3103, %v3103
      %v3124 = vpack.c.bf16 %v3106, %v3106
      %v3125 = vpack.c.bf16 %v3108, %v3108
      %s3126 = scalar_lea.vmem %s438, 128
      %3127 = vst.msk [vmem:[%s3126] sm:$0xf] %vm1421, %v3110
      %3128 = vst.msk [vmem:[%s3126 + $0x4] sm:$0xf] %vm1421, %v3111
      %3129 = vst.msk [vmem:[%s3126 + $0x8] sm:$0xf] %vm1421, %v3112
      %3130 = vst.msk [vmem:[%s3126 + $0xc] sm:$0xf] %vm1421, %v3113
      %3131 = vst.msk [vmem:[%s3126 + $0x10] sm:$0xf] %vm1421, %v3114
      %3132 = vst.msk [vmem:[%s3126 + $0x14] sm:$0xf] %vm1421, %v3115
      %3133 = vst.msk [vmem:[%s3126 + $0x18] sm:$0xf] %vm1421, %v3116
      %3134 = vst.msk [vmem:[%s3126 + $0x1c] sm:$0xf] %vm1421, %v3117
      %3135 = vst.msk [vmem:[%s3126 + $0x20] sm:$0xf] %vm1421, %v3118
      %3136 = vst.msk [vmem:[%s3126 + $0x24] sm:$0xf] %vm1421, %v3119
      %3137 = vst.msk [vmem:[%s3126 + $0x28] sm:$0xf] %vm1421, %v3120
      %3138 = vst.msk [vmem:[%s3126 + $0x2c] sm:$0xf] %vm1421, %v3121
      %3139 = vst.msk [vmem:[%s3126 + $0x30] sm:$0xf] %vm1421, %v3122
      %3140 = vst.msk [vmem:[%s3126 + $0x34] sm:$0xf] %vm1421, %v3123
      %3141 = vst.msk [vmem:[%s3126 + $0x38] sm:$0xf] %vm1421, %v3124
      %3142 = vst.msk [vmem:[%s3126 + $0x3c] sm:$0xf] %vm1421, %v3125
      %s3143 = scalar_lea.vmem %s7, 64
      %v3144 = vld [vmem:[%s3143] sm:$0xf]
      %v3145 = vld [vmem:[%s3143 + $0x4] sm:$0xf]
      %v3146 = vld [vmem:[%s3143 + $0x8] sm:$0xf]
      %v3147 = vld [vmem:[%s3143 + $0xc] sm:$0xf]
      %v3148 = vld [vmem:[%s3143 + $0x10] sm:$0xf]
      %v3149 = vld [vmem:[%s3143 + $0x14] sm:$0xf]
      %v3150 = vld [vmem:[%s3143 + $0x18] sm:$0xf]
      %v3151 = vld [vmem:[%s3143 + $0x1c] sm:$0xf]
      %v3160 = vunpack.c.l.b16 %v3144
      %v3161 = vunpack.c.l.b16 %v3145
      %v3162 = vunpack.c.l.b16 %v3146
      %v3163 = vunpack.c.l.b16 %v3147
      %v3164 = vunpack.c.l.b16 %v3148
      %v3165 = vunpack.c.l.b16 %v3149
      %v3166 = vunpack.c.l.b16 %v3150
      %v3167 = vunpack.c.l.b16 %v3151
      %v3168 = vpack.c.b16 %v3161, %v3160
      %v3169 = vpack.c.b16 %v3163, %v3162
      %v3170 = vpack.c.b16 %v3165, %v3164
      %v3171 = vpack.c.b16 %v3167, %v3166
      %3176 = vmatpush.bf16.msra.mxu0 0
      %3177 = vmatpush.bf16.msra.mxu0 0
      %3178 = vmatpush.bf16.msra.mxu0 0
      %3179 = vmatpush.bf16.msra.mxu0 0
      %3180 = vmatpush.bf16.msra.mxu0 %v3171
      %3181 = vmatpush.bf16.msra.mxu0 %v3170
      %3182 = vmatpush.bf16.msra.mxu0 %v3169
      %3183 = vmatpush.bf16.msra.mxu0 %v3168
      %3184 = vmatmul.bf16.gmra.mxu0 %v1705
      %v3185 = vpop.f32.mrf.mxu0
      %v3186 = vadd.f32 0.0, %v3185
      %v3187 = vpop.f32.mrf.mxu0
      %v3188 = vadd.f32 0.0, %v3187
      %3189 = vmatmul.bf16.gmra.mxu0 %v1708
      %v3190 = vpop.f32.mrf.mxu0
      %v3191 = vadd.f32 0.0, %v3190
      %v3192 = vpop.f32.mrf.mxu0
      %v3193 = vadd.f32 0.0, %v3192
      %3194 = vmatmul.bf16.gmra.mxu0 %v1711
      %v3195 = vpop.f32.mrf.mxu0
      %v3196 = vadd.f32 0.0, %v3195
      %v3197 = vpop.f32.mrf.mxu0
      %v3198 = vadd.f32 0.0, %v3197
      %3199 = vmatmul.bf16.gmra.mxu0 %v1714
      %v3200 = vpop.f32.mrf.mxu0
      %v3201 = vadd.f32 0.0, %v3200
      %v3202 = vpop.f32.mrf.mxu0
      %v3203 = vadd.f32 0.0, %v3202
      %3204 = vmatmul.bf16.gmra.mxu0 %v1717
      %v3205 = vpop.f32.mrf.mxu0
      %v3206 = vadd.f32 0.0, %v3205
      %v3207 = vpop.f32.mrf.mxu0
      %v3208 = vadd.f32 0.0, %v3207
      %3209 = vmatmul.bf16.gmra.mxu0 %v1720
      %v3210 = vpop.f32.mrf.mxu0
      %v3211 = vadd.f32 0.0, %v3210
      %v3212 = vpop.f32.mrf.mxu0
      %v3213 = vadd.f32 0.0, %v3212
      %3214 = vmatmul.bf16.gmra.mxu0 %v1723
      %v3215 = vpop.f32.mrf.mxu0
      %v3216 = vadd.f32 0.0, %v3215
      %v3217 = vpop.f32.mrf.mxu0
      %v3218 = vadd.f32 0.0, %v3217
      %3219 = vmatmul.bf16.gmra.mxu0 %v1726
      %v3220 = vpop.f32.mrf.mxu0
      %v3221 = vadd.f32 0.0, %v3220
      %v3222 = vpop.f32.mrf.mxu0
      %v3223 = vadd.f32 0.0, %v3222
      %3224 = vdwg.mxu0
      %v3225 = vpack.c.bf16 %v3186, %v3186
      %v3226 = vpack.c.bf16 %v3188, %v3188
      %v3227 = vpack.c.bf16 %v3191, %v3191
      %v3228 = vpack.c.bf16 %v3193, %v3193
      %v3229 = vpack.c.bf16 %v3196, %v3196
      %v3230 = vpack.c.bf16 %v3198, %v3198
      %v3231 = vpack.c.bf16 %v3201, %v3201
      %v3232 = vpack.c.bf16 %v3203, %v3203
      %v3233 = vpack.c.bf16 %v3206, %v3206
      %v3234 = vpack.c.bf16 %v3208, %v3208
      %v3235 = vpack.c.bf16 %v3211, %v3211
      %v3236 = vpack.c.bf16 %v3213, %v3213
      %v3237 = vpack.c.bf16 %v3216, %v3216
      %v3238 = vpack.c.bf16 %v3218, %v3218
      %v3239 = vpack.c.bf16 %v3221, %v3221
      %v3240 = vpack.c.bf16 %v3223, %v3223
      %s3241 = scalar_lea.vmem %s443, 128
      %3242 = vst.msk [vmem:[%s3241] sm:$0xf] %vm1421, %v3225
      %3243 = vst.msk [vmem:[%s3241 + $0x4] sm:$0xf] %vm1421, %v3226
      %3244 = vst.msk [vmem:[%s3241 + $0x8] sm:$0xf] %vm1421, %v3227
      %3245 = vst.msk [vmem:[%s3241 + $0xc] sm:$0xf] %vm1421, %v3228
      %3246 = vst.msk [vmem:[%s3241 + $0x10] sm:$0xf] %vm1421, %v3229
      %3247 = vst.msk [vmem:[%s3241 + $0x14] sm:$0xf] %vm1421, %v3230
      %3248 = vst.msk [vmem:[%s3241 + $0x18] sm:$0xf] %vm1421, %v3231
      %3249 = vst.msk [vmem:[%s3241 + $0x1c] sm:$0xf] %vm1421, %v3232
      %3250 = vst.msk [vmem:[%s3241 + $0x20] sm:$0xf] %vm1421, %v3233
      %3251 = vst.msk [vmem:[%s3241 + $0x24] sm:$0xf] %vm1421, %v3234
      %3252 = vst.msk [vmem:[%s3241 + $0x28] sm:$0xf] %vm1421, %v3235
      %3253 = vst.msk [vmem:[%s3241 + $0x2c] sm:$0xf] %vm1421, %v3236
      %3254 = vst.msk [vmem:[%s3241 + $0x30] sm:$0xf] %vm1421, %v3237
      %3255 = vst.msk [vmem:[%s3241 + $0x34] sm:$0xf] %vm1421, %v3238
      %3256 = vst.msk [vmem:[%s3241 + $0x38] sm:$0xf] %vm1421, %v3239
      %3257 = vst.msk [vmem:[%s3241 + $0x3c] sm:$0xf] %vm1421, %v3240
      %s3258 = scalar_lea.vmem %s4, 192
      %v3259 = vld [vmem:[%s3258] sm:$0xf]
      %v3260 = vld [vmem:[%s3258 + $0x4] sm:$0xf]
      %v3261 = vld [vmem:[%s3258 + $0x8] sm:$0xf]
      %v3262 = vld [vmem:[%s3258 + $0xc] sm:$0xf]
      %v3263 = vld [vmem:[%s3258 + $0x10] sm:$0xf]
      %v3264 = vld [vmem:[%s3258 + $0x14] sm:$0xf]
      %v3265 = vld [vmem:[%s3258 + $0x18] sm:$0xf]
      %v3266 = vld [vmem:[%s3258 + $0x1c] sm:$0xf]
      %v3267 = vld [vmem:[%s3258 + $0x20] sm:$0xf]
      %v3268 = vld [vmem:[%s3258 + $0x24] sm:$0xf]
      %v3269 = vld [vmem:[%s3258 + $0x28] sm:$0xf]
      %v3270 = vld [vmem:[%s3258 + $0x2c] sm:$0xf]
      %v3271 = vld [vmem:[%s3258 + $0x30] sm:$0xf]
      %v3272 = vld [vmem:[%s3258 + $0x34] sm:$0xf]
      %v3273 = vld [vmem:[%s3258 + $0x38] sm:$0xf]
      %v3274 = vld [vmem:[%s3258 + $0x3c] sm:$0xf]
      %v3291 = vunpack.c.l.b16 %v3259
      %v3292 = vunpack.c.l.b16 %v3260
      %v3293 = vunpack.c.l.b16 %v3261
      %v3294 = vunpack.c.l.b16 %v3262
      %v3295 = vunpack.c.l.b16 %v3263
      %v3296 = vunpack.c.l.b16 %v3264
      %v3297 = vunpack.c.l.b16 %v3265
      %v3298 = vunpack.c.l.b16 %v3266
      %v3299 = vunpack.c.l.b16 %v3267
      %v3300 = vunpack.c.l.b16 %v3268
      %v3301 = vunpack.c.l.b16 %v3269
      %v3302 = vunpack.c.l.b16 %v3270
      %v3303 = vunpack.c.l.b16 %v3271
      %v3304 = vunpack.c.l.b16 %v3272
      %v3305 = vunpack.c.l.b16 %v3273
      %v3306 = vunpack.c.l.b16 %v3274
      %v3307 = vpack.c.b16 %v3292, %v3291
      %v3308 = vpack.c.b16 %v3294, %v3293
      %v3309 = vpack.c.b16 %v3296, %v3295
      %v3310 = vpack.c.b16 %v3298, %v3297
      %v3311 = vpack.c.b16 %v3300, %v3299
      %v3312 = vpack.c.b16 %v3302, %v3301
      %v3313 = vpack.c.b16 %v3304, %v3303
      %v3314 = vpack.c.b16 %v3306, %v3305
      %3323 = vmatpush.bf16.msra.mxu0 %v3314
      %3324 = vmatpush.bf16.msra.mxu0 %v3313
      %3325 = vmatpush.bf16.msra.mxu0 %v3312
      %3326 = vmatpush.bf16.msra.mxu0 %v3311
      %3327 = vmatpush.bf16.msra.mxu0 %v3310
      %3328 = vmatpush.bf16.msra.mxu0 %v3309
      %3329 = vmatpush.bf16.msra.mxu0 %v3308
      %3330 = vmatpush.bf16.msra.mxu0 %v3307
      %3331 = vmatmul.bf16.gmra.mxu0 %v1196
      %v3332 = vpop.f32.mrf.mxu0
      %v3333 = vadd.f32 0.0, %v3332
      %v3334 = vpop.f32.mrf.mxu0
      %v3335 = vadd.f32 0.0, %v3334
      %3336 = vmatmul.bf16.gmra.mxu0 %v1197
      %v3337 = vpop.f32.mrf.mxu0
      %v3338 = vadd.f32 0.0, %v3337
      %v3339 = vpop.f32.mrf.mxu0
      %v3340 = vadd.f32 0.0, %v3339
      %3341 = vmatmul.bf16.gmra.mxu0 %v1198
      %v3342 = vpop.f32.mrf.mxu0
      %v3343 = vadd.f32 0.0, %v3342
      %v3344 = vpop.f32.mrf.mxu0
      %v3345 = vadd.f32 0.0, %v3344
      %3346 = vmatmul.bf16.gmra.mxu0 %v1199
      %v3347 = vpop.f32.mrf.mxu0
      %v3348 = vadd.f32 0.0, %v3347
      %v3349 = vpop.f32.mrf.mxu0
      %v3350 = vadd.f32 0.0, %v3349
      %3351 = vmatmul.bf16.gmra.mxu0 %v1200
      %v3352 = vpop.f32.mrf.mxu0
      %v3353 = vadd.f32 0.0, %v3352
      %v3354 = vpop.f32.mrf.mxu0
      %v3355 = vadd.f32 0.0, %v3354
      %3356 = vmatmul.bf16.gmra.mxu0 %v1201
      %v3357 = vpop.f32.mrf.mxu0
      %v3358 = vadd.f32 0.0, %v3357
      %v3359 = vpop.f32.mrf.mxu0
      %v3360 = vadd.f32 0.0, %v3359
      %3361 = vmatmul.bf16.gmra.mxu0 %v1202
      %v3362 = vpop.f32.mrf.mxu0
      %v3363 = vadd.f32 0.0, %v3362
      %v3364 = vpop.f32.mrf.mxu0
      %v3365 = vadd.f32 0.0, %v3364
      %3366 = vmatmul.bf16.gmra.mxu0 %v1203
      %v3367 = vpop.f32.mrf.mxu0
      %v3368 = vadd.f32 0.0, %v3367
      %v3369 = vpop.f32.mrf.mxu0
      %v3370 = vadd.f32 0.0, %v3369
      %3371 = vmatmul.bf16.gmra.mxu0 %v1204
      %v3372 = vpop.f32.mrf.mxu0
      %v3373 = vadd.f32 0.0, %v3372
      %v3374 = vpop.f32.mrf.mxu0
      %v3375 = vadd.f32 0.0, %v3374
      %3376 = vmatmul.bf16.gmra.mxu0 %v1205
      %v3377 = vpop.f32.mrf.mxu0
      %v3378 = vadd.f32 0.0, %v3377
      %v3379 = vpop.f32.mrf.mxu0
      %v3380 = vadd.f32 0.0, %v3379
      %3381 = vmatmul.bf16.gmra.mxu0 %v1206
      %v3382 = vpop.f32.mrf.mxu0
      %v3383 = vadd.f32 0.0, %v3382
      %v3384 = vpop.f32.mrf.mxu0
      %v3385 = vadd.f32 0.0, %v3384
      %3386 = vmatmul.bf16.gmra.mxu0 %v1207
      %v3387 = vpop.f32.mrf.mxu0
      %v3388 = vadd.f32 0.0, %v3387
      %v3389 = vpop.f32.mrf.mxu0
      %v3390 = vadd.f32 0.0, %v3389
      %3391 = vmatmul.bf16.gmra.mxu0 %v1208
      %v3392 = vpop.f32.mrf.mxu0
      %v3393 = vadd.f32 0.0, %v3392
      %v3394 = vpop.f32.mrf.mxu0
      %v3395 = vadd.f32 0.0, %v3394
      %3396 = vmatmul.bf16.gmra.mxu0 %v1209
      %v3397 = vpop.f32.mrf.mxu0
      %v3398 = vadd.f32 0.0, %v3397
      %v3399 = vpop.f32.mrf.mxu0
      %v3400 = vadd.f32 0.0, %v3399
      %3401 = vmatmul.bf16.gmra.mxu0 %v1210
      %v3402 = vpop.f32.mrf.mxu0
      %v3403 = vadd.f32 0.0, %v3402
      %v3404 = vpop.f32.mrf.mxu0
      %v3405 = vadd.f32 0.0, %v3404
      %3406 = vmatmul.bf16.gmra.mxu0 %v1211
      %v3407 = vpop.f32.mrf.mxu0
      %v3408 = vadd.f32 0.0, %v3407
      %v3409 = vpop.f32.mrf.mxu0
      %v3410 = vadd.f32 0.0, %v3409
      %3411 = vdwg.mxu0
      %v3412 = vpack.c.bf16 %v3333, %v3333
      %v3413 = vpack.c.bf16 %v3335, %v3335
      %v3414 = vpack.c.bf16 %v3338, %v3338
      %v3415 = vpack.c.bf16 %v3340, %v3340
      %v3416 = vpack.c.bf16 %v3343, %v3343
      %v3417 = vpack.c.bf16 %v3345, %v3345
      %v3418 = vpack.c.bf16 %v3348, %v3348
      %v3419 = vpack.c.bf16 %v3350, %v3350
      %v3420 = vpack.c.bf16 %v3353, %v3353
      %v3421 = vpack.c.bf16 %v3355, %v3355
      %v3422 = vpack.c.bf16 %v3358, %v3358
      %v3423 = vpack.c.bf16 %v3360, %v3360
      %v3424 = vpack.c.bf16 %v3363, %v3363
      %v3425 = vpack.c.bf16 %v3365, %v3365
      %v3426 = vpack.c.bf16 %v3368, %v3368
      %v3427 = vpack.c.bf16 %v3370, %v3370
      %v3428 = vpack.c.bf16 %v3373, %v3373
      %v3429 = vpack.c.bf16 %v3375, %v3375
      %v3430 = vpack.c.bf16 %v3378, %v3378
      %v3431 = vpack.c.bf16 %v3380, %v3380
      %v3432 = vpack.c.bf16 %v3383, %v3383
      %v3433 = vpack.c.bf16 %v3385, %v3385
      %v3434 = vpack.c.bf16 %v3388, %v3388
      %v3435 = vpack.c.bf16 %v3390, %v3390
      %v3436 = vpack.c.bf16 %v3393, %v3393
      %v3437 = vpack.c.bf16 %v3395, %v3395
      %v3438 = vpack.c.bf16 %v3398, %v3398
      %v3439 = vpack.c.bf16 %v3400, %v3400
      %v3440 = vpack.c.bf16 %v3403, %v3403
      %v3441 = vpack.c.bf16 %v3405, %v3405
      %v3442 = vpack.c.bf16 %v3408, %v3408
      %v3443 = vpack.c.bf16 %v3410, %v3410
      %s3444 = scalar_lea.vmem %s428, 384
      %3445 = vst.msk [vmem:[%s3444] sm:$0xf] %vm1421, %v3412
      %3446 = vst.msk [vmem:[%s3444 + $0x4] sm:$0xf] %vm1421, %v3413
      %3447 = vst.msk [vmem:[%s3444 + $0x8] sm:$0xf] %vm1421, %v3414
      %3448 = vst.msk [vmem:[%s3444 + $0xc] sm:$0xf] %vm1421, %v3415
      %3449 = vst.msk [vmem:[%s3444 + $0x10] sm:$0xf] %vm1421, %v3416
      %3450 = vst.msk [vmem:[%s3444 + $0x14] sm:$0xf] %vm1421, %v3417
      %3451 = vst.msk [vmem:[%s3444 + $0x18] sm:$0xf] %vm1421, %v3418
      %3452 = vst.msk [vmem:[%s3444 + $0x1c] sm:$0xf] %vm1421, %v3419
      %3453 = vst.msk [vmem:[%s3444 + $0x20] sm:$0xf] %vm1421, %v3420
      %3454 = vst.msk [vmem:[%s3444 + $0x24] sm:$0xf] %vm1421, %v3421
      %3455 = vst.msk [vmem:[%s3444 + $0x28] sm:$0xf] %vm1421, %v3422
      %3456 = vst.msk [vmem:[%s3444 + $0x2c] sm:$0xf] %vm1421, %v3423
      %3457 = vst.msk [vmem:[%s3444 + $0x30] sm:$0xf] %vm1421, %v3424
      %3458 = vst.msk [vmem:[%s3444 + $0x34] sm:$0xf] %vm1421, %v3425
      %3459 = vst.msk [vmem:[%s3444 + $0x38] sm:$0xf] %vm1421, %v3426
      %3460 = vst.msk [vmem:[%s3444 + $0x3c] sm:$0xf] %vm1421, %v3427
      %3461 = vst.msk [vmem:[%s3444 + $0x40] sm:$0xf] %vm1421, %v3428
      %3462 = vst.msk [vmem:[%s3444 + $0x44] sm:$0xf] %vm1421, %v3429
      %3463 = vst.msk [vmem:[%s3444 + $0x48] sm:$0xf] %vm1421, %v3430
      %3464 = vst.msk [vmem:[%s3444 + $0x4c] sm:$0xf] %vm1421, %v3431
      %3465 = vst.msk [vmem:[%s3444 + $0x50] sm:$0xf] %vm1421, %v3432
      %3466 = vst.msk [vmem:[%s3444 + $0x54] sm:$0xf] %vm1421, %v3433
      %3467 = vst.msk [vmem:[%s3444 + $0x58] sm:$0xf] %vm1421, %v3434
      %3468 = vst.msk [vmem:[%s3444 + $0x5c] sm:$0xf] %vm1421, %v3435
      %3469 = vst.msk [vmem:[%s3444 + $0x60] sm:$0xf] %vm1421, %v3436
      %3470 = vst.msk [vmem:[%s3444 + $0x64] sm:$0xf] %vm1421, %v3437
      %3471 = vst.msk [vmem:[%s3444 + $0x68] sm:$0xf] %vm1421, %v3438
      %3472 = vst.msk [vmem:[%s3444 + $0x6c] sm:$0xf] %vm1421, %v3439
      %3473 = vst.msk [vmem:[%s3444 + $0x70] sm:$0xf] %vm1421, %v3440
      %3474 = vst.msk [vmem:[%s3444 + $0x74] sm:$0xf] %vm1421, %v3441
      %3475 = vst.msk [vmem:[%s3444 + $0x78] sm:$0xf] %vm1421, %v3442
      %3476 = vst.msk [vmem:[%s3444 + $0x7c] sm:$0xf] %vm1421, %v3443
      %s3477 = scalar_lea.vmem %s5, 192
      %v3478 = vld [vmem:[%s3477] sm:$0xf]
      %v3479 = vld [vmem:[%s3477 + $0x4] sm:$0xf]
      %v3480 = vld [vmem:[%s3477 + $0x8] sm:$0xf]
      %v3481 = vld [vmem:[%s3477 + $0xc] sm:$0xf]
      %v3482 = vld [vmem:[%s3477 + $0x10] sm:$0xf]
      %v3483 = vld [vmem:[%s3477 + $0x14] sm:$0xf]
      %v3484 = vld [vmem:[%s3477 + $0x18] sm:$0xf]
      %v3485 = vld [vmem:[%s3477 + $0x1c] sm:$0xf]
      %v3486 = vld [vmem:[%s3477 + $0x20] sm:$0xf]
      %v3487 = vld [vmem:[%s3477 + $0x24] sm:$0xf]
      %v3488 = vld [vmem:[%s3477 + $0x28] sm:$0xf]
      %v3489 = vld [vmem:[%s3477 + $0x2c] sm:$0xf]
      %v3490 = vld [vmem:[%s3477 + $0x30] sm:$0xf]
      %v3491 = vld [vmem:[%s3477 + $0x34] sm:$0xf]
      %v3492 = vld [vmem:[%s3477 + $0x38] sm:$0xf]
      %v3493 = vld [vmem:[%s3477 + $0x3c] sm:$0xf]
      %v3510 = vunpack.c.l.b16 %v3478
      %v3511 = vunpack.c.l.b16 %v3479
      %v3512 = vunpack.c.l.b16 %v3480
      %v3513 = vunpack.c.l.b16 %v3481
      %v3514 = vunpack.c.l.b16 %v3482
      %v3515 = vunpack.c.l.b16 %v3483
      %v3516 = vunpack.c.l.b16 %v3484
      %v3517 = vunpack.c.l.b16 %v3485
      %v3518 = vunpack.c.l.b16 %v3486
      %v3519 = vunpack.c.l.b16 %v3487
      %v3520 = vunpack.c.l.b16 %v3488
      %v3521 = vunpack.c.l.b16 %v3489
      %v3522 = vunpack.c.l.b16 %v3490
      %v3523 = vunpack.c.l.b16 %v3491
      %v3524 = vunpack.c.l.b16 %v3492
      %v3525 = vunpack.c.l.b16 %v3493
      %v3526 = vpack.c.b16 %v3511, %v3510
      %v3527 = vpack.c.b16 %v3513, %v3512
      %v3528 = vpack.c.b16 %v3515, %v3514
      %v3529 = vpack.c.b16 %v3517, %v3516
      %v3530 = vpack.c.b16 %v3519, %v3518
      %v3531 = vpack.c.b16 %v3521, %v3520
      %v3532 = vpack.c.b16 %v3523, %v3522
      %v3533 = vpack.c.b16 %v3525, %v3524
      %3542 = vmatpush.bf16.msra.mxu0 %v3533
      %3543 = vmatpush.bf16.msra.mxu0 %v3532
      %3544 = vmatpush.bf16.msra.mxu0 %v3531
      %3545 = vmatpush.bf16.msra.mxu0 %v3530
      %3546 = vmatpush.bf16.msra.mxu0 %v3529
      %3547 = vmatpush.bf16.msra.mxu0 %v3528
      %3548 = vmatpush.bf16.msra.mxu0 %v3527
      %3549 = vmatpush.bf16.msra.mxu0 %v3526
      %3550 = vmatmul.bf16.gmra.mxu0 %v1196
      %v3551 = vpop.f32.mrf.mxu0
      %v3552 = vadd.f32 0.0, %v3551
      %v3553 = vpop.f32.mrf.mxu0
      %v3554 = vadd.f32 0.0, %v3553
      %3555 = vmatmul.bf16.gmra.mxu0 %v1197
      %v3556 = vpop.f32.mrf.mxu0
      %v3557 = vadd.f32 0.0, %v3556
      %v3558 = vpop.f32.mrf.mxu0
      %v3559 = vadd.f32 0.0, %v3558
      %3560 = vmatmul.bf16.gmra.mxu0 %v1198
      %v3561 = vpop.f32.mrf.mxu0
      %v3562 = vadd.f32 0.0, %v3561
      %v3563 = vpop.f32.mrf.mxu0
      %v3564 = vadd.f32 0.0, %v3563
      %3565 = vmatmul.bf16.gmra.mxu0 %v1199
      %v3566 = vpop.f32.mrf.mxu0
      %v3567 = vadd.f32 0.0, %v3566
      %v3568 = vpop.f32.mrf.mxu0
      %v3569 = vadd.f32 0.0, %v3568
      %3570 = vmatmul.bf16.gmra.mxu0 %v1200
      %v3571 = vpop.f32.mrf.mxu0
      %v3572 = vadd.f32 0.0, %v3571
      %v3573 = vpop.f32.mrf.mxu0
      %v3574 = vadd.f32 0.0, %v3573
      %3575 = vmatmul.bf16.gmra.mxu0 %v1201
      %v3576 = vpop.f32.mrf.mxu0
      %v3577 = vadd.f32 0.0, %v3576
      %v3578 = vpop.f32.mrf.mxu0
      %v3579 = vadd.f32 0.0, %v3578
      %3580 = vmatmul.bf16.gmra.mxu0 %v1202
      %v3581 = vpop.f32.mrf.mxu0
      %v3582 = vadd.f32 0.0, %v3581
      %v3583 = vpop.f32.mrf.mxu0
      %v3584 = vadd.f32 0.0, %v3583
      %3585 = vmatmul.bf16.gmra.mxu0 %v1203
      %v3586 = vpop.f32.mrf.mxu0
      %v3587 = vadd.f32 0.0, %v3586
      %v3588 = vpop.f32.mrf.mxu0
      %v3589 = vadd.f32 0.0, %v3588
      %3590 = vmatmul.bf16.gmra.mxu0 %v1204
      %v3591 = vpop.f32.mrf.mxu0
      %v3592 = vadd.f32 0.0, %v3591
      %v3593 = vpop.f32.mrf.mxu0
      %v3594 = vadd.f32 0.0, %v3593
      %3595 = vmatmul.bf16.gmra.mxu0 %v1205
      %v3596 = vpop.f32.mrf.mxu0
      %v3597 = vadd.f32 0.0, %v3596
      %v3598 = vpop.f32.mrf.mxu0
      %v3599 = vadd.f32 0.0, %v3598
      %3600 = vmatmul.bf16.gmra.mxu0 %v1206
      %v3601 = vpop.f32.mrf.mxu0
      %v3602 = vadd.f32 0.0, %v3601
      %v3603 = vpop.f32.mrf.mxu0
      %v3604 = vadd.f32 0.0, %v3603
      %3605 = vmatmul.bf16.gmra.mxu0 %v1207
      %v3606 = vpop.f32.mrf.mxu0
      %v3607 = vadd.f32 0.0, %v3606
      %v3608 = vpop.f32.mrf.mxu0
      %v3609 = vadd.f32 0.0, %v3608
      %3610 = vmatmul.bf16.gmra.mxu0 %v1208
      %v3611 = vpop.f32.mrf.mxu0
      %v3612 = vadd.f32 0.0, %v3611
      %v3613 = vpop.f32.mrf.mxu0
      %v3614 = vadd.f32 0.0, %v3613
      %3615 = vmatmul.bf16.gmra.mxu0 %v1209
      %v3616 = vpop.f32.mrf.mxu0
      %v3617 = vadd.f32 0.0, %v3616
      %v3618 = vpop.f32.mrf.mxu0
      %v3619 = vadd.f32 0.0, %v3618
      %3620 = vmatmul.bf16.gmra.mxu0 %v1210
      %v3621 = vpop.f32.mrf.mxu0
      %v3622 = vadd.f32 0.0, %v3621
      %v3623 = vpop.f32.mrf.mxu0
      %v3624 = vadd.f32 0.0, %v3623
      %3625 = vmatmul.bf16.gmra.mxu0 %v1211
      %v3626 = vpop.f32.mrf.mxu0
      %v3627 = vadd.f32 0.0, %v3626
      %v3628 = vpop.f32.mrf.mxu0
      %v3629 = vadd.f32 0.0, %v3628
      %3630 = vdwg.mxu0
      %v3631 = vpack.c.bf16 %v3552, %v3552
      %v3632 = vpack.c.bf16 %v3554, %v3554
      %v3633 = vpack.c.bf16 %v3557, %v3557
      %v3634 = vpack.c.bf16 %v3559, %v3559
      %v3635 = vpack.c.bf16 %v3562, %v3562
      %v3636 = vpack.c.bf16 %v3564, %v3564
      %v3637 = vpack.c.bf16 %v3567, %v3567
      %v3638 = vpack.c.bf16 %v3569, %v3569
      %v3639 = vpack.c.bf16 %v3572, %v3572
      %v3640 = vpack.c.bf16 %v3574, %v3574
      %v3641 = vpack.c.bf16 %v3577, %v3577
      %v3642 = vpack.c.bf16 %v3579, %v3579
      %v3643 = vpack.c.bf16 %v3582, %v3582
      %v3644 = vpack.c.bf16 %v3584, %v3584
      %v3645 = vpack.c.bf16 %v3587, %v3587
      %v3646 = vpack.c.bf16 %v3589, %v3589
      %v3647 = vpack.c.bf16 %v3592, %v3592
      %v3648 = vpack.c.bf16 %v3594, %v3594
      %v3649 = vpack.c.bf16 %v3597, %v3597
      %v3650 = vpack.c.bf16 %v3599, %v3599
      %v3651 = vpack.c.bf16 %v3602, %v3602
      %v3652 = vpack.c.bf16 %v3604, %v3604
      %v3653 = vpack.c.bf16 %v3607, %v3607
      %v3654 = vpack.c.bf16 %v3609, %v3609
      %v3655 = vpack.c.bf16 %v3612, %v3612
      %v3656 = vpack.c.bf16 %v3614, %v3614
      %v3657 = vpack.c.bf16 %v3617, %v3617
      %v3658 = vpack.c.bf16 %v3619, %v3619
      %v3659 = vpack.c.bf16 %v3622, %v3622
      %v3660 = vpack.c.bf16 %v3624, %v3624
      %v3661 = vpack.c.bf16 %v3627, %v3627
      %v3662 = vpack.c.bf16 %v3629, %v3629
      %s3663 = scalar_lea.vmem %s433, 384
      %3664 = vst.msk [vmem:[%s3663] sm:$0xf] %vm1421, %v3631
      %3665 = vst.msk [vmem:[%s3663 + $0x4] sm:$0xf] %vm1421, %v3632
      %3666 = vst.msk [vmem:[%s3663 + $0x8] sm:$0xf] %vm1421, %v3633
      %3667 = vst.msk [vmem:[%s3663 + $0xc] sm:$0xf] %vm1421, %v3634
      %3668 = vst.msk [vmem:[%s3663 + $0x10] sm:$0xf] %vm1421, %v3635
      %3669 = vst.msk [vmem:[%s3663 + $0x14] sm:$0xf] %vm1421, %v3636
      %3670 = vst.msk [vmem:[%s3663 + $0x18] sm:$0xf] %vm1421, %v3637
      %3671 = vst.msk [vmem:[%s3663 + $0x1c] sm:$0xf] %vm1421, %v3638
      %3672 = vst.msk [vmem:[%s3663 + $0x20] sm:$0xf] %vm1421, %v3639
      %3673 = vst.msk [vmem:[%s3663 + $0x24] sm:$0xf] %vm1421, %v3640
      %3674 = vst.msk [vmem:[%s3663 + $0x28] sm:$0xf] %vm1421, %v3641
      %3675 = vst.msk [vmem:[%s3663 + $0x2c] sm:$0xf] %vm1421, %v3642
      %3676 = vst.msk [vmem:[%s3663 + $0x30] sm:$0xf] %vm1421, %v3643
      %3677 = vst.msk [vmem:[%s3663 + $0x34] sm:$0xf] %vm1421, %v3644
      %3678 = vst.msk [vmem:[%s3663 + $0x38] sm:$0xf] %vm1421, %v3645
      %3679 = vst.msk [vmem:[%s3663 + $0x3c] sm:$0xf] %vm1421, %v3646
      %3680 = vst.msk [vmem:[%s3663 + $0x40] sm:$0xf] %vm1421, %v3647
      %3681 = vst.msk [vmem:[%s3663 + $0x44] sm:$0xf] %vm1421, %v3648
      %3682 = vst.msk [vmem:[%s3663 + $0x48] sm:$0xf] %vm1421, %v3649
      %3683 = vst.msk [vmem:[%s3663 + $0x4c] sm:$0xf] %vm1421, %v3650
      %3684 = vst.msk [vmem:[%s3663 + $0x50] sm:$0xf] %vm1421, %v3651
      %3685 = vst.msk [vmem:[%s3663 + $0x54] sm:$0xf] %vm1421, %v3652
      %3686 = vst.msk [vmem:[%s3663 + $0x58] sm:$0xf] %vm1421, %v3653
      %3687 = vst.msk [vmem:[%s3663 + $0x5c] sm:$0xf] %vm1421, %v3654
      %3688 = vst.msk [vmem:[%s3663 + $0x60] sm:$0xf] %vm1421, %v3655
      %3689 = vst.msk [vmem:[%s3663 + $0x64] sm:$0xf] %vm1421, %v3656
      %3690 = vst.msk [vmem:[%s3663 + $0x68] sm:$0xf] %vm1421, %v3657
      %3691 = vst.msk [vmem:[%s3663 + $0x6c] sm:$0xf] %vm1421, %v3658
      %3692 = vst.msk [vmem:[%s3663 + $0x70] sm:$0xf] %vm1421, %v3659
      %3693 = vst.msk [vmem:[%s3663 + $0x74] sm:$0xf] %vm1421, %v3660
      %3694 = vst.msk [vmem:[%s3663 + $0x78] sm:$0xf] %vm1421, %v3661
      %3695 = vst.msk [vmem:[%s3663 + $0x7c] sm:$0xf] %vm1421, %v3662
      %s3696 = scalar_lea.vmem %s6, 96
      %v3697 = vld [vmem:[%s3696] sm:$0xf]
      %v3698 = vld [vmem:[%s3696 + $0x4] sm:$0xf]
      %v3699 = vld [vmem:[%s3696 + $0x8] sm:$0xf]
      %v3700 = vld [vmem:[%s3696 + $0xc] sm:$0xf]
      %v3701 = vld [vmem:[%s3696 + $0x10] sm:$0xf]
      %v3702 = vld [vmem:[%s3696 + $0x14] sm:$0xf]
      %v3703 = vld [vmem:[%s3696 + $0x18] sm:$0xf]
      %v3704 = vld [vmem:[%s3696 + $0x1c] sm:$0xf]
      %v3713 = vunpack.c.l.b16 %v3697
      %v3714 = vunpack.c.l.b16 %v3698
      %v3715 = vunpack.c.l.b16 %v3699
      %v3716 = vunpack.c.l.b16 %v3700
      %v3717 = vunpack.c.l.b16 %v3701
      %v3718 = vunpack.c.l.b16 %v3702
      %v3719 = vunpack.c.l.b16 %v3703
      %v3720 = vunpack.c.l.b16 %v3704
      %v3721 = vpack.c.b16 %v3714, %v3713
      %v3722 = vpack.c.b16 %v3716, %v3715
      %v3723 = vpack.c.b16 %v3718, %v3717
      %v3724 = vpack.c.b16 %v3720, %v3719
      %3729 = vmatpush.bf16.msra.mxu0 0
      %3730 = vmatpush.bf16.msra.mxu0 0
      %3731 = vmatpush.bf16.msra.mxu0 0
      %3732 = vmatpush.bf16.msra.mxu0 0
      %3733 = vmatpush.bf16.msra.mxu0 %v3724
      %3734 = vmatpush.bf16.msra.mxu0 %v3723
      %3735 = vmatpush.bf16.msra.mxu0 %v3722
      %3736 = vmatpush.bf16.msra.mxu0 %v3721
      %3737 = vmatmul.bf16.gmra.mxu0 %v1705
      %v3738 = vpop.f32.mrf.mxu0
      %v3739 = vadd.f32 0.0, %v3738
      %v3740 = vpop.f32.mrf.mxu0
      %v3741 = vadd.f32 0.0, %v3740
      %3742 = vmatmul.bf16.gmra.mxu0 %v1708
      %v3743 = vpop.f32.mrf.mxu0
      %v3744 = vadd.f32 0.0, %v3743
      %v3745 = vpop.f32.mrf.mxu0
      %v3746 = vadd.f32 0.0, %v3745
      %3747 = vmatmul.bf16.gmra.mxu0 %v1711
      %v3748 = vpop.f32.mrf.mxu0
      %v3749 = vadd.f32 0.0, %v3748
      %v3750 = vpop.f32.mrf.mxu0
      %v3751 = vadd.f32 0.0, %v3750
      %3752 = vmatmul.bf16.gmra.mxu0 %v1714
      %v3753 = vpop.f32.mrf.mxu0
      %v3754 = vadd.f32 0.0, %v3753
      %v3755 = vpop.f32.mrf.mxu0
      %v3756 = vadd.f32 0.0, %v3755
      %3757 = vmatmul.bf16.gmra.mxu0 %v1717
      %v3758 = vpop.f32.mrf.mxu0
      %v3759 = vadd.f32 0.0, %v3758
      %v3760 = vpop.f32.mrf.mxu0
      %v3761 = vadd.f32 0.0, %v3760
      %3762 = vmatmul.bf16.gmra.mxu0 %v1720
      %v3763 = vpop.f32.mrf.mxu0
      %v3764 = vadd.f32 0.0, %v3763
      %v3765 = vpop.f32.mrf.mxu0
      %v3766 = vadd.f32 0.0, %v3765
      %3767 = vmatmul.bf16.gmra.mxu0 %v1723
      %v3768 = vpop.f32.mrf.mxu0
      %v3769 = vadd.f32 0.0, %v3768
      %v3770 = vpop.f32.mrf.mxu0
      %v3771 = vadd.f32 0.0, %v3770
      %3772 = vmatmul.bf16.gmra.mxu0 %v1726
      %v3773 = vpop.f32.mrf.mxu0
      %v3774 = vadd.f32 0.0, %v3773
      %v3775 = vpop.f32.mrf.mxu0
      %v3776 = vadd.f32 0.0, %v3775
      %3777 = vdwg.mxu0
      %v3778 = vpack.c.bf16 %v3739, %v3739
      %v3779 = vpack.c.bf16 %v3741, %v3741
      %v3780 = vpack.c.bf16 %v3744, %v3744
      %v3781 = vpack.c.bf16 %v3746, %v3746
      %v3782 = vpack.c.bf16 %v3749, %v3749
      %v3783 = vpack.c.bf16 %v3751, %v3751
      %v3784 = vpack.c.bf16 %v3754, %v3754
      %v3785 = vpack.c.bf16 %v3756, %v3756
      %v3786 = vpack.c.bf16 %v3759, %v3759
      %v3787 = vpack.c.bf16 %v3761, %v3761
      %v3788 = vpack.c.bf16 %v3764, %v3764
      %v3789 = vpack.c.bf16 %v3766, %v3766
      %v3790 = vpack.c.bf16 %v3769, %v3769
      %v3791 = vpack.c.bf16 %v3771, %v3771
      %v3792 = vpack.c.bf16 %v3774, %v3774
      %v3793 = vpack.c.bf16 %v3776, %v3776
      %s3794 = scalar_lea.vmem %s438, 192
      %3795 = vst.msk [vmem:[%s3794] sm:$0xf] %vm1421, %v3778
      %3796 = vst.msk [vmem:[%s3794 + $0x4] sm:$0xf] %vm1421, %v3779
      %3797 = vst.msk [vmem:[%s3794 + $0x8] sm:$0xf] %vm1421, %v3780
      %3798 = vst.msk [vmem:[%s3794 + $0xc] sm:$0xf] %vm1421, %v3781
      %3799 = vst.msk [vmem:[%s3794 + $0x10] sm:$0xf] %vm1421, %v3782
      %3800 = vst.msk [vmem:[%s3794 + $0x14] sm:$0xf] %vm1421, %v3783
      %3801 = vst.msk [vmem:[%s3794 + $0x18] sm:$0xf] %vm1421, %v3784
      %3802 = vst.msk [vmem:[%s3794 + $0x1c] sm:$0xf] %vm1421, %v3785
      %3803 = vst.msk [vmem:[%s3794 + $0x20] sm:$0xf] %vm1421, %v3786
      %3804 = vst.msk [vmem:[%s3794 + $0x24] sm:$0xf] %vm1421, %v3787
      %3805 = vst.msk [vmem:[%s3794 + $0x28] sm:$0xf] %vm1421, %v3788
      %3806 = vst.msk [vmem:[%s3794 + $0x2c] sm:$0xf] %vm1421, %v3789
      %3807 = vst.msk [vmem:[%s3794 + $0x30] sm:$0xf] %vm1421, %v3790
      %3808 = vst.msk [vmem:[%s3794 + $0x34] sm:$0xf] %vm1421, %v3791
      %3809 = vst.msk [vmem:[%s3794 + $0x38] sm:$0xf] %vm1421, %v3792
      %3810 = vst.msk [vmem:[%s3794 + $0x3c] sm:$0xf] %vm1421, %v3793
      %s3811 = scalar_lea.vmem %s7, 96
      %v3812 = vld [vmem:[%s3811] sm:$0xf]
      %v3813 = vld [vmem:[%s3811 + $0x4] sm:$0xf]
      %v3814 = vld [vmem:[%s3811 + $0x8] sm:$0xf]
      %v3815 = vld [vmem:[%s3811 + $0xc] sm:$0xf]
      %v3816 = vld [vmem:[%s3811 + $0x10] sm:$0xf]
      %v3817 = vld [vmem:[%s3811 + $0x14] sm:$0xf]
      %v3818 = vld [vmem:[%s3811 + $0x18] sm:$0xf]
      %v3819 = vld [vmem:[%s3811 + $0x1c] sm:$0xf]
      %v3828 = vunpack.c.l.b16 %v3812
      %v3829 = vunpack.c.l.b16 %v3813
      %v3830 = vunpack.c.l.b16 %v3814
      %v3831 = vunpack.c.l.b16 %v3815
      %v3832 = vunpack.c.l.b16 %v3816
      %v3833 = vunpack.c.l.b16 %v3817
      %v3834 = vunpack.c.l.b16 %v3818
      %v3835 = vunpack.c.l.b16 %v3819
      %v3836 = vpack.c.b16 %v3829, %v3828
      %v3837 = vpack.c.b16 %v3831, %v3830
      %v3838 = vpack.c.b16 %v3833, %v3832
      %v3839 = vpack.c.b16 %v3835, %v3834
      %3844 = vmatpush.bf16.msra.mxu0 0
      %3845 = vmatpush.bf16.msra.mxu0 0
      %3846 = vmatpush.bf16.msra.mxu0 0
      %3847 = vmatpush.bf16.msra.mxu0 0
      %3848 = vmatpush.bf16.msra.mxu0 %v3839
      %3849 = vmatpush.bf16.msra.mxu0 %v3838
      %3850 = vmatpush.bf16.msra.mxu0 %v3837
      %3851 = vmatpush.bf16.msra.mxu0 %v3836
      %3852 = vmatmul.bf16.gmra.mxu0 %v1705
      %v3853 = vpop.f32.mrf.mxu0
      %v3854 = vadd.f32 0.0, %v3853
      %v3855 = vpop.f32.mrf.mxu0
      %v3856 = vadd.f32 0.0, %v3855
      %3857 = vmatmul.bf16.gmra.mxu0 %v1708
      %v3858 = vpop.f32.mrf.mxu0
      %v3859 = vadd.f32 0.0, %v3858
      %v3860 = vpop.f32.mrf.mxu0
      %v3861 = vadd.f32 0.0, %v3860
      %3862 = vmatmul.bf16.gmra.mxu0 %v1711
      %v3863 = vpop.f32.mrf.mxu0
      %v3864 = vadd.f32 0.0, %v3863
      %v3865 = vpop.f32.mrf.mxu0
      %v3866 = vadd.f32 0.0, %v3865
      %3867 = vmatmul.bf16.gmra.mxu0 %v1714
      %v3868 = vpop.f32.mrf.mxu0
      %v3869 = vadd.f32 0.0, %v3868
      %v3870 = vpop.f32.mrf.mxu0
      %v3871 = vadd.f32 0.0, %v3870
      %3872 = vmatmul.bf16.gmra.mxu0 %v1717
      %v3873 = vpop.f32.mrf.mxu0
      %v3874 = vadd.f32 0.0, %v3873
      %v3875 = vpop.f32.mrf.mxu0
      %v3876 = vadd.f32 0.0, %v3875
      %3877 = vmatmul.bf16.gmra.mxu0 %v1720
      %v3878 = vpop.f32.mrf.mxu0
      %v3879 = vadd.f32 0.0, %v3878
      %v3880 = vpop.f32.mrf.mxu0
      %v3881 = vadd.f32 0.0, %v3880
      %3882 = vmatmul.bf16.gmra.mxu0 %v1723
      %v3883 = vpop.f32.mrf.mxu0
      %v3884 = vadd.f32 0.0, %v3883
      %v3885 = vpop.f32.mrf.mxu0
      %v3886 = vadd.f32 0.0, %v3885
      %3887 = vmatmul.bf16.gmra.mxu0 %v1726
      %v3888 = vpop.f32.mrf.mxu0
      %v3889 = vadd.f32 0.0, %v3888
      %v3890 = vpop.f32.mrf.mxu0
      %v3891 = vadd.f32 0.0, %v3890
      %3892 = vdwg.mxu0
      %v3893 = vpack.c.bf16 %v3854, %v3854
      %v3894 = vpack.c.bf16 %v3856, %v3856
      %v3895 = vpack.c.bf16 %v3859, %v3859
      %v3896 = vpack.c.bf16 %v3861, %v3861
      %v3897 = vpack.c.bf16 %v3864, %v3864
      %v3898 = vpack.c.bf16 %v3866, %v3866
      %v3899 = vpack.c.bf16 %v3869, %v3869
      %v3900 = vpack.c.bf16 %v3871, %v3871
      %v3901 = vpack.c.bf16 %v3874, %v3874
      %v3902 = vpack.c.bf16 %v3876, %v3876
      %v3903 = vpack.c.bf16 %v3879, %v3879
      %v3904 = vpack.c.bf16 %v3881, %v3881
      %v3905 = vpack.c.bf16 %v3884, %v3884
      %v3906 = vpack.c.bf16 %v3886, %v3886
      %v3907 = vpack.c.bf16 %v3889, %v3889
      %v3908 = vpack.c.bf16 %v3891, %v3891
      %s3909 = scalar_lea.vmem %s443, 192
      %3910 = vst.msk [vmem:[%s3909] sm:$0xf] %vm1421, %v3893
      %3911 = vst.msk [vmem:[%s3909 + $0x4] sm:$0xf] %vm1421, %v3894
      %3912 = vst.msk [vmem:[%s3909 + $0x8] sm:$0xf] %vm1421, %v3895
      %3913 = vst.msk [vmem:[%s3909 + $0xc] sm:$0xf] %vm1421, %v3896
      %3914 = vst.msk [vmem:[%s3909 + $0x10] sm:$0xf] %vm1421, %v3897
      %3915 = vst.msk [vmem:[%s3909 + $0x14] sm:$0xf] %vm1421, %v3898
      %3916 = vst.msk [vmem:[%s3909 + $0x18] sm:$0xf] %vm1421, %v3899
      %3917 = vst.msk [vmem:[%s3909 + $0x1c] sm:$0xf] %vm1421, %v3900
      %3918 = vst.msk [vmem:[%s3909 + $0x20] sm:$0xf] %vm1421, %v3901
      %3919 = vst.msk [vmem:[%s3909 + $0x24] sm:$0xf] %vm1421, %v3902
      %3920 = vst.msk [vmem:[%s3909 + $0x28] sm:$0xf] %vm1421, %v3903
      %3921 = vst.msk [vmem:[%s3909 + $0x2c] sm:$0xf] %vm1421, %v3904
      %3922 = vst.msk [vmem:[%s3909 + $0x30] sm:$0xf] %vm1421, %v3905
      %3923 = vst.msk [vmem:[%s3909 + $0x34] sm:$0xf] %vm1421, %v3906
      %3924 = vst.msk [vmem:[%s3909 + $0x38] sm:$0xf] %vm1421, %v3907
      %3925 = vst.msk [vmem:[%s3909 + $0x3c] sm:$0xf] %vm1421, %v3908
      %p3926 = scmp.lt.s32.totalorder %s23, 1
      %s3927 = scalar_select %p3926, %s23, 1
      %s3928 = smul.addr %s3927, 128
      %s3929 = smul.addr %s3928, 4
      %s3930 = scalar_lea.vmem %s8, %s3929
      %p3931 = scmp.lt.s32.totalorder %s23, 1
      %s3932 = scalar_select %p3931, %s23, 1
      %s3933 = smul.addr %s3932, 128
      %s3934 = smul.addr %s3933, 4
      %s3935 = scalar_lea.vmem %s9, %s3934
      %p3936 = scmp.lt.s32.totalorder %s23, 1
      %s3937 = scalar_select %p3936, %s23, 1
      %s3938 = smul.addr %s3937, 64
      %s3939 = smul.addr %s3938, 4
      %s3940 = scalar_lea.vmem %s10, %s3939
      %p3941 = scmp.lt.s32.totalorder %s23, 1
      %s3942 = scalar_select %p3941, %s23, 1
      %s3943 = smul.addr %s3942, 64
      %s3944 = smul.addr %s3943, 4
      %s3945 = scalar_lea.vmem %s11, %s3944
      // Predicated region
      $region53: #{tpu_custom_call.1} parent=51 // pred_check
        %p3946 = pneg %p219
      $region54: #{tpu_custom_call.1} parent=51 // pred_check_branch
        %3948 = sbr.rel (%p3946) target = $region56
      $region55: #{tpu_custom_call.1} parent=51 // pred_region
        _
      $region56: #{tpu_custom_call.1} parent=51 // pred_fallthru
        _
      // Predicated region
      $region57: #{tpu_custom_call.1} parent=51 // pred_check
        %p3949 = pneg %p245
      $region58: #{tpu_custom_call.1} parent=51 // pred_check_branch
        %3951 = sbr.rel (%p3949) target = $region60
      $region59: #{tpu_custom_call.1} parent=51 // pred_region
        _
      $region60: #{tpu_custom_call.1} parent=51 // pred_fallthru
        _
      // Predicated region
      $region61: #{tpu_custom_call.1} parent=51 // pred_check
        %p3952 = pneg %p271
      $region62: #{tpu_custom_call.1} parent=51 // pred_check_branch
        %3954 = sbr.rel (%p3952) target = $region64
      $region63: #{tpu_custom_call.1} parent=51 // pred_region
        _
      $region64: #{tpu_custom_call.1} parent=51 // pred_fallthru
        _
      // Predicated region
      $region65: #{tpu_custom_call.1} parent=51 // pred_check
        %p3955 = pneg %p297
      $region66: #{tpu_custom_call.1} parent=51 // pred_check_branch
        %3957 = sbr.rel (%p3955) target = $region68
      $region67: #{tpu_custom_call.1} parent=51 // pred_region
        _
      $region68: #{tpu_custom_call.1} parent=51 // pred_fallthru
        _
    $region52: #{tpu_custom_call.1} parent=5 // pred_fallthru
      _
    %p3958 = scmp.le.s32.totalorder 2, %s18
    // Predicated region
    $region69: #{tpu_custom_call.1} parent=5 // pred_check
      %p3959 = pneg %p3958
    $region70: #{tpu_custom_call.1} parent=5 // pred_check_branch
      %3961 = sbr.rel (%p3959) target = $region72
    $region71: #{tpu_custom_call.1} parent=5 // pred_region
      %s3962 = ssub.s32 %s18, 2
      // Predicated region
      $region73: #{tpu_custom_call.1} parent=71 // pred_check
        %p3963 = pneg %p225
      $region74: #{tpu_custom_call.1} parent=71 // pred_check_branch
        %3965 = sbr.rel (%p3963) target = $region76
      $region75: #{tpu_custom_call.1} parent=71 // pred_region
        %p3966 = scmp.lt.s32.totalorder %s24, 1
        %s3967 = scalar_select %p3966, %s24, 1
        %s3968 = smul.addr %s3967, 128
        %s3969 = smul.addr %s3968, 4
        %s3970 = scalar_lea.vmem %s8, %s3969
      $region76: #{tpu_custom_call.1} parent=71 // pred_fallthru
        _
      // Predicated region
      $region77: #{tpu_custom_call.1} parent=71 // pred_check
        %p3971 = pneg %p251
      $region78: #{tpu_custom_call.1} parent=71 // pred_check_branch
        %3973 = sbr.rel (%p3971) target = $region80
      $region79: #{tpu_custom_call.1} parent=71 // pred_region
        %p3974 = scmp.lt.s32.totalorder %s24, 1
        %s3975 = scalar_select %p3974, %s24, 1
        %s3976 = smul.addr %s3975, 128
        %s3977 = smul.addr %s3976, 4
        %s3978 = scalar_lea.vmem %s9, %s3977
      $region80: #{tpu_custom_call.1} parent=71 // pred_fallthru
        _
      // Predicated region
      $region81: #{tpu_custom_call.1} parent=71 // pred_check
        %p3979 = pneg %p277
      $region82: #{tpu_custom_call.1} parent=71 // pred_check_branch
        %3981 = sbr.rel (%p3979) target = $region84
      $region83: #{tpu_custom_call.1} parent=71 // pred_region
        %p3982 = scmp.lt.s32.totalorder %s24, 1
        %s3983 = scalar_select %p3982, %s24, 1
        %s3984 = smul.addr %s3983, 64
        %s3985 = smul.addr %s3984, 4
        %s3986 = scalar_lea.vmem %s10, %s3985
      $region84: #{tpu_custom_call.1} parent=71 // pred_fallthru
        _
      // Predicated region
      $region85: #{tpu_custom_call.1} parent=71 // pred_check
        %p3987 = pneg %p303
      $region86: #{tpu_custom_call.1} parent=71 // pred_check_branch
        %3989 = sbr.rel (%p3987) target = $region88
      $region87: #{tpu_custom_call.1} parent=71 // pred_region
        %p3990 = scmp.lt.s32.totalorder %s24, 1
        %s3991 = scalar_select %p3990, %s24, 1
        %s3992 = smul.addr %s3991, 64
        %s3993 = smul.addr %s3992, 4
        %s3994 = scalar_lea.vmem %s11, %s3993
      $region88: #{tpu_custom_call.1} parent=71 // pred_fallthru
        _
    $region72: #{tpu_custom_call.1} parent=5 // pred_fallthru
      _
  $region6: #{tpu_custom_call.1} parent=0 // loop_footer
    %s22 = sadd.s32 1, %s18
  $region7: #{tpu_custom_call.1} parent=0 // loop_footer_branch
    %17 = sbr.rel target = $region3
  $region8: #{tpu_custom_call.1} parent=0 // loop_exit
    _

</llo_original>
